<compile_context>
chip_gen: v7x
topology: tpu7x:2x2x1
jax: 0.10.0
libtpu: 0.0.40
codegen_flags: <defaults>
</compile_context>

<pallas_src>
import jax
import jax.numpy as jnp
from jax.experimental import pallas as pl
from jax.experimental.pallas import tpu as pltpu

EPS = 1e-5


def pendulum_encoder_kernel(
    x_ref,
    w1_ref, g1_ref, be1_ref,
    w2_ref, g2_ref, be2_ref,
    w3_ref, b3_ref,
    out_ref,
):
    inv_b = 1.0 / x_ref.shape[0]

    def bn_relu(h, g, be):
        # Single-pass batch statistics in f32 (two independent reductions).
        mean = jnp.sum(h, axis=0, keepdims=True) * inv_b
        ex2 = jnp.sum(h * h, axis=0, keepdims=True) * inv_b
        var = jnp.maximum(ex2 - mean * mean, 0.0)     # clamp: rounding can go <0
        scale = g * jax.lax.rsqrt(var + EPS)          # folded BN affine
        shift = be - mean * scale
        return jnp.maximum(h * scale + shift, 0.0)    # one FMA + ReLU on (B,F)

    # ---- Linear 1 (bias cancels under BN mean-subtraction) + BN + ReLU ------
    x = x_ref[...].astype(jnp.bfloat16)
    h = jnp.dot(x, w1_ref[...], preferred_element_type=jnp.float32)
    h = bn_relu(h, g1_ref[...], be1_ref[...])

    # ---- Linear 2 (bias cancels under BN) + BN + ReLU ------------------------
    h = jnp.dot(h.astype(jnp.bfloat16), w2_ref[...],
                preferred_element_type=jnp.float32)
    h = bn_relu(h, g2_ref[...], be2_ref[...])

    # ---- Linear 3 + bias; single lane-contiguous output ----------------------
    out = jnp.dot(h.astype(jnp.bfloat16), w3_ref[...],
                  preferred_element_type=jnp.float32)
    out_ref[...] = out + b3_ref[...]


def prepare_params(params):
    """One-time parameter prep: cast the matmul weights to bf16 so the
    per-call path never re-converts them (hoisted out of pendulum_encoder)."""
    p = dict(params)
    for k in ("w1", "w2", "w3"):
        p[k] = params[k].astype(jnp.bfloat16)
    return p


def pendulum_encoder(x, params):
    """Forward pass.

    x: (B, dim_in) for a single step, or (T, B, dim_in) for a rollout of T
       independent steps (BN stats computed per step, weights DMA'd once).
    params: output of prepare_params (bf16 weights) or make_params (f32 ok).
    Returns (mu, logvar): each (B, dim_out) or (T, B, dim_out).
    """
    squeeze_t = x.ndim == 2
    if squeeze_t:
        x = x[None]
    T, B, dim_in = x.shape
    if B < 2:
        # Training-mode BatchNorm is undefined for a single sample (PyTorch raises).
        raise ValueError("PendulumEncoder (train-mode BN) requires batch size >= 2")

    hidden = params["w1"].shape[1]
    two_dim_out = params["w3"].shape[1]

    args = (
        x,
        params["w1"], params["g1"], params["be1"],
        params["w2"], params["g2"], params["be2"],
        params["w3"], params["b3"],
    )

    # Advisory cost hint: ~all the time is weight DMA, not FLOPs.
    flops = int(2 * T * B * (dim_in * hidden + hidden * hidden
                             + hidden * two_dim_out))
    bytes_accessed = int(
        sum(a.size * a.dtype.itemsize for a in args)
        + T * B * two_dim_out * 4)

    const2 = lambda t: (0, 0)                      # weights: same block every step
    in_specs = [
        pl.BlockSpec((None, B, dim_in), lambda t: (t, 0, 0)),     # x, per step
        pl.BlockSpec((dim_in, hidden), const2),                   # w1 (resident)
        pl.BlockSpec((1, hidden), const2),                        # g1
        pl.BlockSpec((1, hidden), const2),                        # be1
        pl.BlockSpec((hidden, hidden), const2),                   # w2 (resident)
        pl.BlockSpec((1, hidden), const2),                        # g2
        pl.BlockSpec((1, hidden), const2),                        # be2
        pl.BlockSpec((hidden, two_dim_out), const2),              # w3 (resident)
        pl.BlockSpec((1, two_dim_out), const2),                   # b3
    ]
    out_spec = pl.BlockSpec((None, B, two_dim_out), lambda t: (t, 0, 0))

    out = pl.pallas_call(
        pendulum_encoder_kernel,
        out_shape=jax.ShapeDtypeStruct((T, B, two_dim_out), jnp.float32),
        grid=(T,),
        in_specs=in_specs,
        out_specs=out_spec,
        compiler_params=pltpu.CompilerParams(
            dimension_semantics=("parallel",)),
        cost_estimate=pl.CostEstimate(
            flops=flops, transcendentals=0, bytes_accessed=bytes_accessed),
    )(*args)

    dim_out = two_dim_out // 2
    if squeeze_t:
        out = out[0]
    return out[..., :dim_out], out[..., dim_out:]


def make_params(key, dim_in, dim_out, hidden=800):
    """Deterministic synthetic parameters (PyTorch-Linear-like uniform init)."""
    ks = jax.random.split(key, 6)

    def linear(kw, kb, fan_in, fan_out):
        bound = 1.0 / jnp.sqrt(fan_in)
        w = jax.random.uniform(kw, (fan_in, fan_out), jnp.float32, -bound, bound)
        b = jax.random.uniform(kb, (1, fan_out), jnp.float32, -bound, bound)
        return w, b

    w1, b1 = linear(ks[0], ks[1], dim_in, hidden)
    w2, b2 = linear(ks[2], ks[3], hidden, hidden)
    w3, b3 = linear(ks[4], ks[5], hidden, 2 * dim_out)
    ones = jnp.ones((1, hidden), jnp.float32)
    zeros = jnp.zeros((1, hidden), jnp.float32)
    return dict(w1=w1, b1=b1, g1=ones, be1=zeros,
                w2=w2, b2=b2, g2=ones, be2=zeros,
                w3=w3, b3=b3)


def reference(x, p):
    """Pure-JAX reference, faithful to the PyTorch structure (biases included,
    two-pass variance, unfused BN affine).  Weights / MXU activations are
    passed through bf16 to emulate the kernel's quantization, so the
    comparison isolates implementation correctness from bf16 rounding."""
    def q(a):
        return a.astype(jnp.bfloat16).astype(jnp.float32)

    def bn_relu(h, g, be):
        mean = jnp.mean(h, axis=0, keepdims=True)
        var = jnp.mean((h - mean) ** 2, axis=0, keepdims=True)
        return jnp.maximum((h - mean) / jnp.sqrt(var + EPS) * g + be, 0.0)

    h = bn_relu(q(x) @ q(p["w1"]) + p["b1"], p["g1"], p["be1"])
    h = bn_relu(q(h) @ q(p["w2"]) + p["b2"], p["g2"], p["be2"])
    out = q(h) @ q(p["w3"]) + p["b3"]
    d = out.shape[1] // 2
    return out[:, :d], out[:, d:]


if __name__ == "__main__":
    key = jax.random.PRNGKey(0)
    k_x, k_xr, k_p = jax.random.split(key, 3)

    B, dim_in, dim_out, T = 4, 16, 8, 3   # small shapes consistent with the module
    params = make_params(k_p, dim_in, dim_out)
    enc_params = prepare_params(params)   # one-time bf16 weight prep (hoisted cast)

    # ---- single step --------------------------------------------------------
    x = jax.random.normal(k_x, (B, dim_in), jnp.float32)
    mu, logvar = pendulum_encoder(x, enc_params)
    jax.block_until_ready((mu, logvar))

    mu_ref, lv_ref = reference(x, params)
    assert jnp.allclose(mu, mu_ref, atol=2e-3, rtol=2e-3)
    assert jnp.allclose(logvar, lv_ref, atol=2e-3, rtol=2e-3)

    # ---- rollout: T steps, one pallas_call, weights VMEM-resident -----------
    xs = jax.random.normal(k_xr, (T, B, dim_in), jnp.float32)
    mu_s, lv_s = pendulum_encoder(xs, enc_params)
    jax.block_until_ready((mu_s, lv_s))

    for t in range(T):
        mr, lr = reference(xs[t], params)
        assert jnp.allclose(mu_s[t], mr, atol=2e-3, rtol=2e-3)
        assert jnp.allclose(lv_s[t], lr, atol=2e-3, rtol=2e-3)

    print("KERNEL_OK")
</pallas_src>

<mosaic_0001>
module attributes {stable_mosaic.version = 11 : i64} {
  func.func @pendulum_encoder_kernel(%arg0: i32, %arg1: memref<1x4x16xf32, #tpu.memory_space<vmem>>, %arg2: memref<16x800xbf16, #tpu.memory_space<vmem>>, %arg3: memref<1x800xf32, #tpu.memory_space<vmem>>, %arg4: memref<1x800xf32, #tpu.memory_space<vmem>>, %arg5: memref<800x800xbf16, #tpu.memory_space<vmem>>, %arg6: memref<1x800xf32, #tpu.memory_space<vmem>>, %arg7: memref<1x800xf32, #tpu.memory_space<vmem>>, %arg8: memref<800x16xbf16, #tpu.memory_space<vmem>>, %arg9: memref<1x16xf32, #tpu.memory_space<vmem>>, %arg10: memref<1x4x16xf32, #tpu.memory_space<vmem>>) attributes {dimension_semantics = [#tpu.dimension_semantics<parallel>], iteration_bounds = array<i64: 1>, scalar_prefetch = 0 : i64, scratch_operands = 0 : i64, tpu.core_type = #tpu.core_type<tc>, window_params = [{transform_indices = @transform_0, window_bounds = array<i64: 1, 4, 16>}, {pipeline_mode = #tpu.pipeline_mode<synchronous>, transform_indices = @transform_1, window_bounds = array<i64: 16, 800>}, {pipeline_mode = #tpu.pipeline_mode<synchronous>, transform_indices = @transform_2, window_bounds = array<i64: 1, 800>}, {pipeline_mode = #tpu.pipeline_mode<synchronous>, transform_indices = @transform_3, window_bounds = array<i64: 1, 800>}, {pipeline_mode = #tpu.pipeline_mode<synchronous>, transform_indices = @transform_4, window_bounds = array<i64: 800, 800>}, {pipeline_mode = #tpu.pipeline_mode<synchronous>, transform_indices = @transform_5, window_bounds = array<i64: 1, 800>}, {pipeline_mode = #tpu.pipeline_mode<synchronous>, transform_indices = @transform_6, window_bounds = array<i64: 1, 800>}, {pipeline_mode = #tpu.pipeline_mode<synchronous>, transform_indices = @transform_7, window_bounds = array<i64: 800, 16>}, {pipeline_mode = #tpu.pipeline_mode<synchronous>, transform_indices = @transform_8, window_bounds = array<i64: 1, 16>}, {transform_indices = @transform_9, window_bounds = array<i64: 1, 4, 16>}]} {
    %c0 = arith.constant 0 : index
    %c0_0 = arith.constant 0 : index
    %c0_1 = arith.constant 0 : index
    %0 = vector.load %arg1[%c0, %c0_0, %c0_1] : memref<1x4x16xf32, #tpu.memory_space<vmem>>, vector<1x4x16xf32>
    %1 = vector.shape_cast %0 : vector<1x4x16xf32> to vector<4x16xf32>
    %2 = arith.truncf %1 : vector<4x16xf32> to vector<4x16xbf16>
    %c0_2 = arith.constant 0 : index
    %c0_3 = arith.constant 0 : index
    %3 = vector.load %arg2[%c0_2, %c0_3] : memref<16x800xbf16, #tpu.memory_space<vmem>>, vector<16x800xbf16>
    %cst = arith.constant dense<0.000000e+00> : vector<4x800xf32>
    %4 = tpu.matmul %2, %3, %cst {dimension_numbers = #tpu.dot_dimension_numbers<[1], [0], [0], [1], [0, 0, 1, 1], [], []>} : vector<4x16xbf16>, vector<16x800xbf16>, vector<4x800xf32> -> vector<4x800xf32>
    %c0_4 = arith.constant 0 : index
    %c0_5 = arith.constant 0 : index
    %5 = vector.load %arg3[%c0_4, %c0_5] : memref<1x800xf32, #tpu.memory_space<vmem>>, vector<1x800xf32>
    %c0_6 = arith.constant 0 : index
    %c0_7 = arith.constant 0 : index
    %6 = vector.load %arg4[%c0_6, %c0_7] : memref<1x800xf32, #tpu.memory_space<vmem>>, vector<1x800xf32>
    %cst_8 = arith.constant dense<0.000000e+00> : vector<800xf32>
    %7 = vector.multi_reduction <add>, %4, %cst_8 [0] : vector<4x800xf32> to vector<800xf32>
    %8 = vector.shape_cast %7 : vector<800xf32> to vector<1x800xf32>
    %cst_9 = arith.constant 2.500000e-01 : f32
    %9 = vector.broadcast %cst_9 : f32 to vector<1x800xf32>
    %10 = arith.mulf %8, %9 : vector<1x800xf32>
    %11 = arith.mulf %4, %4 : vector<4x800xf32>
    %cst_10 = arith.constant dense<0.000000e+00> : vector<800xf32>
    %12 = vector.multi_reduction <add>, %11, %cst_10 [0] : vector<4x800xf32> to vector<800xf32>
    %13 = vector.shape_cast %12 : vector<800xf32> to vector<1x800xf32>
    %cst_11 = arith.constant 2.500000e-01 : f32
    %14 = vector.broadcast %cst_11 : f32 to vector<1x800xf32>
    %15 = arith.mulf %13, %14 : vector<1x800xf32>
    %16 = arith.mulf %10, %10 : vector<1x800xf32>
    %17 = arith.subf %15, %16 : vector<1x800xf32>
    %cst_12 = arith.constant 0.000000e+00 : f32
    %18 = vector.broadcast %cst_12 : f32 to vector<1x800xf32>
    %19 = arith.maximumf %17, %18 : vector<1x800xf32>
    %cst_13 = arith.constant 9.99999974E-6 : f32
    %20 = vector.broadcast %cst_13 : f32 to vector<1x800xf32>
    %21 = arith.addf %19, %20 : vector<1x800xf32>
    %22 = math.rsqrt %21 : vector<1x800xf32>
    %23 = arith.mulf %5, %22 : vector<1x800xf32>
    %24 = arith.mulf %10, %23 : vector<1x800xf32>
    %25 = arith.subf %6, %24 : vector<1x800xf32>
    %26 = vector.broadcast %23 : vector<1x800xf32> to vector<4x800xf32>
    %27 = arith.mulf %4, %26 : vector<4x800xf32>
    %28 = vector.broadcast %25 : vector<1x800xf32> to vector<4x800xf32>
    %29 = arith.addf %27, %28 : vector<4x800xf32>
    %cst_14 = arith.constant 0.000000e+00 : f32
    %30 = vector.broadcast %cst_14 : f32 to vector<4x800xf32>
    %31 = arith.maximumf %29, %30 : vector<4x800xf32>
    %32 = arith.truncf %31 : vector<4x800xf32> to vector<4x800xbf16>
    %c0_15 = arith.constant 0 : index
    %c0_16 = arith.constant 0 : index
    %33 = vector.load %arg5[%c0_15, %c0_16] : memref<800x800xbf16, #tpu.memory_space<vmem>>, vector<800x800xbf16>
    %cst_17 = arith.constant dense<0.000000e+00> : vector<4x800xf32>
    %34 = tpu.matmul %32, %33, %cst_17 {dimension_numbers = #tpu.dot_dimension_numbers<[1], [0], [0], [1], [0, 0, 1, 1], [], []>} : vector<4x800xbf16>, vector<800x800xbf16>, vector<4x800xf32> -> vector<4x800xf32>
    %c0_18 = arith.constant 0 : index
    %c0_19 = arith.constant 0 : index
    %35 = vector.load %arg6[%c0_18, %c0_19] : memref<1x800xf32, #tpu.memory_space<vmem>>, vector<1x800xf32>
    %c0_20 = arith.constant 0 : index
    %c0_21 = arith.constant 0 : index
    %36 = vector.load %arg7[%c0_20, %c0_21] : memref<1x800xf32, #tpu.memory_space<vmem>>, vector<1x800xf32>
    %cst_22 = arith.constant dense<0.000000e+00> : vector<800xf32>
    %37 = vector.multi_reduction <add>, %34, %cst_22 [0] : vector<4x800xf32> to vector<800xf32>
    %38 = vector.shape_cast %37 : vector<800xf32> to vector<1x800xf32>
    %cst_23 = arith.constant 2.500000e-01 : f32
    %39 = vector.broadcast %cst_23 : f32 to vector<1x800xf32>
    %40 = arith.mulf %38, %39 : vector<1x800xf32>
    %41 = arith.mulf %34, %34 : vector<4x800xf32>
    %cst_24 = arith.constant dense<0.000000e+00> : vector<800xf32>
    %42 = vector.multi_reduction <add>, %41, %cst_24 [0] : vector<4x800xf32> to vector<800xf32>
    %43 = vector.shape_cast %42 : vector<800xf32> to vector<1x800xf32>
    %cst_25 = arith.constant 2.500000e-01 : f32
    %44 = vector.broadcast %cst_25 : f32 to vector<1x800xf32>
    %45 = arith.mulf %43, %44 : vector<1x800xf32>
    %46 = arith.mulf %40, %40 : vector<1x800xf32>
    %47 = arith.subf %45, %46 : vector<1x800xf32>
    %cst_26 = arith.constant 0.000000e+00 : f32
    %48 = vector.broadcast %cst_26 : f32 to vector<1x800xf32>
    %49 = arith.maximumf %47, %48 : vector<1x800xf32>
    %cst_27 = arith.constant 9.99999974E-6 : f32
    %50 = vector.broadcast %cst_27 : f32 to vector<1x800xf32>
    %51 = arith.addf %49, %50 : vector<1x800xf32>
    %52 = math.rsqrt %51 : vector<1x800xf32>
    %53 = arith.mulf %35, %52 : vector<1x800xf32>
    %54 = arith.mulf %40, %53 : vector<1x800xf32>
    %55 = arith.subf %36, %54 : vector<1x800xf32>
    %56 = vector.broadcast %53 : vector<1x800xf32> to vector<4x800xf32>
    %57 = arith.mulf %34, %56 : vector<4x800xf32>
    %58 = vector.broadcast %55 : vector<1x800xf32> to vector<4x800xf32>
    %59 = arith.addf %57, %58 : vector<4x800xf32>
    %cst_28 = arith.constant 0.000000e+00 : f32
    %60 = vector.broadcast %cst_28 : f32 to vector<4x800xf32>
    %61 = arith.maximumf %59, %60 : vector<4x800xf32>
    %62 = arith.truncf %61 : vector<4x800xf32> to vector<4x800xbf16>
    %c0_29 = arith.constant 0 : index
    %c0_30 = arith.constant 0 : index
    %63 = vector.load %arg8[%c0_29, %c0_30] : memref<800x16xbf16, #tpu.memory_space<vmem>>, vector<800x16xbf16>
    %cst_31 = arith.constant dense<0.000000e+00> : vector<4x16xf32>
    %64 = tpu.matmul %62, %63, %cst_31 {dimension_numbers = #tpu.dot_dimension_numbers<[1], [0], [0], [1], [0, 0, 1, 1], [], []>} : vector<4x800xbf16>, vector<800x16xbf16>, vector<4x16xf32> -> vector<4x16xf32>
    %c0_32 = arith.constant 0 : index
    %c0_33 = arith.constant 0 : index
    %65 = vector.load %arg9[%c0_32, %c0_33] : memref<1x16xf32, #tpu.memory_space<vmem>>, vector<1x16xf32>
    %66 = vector.broadcast %65 : vector<1x16xf32> to vector<4x16xf32>
    %67 = arith.addf %64, %66 : vector<4x16xf32>
    %c0_34 = arith.constant 0 : index
    %c0_35 = arith.constant 0 : index
    %c0_36 = arith.constant 0 : index
    %68 = vector.load %arg10[%c0_34, %c0_35, %c0_36] : memref<1x4x16xf32, #tpu.memory_space<vmem>>, vector<1x4x16xf32>
    %69 = vector.shape_cast %68 : vector<1x4x16xf32> to vector<4x16xf32>
    %70 = vector.shape_cast %67 : vector<4x16xf32> to vector<1x4x16xf32>
    tpu.vector_store %arg10[%c0_34, %c0_35, %c0_36], %70 {strides = array<i32>} : memref<1x4x16xf32, #tpu.memory_space<vmem>>, vector<1x4x16xf32>,
    return
  }
  func.func @transform_0(%arg0: i32) -> (i32, i32, i32) {
    %c0_i32 = arith.constant 0 : i32
    %c0_i32_0 = arith.constant 0 : i32
    %c0_i32_1 = arith.constant 0 : i32
    return %arg0, %c0_i32, %c0_i32_0 : i32, i32, i32
  }
  func.func @transform_1(%arg0: i32) -> (i32, i32) {
    %c0_i32 = arith.constant 0 : i32
    %c0_i32_0 = arith.constant 0 : i32
    %c0_i32_1 = arith.constant 0 : i32
    return %c0_i32, %c0_i32_0 : i32, i32
  }
  func.func @transform_2(%arg0: i32) -> (i32, i32) {
    %c0_i32 = arith.constant 0 : i32
    %c0_i32_0 = arith.constant 0 : i32
    %c0_i32_1 = arith.constant 0 : i32
    return %c0_i32, %c0_i32_0 : i32, i32
  }
  func.func @transform_3(%arg0: i32) -> (i32, i32) {
    %c0_i32 = arith.constant 0 : i32
    %c0_i32_0 = arith.constant 0 : i32
    %c0_i32_1 = arith.constant 0 : i32
    return %c0_i32, %c0_i32_0 : i32, i32
  }
  func.func @transform_4(%arg0: i32) -> (i32, i32) {
    %c0_i32 = arith.constant 0 : i32
    %c0_i32_0 = arith.constant 0 : i32
    %c0_i32_1 = arith.constant 0 : i32
    return %c0_i32, %c0_i32_0 : i32, i32
  }
  func.func @transform_5(%arg0: i32) -> (i32, i32) {
    %c0_i32 = arith.constant 0 : i32
    %c0_i32_0 = arith.constant 0 : i32
    %c0_i32_1 = arith.constant 0 : i32
    return %c0_i32, %c0_i32_0 : i32, i32
  }
  func.func @transform_6(%arg0: i32) -> (i32, i32) {
    %c0_i32 = arith.constant 0 : i32
    %c0_i32_0 = arith.constant 0 : i32
    %c0_i32_1 = arith.constant 0 : i32
    return %c0_i32, %c0_i32_0 : i32, i32
  }
  func.func @transform_7(%arg0: i32) -> (i32, i32) {
    %c0_i32 = arith.constant 0 : i32
    %c0_i32_0 = arith.constant 0 : i32
    %c0_i32_1 = arith.constant 0 : i32
    return %c0_i32, %c0_i32_0 : i32, i32
  }
  func.func @transform_8(%arg0: i32) -> (i32, i32) {
    %c0_i32 = arith.constant 0 : i32
    %c0_i32_0 = arith.constant 0 : i32
    %c0_i32_1 = arith.constant 0 : i32
    return %c0_i32, %c0_i32_0 : i32, i32
  }
  func.func @transform_9(%arg0: i32) -> (i32, i32, i32) {
    %c0_i32 = arith.constant 0 : i32
    %c0_i32_0 = arith.constant 0 : i32
    %c0_i32_1 = arith.constant 0 : i32
    return %arg0, %c0_i32, %c0_i32_0 : i32, i32, i32
  }
}

</mosaic_0001>

<llo_original>
// kernel: tpu_custom_call.1
$region0: #{tpu_custom_call.1}
  #allocation0 [shape = 'u32[]', space=smem, size = 0x4, offset = 0x4, fixed_abs, tag = 'smem constant byte address 0x4 - core index']
  #allocation1 [shape = 'u32[144,128]{1,0:T(1,128)}', space=vmem, size = 0x12000, scoped, tag = 'internal scratch']
  %s0 = inlined_call_operand.hbm [shape: f32[1,4,16], index: 0, kind: input, shape index: {}]
  %s1 = inlined_call_operand.hbm [shape: bf16[16,800], index: 1, kind: input, shape index: {}]
  %s2 = inlined_call_operand.hbm [shape: f32[1,800], index: 2, kind: input, shape index: {}]
  %s3 = inlined_call_operand.hbm [shape: f32[1,800], index: 3, kind: input, shape index: {}]
  %s4 = inlined_call_operand.hbm [shape: bf16[800,800], index: 4, kind: input, shape index: {}]
  %s5 = inlined_call_operand.hbm [shape: f32[1,800], index: 5, kind: input, shape index: {}]
  %s6 = inlined_call_operand.hbm [shape: f32[1,800], index: 6, kind: input, shape index: {}]
  %s7 = inlined_call_operand.vmem [shape: bf16[800,16], index: 7, kind: input, shape index: {}]
  %s8 = inlined_call_operand.hbm [shape: f32[1,16], index: 8, kind: input, shape index: {}]
  %s9 = inlined_call_operand.hbm [shape: f32[1,4,16], index: 9, kind: output, shape index: {}]
  %s10 = sld [smem:[#allocation0]]
  $region78: #{tpu_custom_call.1} parent=0
    _
  %s12 = ssub.s32 1, %s10
  %s13 = scalar_select 0, %s12, %s10
  $region1: #{tpu_custom_call.1} parent=0
    #allocation2 [shape = 'u8[2048]{0}', space=vmem, size = 0x800, scoped, tag = 'input window, operand 0, single buffered']
    #allocation3 [shape = 's32[1]{0}', space=sflag, size = 0x4, scoped, tag = 'scoped memory for tpu_custom_call.1']
    #allocation4 [shape = 's32[1]{0}', space=sflag, size = 0x4, scoped, tag = 'scoped memory for tpu_custom_call.1']
    #allocation5 [shape = 'u8[28672]{0}', space=vmem, size = 0x7000, scoped, tag = 'input window, operand 1, single buffered']
    #allocation6 [shape = 's32[1]{0}', space=sflag, size = 0x4, scoped, tag = 'scoped memory for tpu_custom_call.1']
    #allocation7 [shape = 'u8[3584]{0}', space=vmem, size = 0x1000, scoped, tag = 'input window, operand 2, single buffered']
    #allocation8 [shape = 'u8[3584]{0}', space=vmem, size = 0x1000, scoped, tag = 'input window, operand 3, single buffered']
    #allocation9 [shape = 's32[1]{0}', space=sflag, size = 0x4, scoped, tag = 'scoped memory for tpu_custom_call.1']
    #allocation10 [shape = 'u8[1433600]{0}', space=vmem, size = 0x15e000, scoped, tag = 'input window, operand 4, single buffered']
    #allocation11 [shape = 'u8[3584]{0}', space=vmem, size = 0x1000, scoped, tag = 'input window, operand 5, single buffered']
    #allocation12 [shape = 's32[1]{0}', space=sflag, size = 0x4, scoped, tag = 'scoped memory for tpu_custom_call.1']
    #allocation13 [shape = 'u8[3584]{0}', space=vmem, size = 0x1000, scoped, tag = 'input window, operand 6, single buffered']
    #allocation14 [shape = 'u8[512]{0}', space=vmem, size = 0x400, scoped, tag = 'input window, operand 8, single buffered']
    #allocation15 [shape = 's32[1]{0}', space=sflag, size = 0x4, scoped, tag = 'scoped memory for tpu_custom_call.1']
    #allocation16 [shape = 'u8[2048]{0}', space=vmem, size = 0x800, scoped, tag = 'output window, operand 0, single buffered']
    %14 = vsyncpa [#allocation3], 0
    %15 = vsyncpa [#allocation6], 0
    %16 = vsyncpa [#allocation9], 0
    %17 = vsyncpa [#allocation12], 0
    %18 = vsyncpa [#allocation15], 0
    %19 = vsyncpa [#allocation4], 0
    // Predicated region
    $region2: #{tpu_custom_call.1} parent=1 // pred_check
      _
    $region3: #{tpu_custom_call.1} parent=1 // pred_check_branch
      %21 = sbr.rel (0) target = $region5
    $region4: #{tpu_custom_call.1} parent=1 // pred_region
      %s23 = ssub.s32 64, 64
      %24 = vsyncadd [#allocation3], %s23
      %s26 = sshll.u32 [#allocation2], 4
      %s27 = int_to_ptr.vmem [resolvable:$true] %s26
      %29 = dma.hbm_to_vmem [thread:$0]  %s0, 64, %s27, [#allocation3]
    $region5: #{tpu_custom_call.1} parent=1 // pred_fallthru
      _
    // Predicated region
    $region6: #{tpu_custom_call.1} parent=1 // pred_check
      _
    $region7: #{tpu_custom_call.1} parent=1 // pred_check_branch
      %31 = sbr.rel (0) target = $region9
    $region8: #{tpu_custom_call.1} parent=1 // pred_region
      %s33 = ssub.s32 896, 896
      %34 = vsyncadd [#allocation6], %s33
      %s35 = sshll.u32 [#allocation5], 4
      %s36 = int_to_ptr.vmem [resolvable:$true] %s35
      %41 = dma.hbm_to_vmem [thread:$0]  %s1, 896, %s36, [#allocation6], 448, 448, 28
    $region9: #{tpu_custom_call.1} parent=1 // pred_fallthru
      _
    // Predicated region
    $region10: #{tpu_custom_call.1} parent=1 // pred_check
      _
    $region11: #{tpu_custom_call.1} parent=1 // pred_check_branch
      %43 = sbr.rel (0) target = $region13
    $region12: #{tpu_custom_call.1} parent=1 // pred_region
      %s45 = ssub.s32 112, 112
      %46 = vsyncadd [#allocation6], %s45
      %s48 = sshll.u32 [#allocation7], 4
      %s49 = int_to_ptr.vmem [resolvable:$true] %s48
      %51 = dma.hbm_to_vmem [thread:$0]  %s2, 112, %s49, [#allocation6]
    $region13: #{tpu_custom_call.1} parent=1 // pred_fallthru
      _
    // Predicated region
    $region14: #{tpu_custom_call.1} parent=1 // pred_check
      _
    $region15: #{tpu_custom_call.1} parent=1 // pred_check_branch
      %53 = sbr.rel (0) target = $region17
    $region16: #{tpu_custom_call.1} parent=1 // pred_region
      %s55 = ssub.s32 112, 112
      %56 = vsyncadd [#allocation9], %s55
      %s58 = sshll.u32 [#allocation8], 4
      %s59 = int_to_ptr.vmem [resolvable:$true] %s58
      %61 = dma.hbm_to_vmem [thread:$0]  %s3, 112, %s59, [#allocation9]
    $region17: #{tpu_custom_call.1} parent=1 // pred_fallthru
      _
    // Predicated region
    $region18: #{tpu_custom_call.1} parent=1 // pred_check
      _
    $region19: #{tpu_custom_call.1} parent=1 // pred_check_branch
      %63 = sbr.rel (0) target = $region21
    $region20: #{tpu_custom_call.1} parent=1 // pred_region
      %s65 = ssub.s32 44800, 44800
      %66 = vsyncadd [#allocation9], %s65
      %s67 = sshll.u32 [#allocation10], 4
      %s68 = int_to_ptr.vmem [resolvable:$true] %s67
      %73 = dma.hbm_to_vmem [thread:$0]  %s4, 44800, %s68, [#allocation9], 448, 448, 28
    $region21: #{tpu_custom_call.1} parent=1 // pred_fallthru
      _
    // Predicated region
    $region22: #{tpu_custom_call.1} parent=1 // pred_check
      _
    $region23: #{tpu_custom_call.1} parent=1 // pred_check_branch
      %75 = sbr.rel (0) target = $region25
    $region24: #{tpu_custom_call.1} parent=1 // pred_region
      %s77 = ssub.s32 112, 112
      %78 = vsyncadd [#allocation12], %s77
      %s80 = sshll.u32 [#allocation11], 4
      %s81 = int_to_ptr.vmem [resolvable:$true] %s80
      %83 = dma.hbm_to_vmem [thread:$0]  %s5, 112, %s81, [#allocation12]
    $region25: #{tpu_custom_call.1} parent=1 // pred_fallthru
      _
    // Predicated region
    $region26: #{tpu_custom_call.1} parent=1 // pred_check
      _
    $region27: #{tpu_custom_call.1} parent=1 // pred_check_branch
      %85 = sbr.rel (0) target = $region29
    $region28: #{tpu_custom_call.1} parent=1 // pred_region
      %s87 = ssub.s32 112, 112
      %88 = vsyncadd [#allocation12], %s87
      %s90 = sshll.u32 [#allocation13], 4
      %s91 = int_to_ptr.vmem [resolvable:$true] %s90
      %93 = dma.hbm_to_vmem [thread:$0]  %s6, 112, %s91, [#allocation12]
    $region29: #{tpu_custom_call.1} parent=1 // pred_fallthru
      _
    // Predicated region
    $region30: #{tpu_custom_call.1} parent=1 // pred_check
      _
    $region31: #{tpu_custom_call.1} parent=1 // pred_check_branch
      %95 = sbr.rel (0) target = $region33
    $region32: #{tpu_custom_call.1} parent=1 // pred_region
      _
    $region33: #{tpu_custom_call.1} parent=1 // pred_fallthru
      _
    // Predicated region
    $region34: #{tpu_custom_call.1} parent=1 // pred_check
      _
    $region35: #{tpu_custom_call.1} parent=1 // pred_check_branch
      %97 = sbr.rel (0) target = $region37
    $region36: #{tpu_custom_call.1} parent=1 // pred_region
      %s99 = ssub.s32 16, 16
      %100 = vsyncadd [#allocation15], %s99
      %s102 = sshll.u32 [#allocation14], 4
      %s103 = int_to_ptr.vmem [resolvable:$true] %s102
      %105 = dma.hbm_to_vmem [thread:$0]  %s8, 16, %s103, [#allocation15]
    $region37: #{tpu_custom_call.1} parent=1 // pred_fallthru
      _
    // Predicated region
    $region38: #{tpu_custom_call.1} parent=1 // pred_check
      _
    $region39: #{tpu_custom_call.1} parent=1 // pred_check_branch
      %107 = sbr.rel (0) target = $region41
    $region40: #{tpu_custom_call.1} parent=1 // pred_region
      %108 = dma.done [#allocation3], 64
    $region41: #{tpu_custom_call.1} parent=1 // pred_fallthru
      _
    // Predicated region
    $region42: #{tpu_custom_call.1} parent=1 // pred_check
      _
    $region43: #{tpu_custom_call.1} parent=1 // pred_check_branch
      %110 = sbr.rel (0) target = $region45
    $region44: #{tpu_custom_call.1} parent=1 // pred_region
      %111 = dma.done [#allocation6], 896
    $region45: #{tpu_custom_call.1} parent=1 // pred_fallthru
      _
    // Predicated region
    $region46: #{tpu_custom_call.1} parent=1 // pred_check
      _
    $region47: #{tpu_custom_call.1} parent=1 // pred_check_branch
      %113 = sbr.rel (0) target = $region49
    $region48: #{tpu_custom_call.1} parent=1 // pred_region
      %114 = dma.done [#allocation6], 112
    $region49: #{tpu_custom_call.1} parent=1 // pred_fallthru
      _
    // Predicated region
    $region50: #{tpu_custom_call.1} parent=1 // pred_check
      _
    $region51: #{tpu_custom_call.1} parent=1 // pred_check_branch
      %116 = sbr.rel (0) target = $region53
    $region52: #{tpu_custom_call.1} parent=1 // pred_region
      %117 = dma.done [#allocation9], 112
    $region53: #{tpu_custom_call.1} parent=1 // pred_fallthru
      _
    // Predicated region
    $region54: #{tpu_custom_call.1} parent=1 // pred_check
      _
    $region55: #{tpu_custom_call.1} parent=1 // pred_check_branch
      %119 = sbr.rel (0) target = $region57
    $region56: #{tpu_custom_call.1} parent=1 // pred_region
      %120 = dma.done [#allocation9], 44800
    $region57: #{tpu_custom_call.1} parent=1 // pred_fallthru
      _
    // Predicated region
    $region58: #{tpu_custom_call.1} parent=1 // pred_check
      _
    $region59: #{tpu_custom_call.1} parent=1 // pred_check_branch
      %122 = sbr.rel (0) target = $region61
    $region60: #{tpu_custom_call.1} parent=1 // pred_region
      %123 = dma.done [#allocation12], 112
    $region61: #{tpu_custom_call.1} parent=1 // pred_fallthru
      _
    // Predicated region
    $region62: #{tpu_custom_call.1} parent=1 // pred_check
      _
    $region63: #{tpu_custom_call.1} parent=1 // pred_check_branch
      %125 = sbr.rel (0) target = $region65
    $region64: #{tpu_custom_call.1} parent=1 // pred_region
      %126 = dma.done [#allocation12], 112
    $region65: #{tpu_custom_call.1} parent=1 // pred_fallthru
      _
    // Predicated region
    $region66: #{tpu_custom_call.1} parent=1 // pred_check
      _
    $region67: #{tpu_custom_call.1} parent=1 // pred_check_branch
      %128 = sbr.rel (0) target = $region69
    $region68: #{tpu_custom_call.1} parent=1 // pred_region
      %129 = dma.done [#allocation15], 16
    $region69: #{tpu_custom_call.1} parent=1 // pred_fallthru
      _
    %v131 = vld [vmem:[#allocation2] sm:$0xf]
    %v132 = vpack.c.bf16 %v131, %v131
    %v133 = vld [vmem:[#allocation5] sm:$0xff]
    %v134 = vld [vmem:[#allocation5 + $0x8] sm:$0xff]
    %v135 = vld [vmem:[#allocation5 + $0x10] sm:$0xff]
    %v136 = vld [vmem:[#allocation5 + $0x18] sm:$0xf]
    %v137 = vld [vmem:[#allocation5 + $0x1c] sm:$0xff]
    %v138 = vld [vmem:[#allocation5 + $0x24] sm:$0xff]
    %v139 = vld [vmem:[#allocation5 + $0x2c] sm:$0xff]
    %v140 = vld [vmem:[#allocation5 + $0x34] sm:$0xf]
    %v149 = vunpack.c.l.b16 %v133
    %v150 = vunpack.c.h.b16 %v133
    %v151 = vunpack.c.l.b16 %v134
    %v152 = vunpack.c.h.b16 %v134
    %v153 = vunpack.c.l.b16 %v135
    %v154 = vunpack.c.h.b16 %v135
    %v155 = vunpack.c.l.b16 %v136
    %v156 = vunpack.c.l.b16 %v137
    %v157 = vunpack.c.h.b16 %v137
    %v158 = vunpack.c.l.b16 %v138
    %v159 = vunpack.c.h.b16 %v138
    %v160 = vunpack.c.l.b16 %v139
    %v161 = vunpack.c.h.b16 %v139
    %v162 = vunpack.c.l.b16 %v140
    %v163 = vpack.c.b16 %v156, %v149
    %v164 = vpack.c.b16 %v157, %v150
    %v165 = vpack.c.b16 %v158, %v151
    %v166 = vpack.c.b16 %v159, %v152
    %v167 = vpack.c.b16 %v160, %v153
    %v168 = vpack.c.b16 %v161, %v154
    %v169 = vpack.c.b16 %v162, %v155
    %vm177 = vcmask 130048
    %v179 = vsel %vm177, %v132, 0
    %181 = vmatprep.subr.bf16.mxu0 %v164
    %182 = vmatpush1.bf16.msra.mxu0 %v163
    %183 = vmatprep.subr.bf16.mxu0 0
    %184 = vmatpush1.bf16.msra.mxu0 0
    %185 = vmatprep.subr.bf16.mxu0 0
    %186 = vmatpush1.bf16.msra.mxu0 0
    %187 = vmatprep.subr.bf16.mxu0 0
    %188 = vmatpush1.bf16.msra.mxu0 0
    %189 = vmatprep.subr.bf16.mxu0 0
    %190 = vmatpush1.bf16.msra.mxu0 0
    %191 = vmatprep.subr.bf16.mxu0 0
    %192 = vmatpush1.bf16.msra.mxu0 0
    %193 = vmatprep.subr.bf16.mxu0 0
    %194 = vmatpush1.bf16.msra.mxu0 0
    %195 = vmatprep.subr.bf16.mxu0 0
    %196 = vmatpush1.bf16.msra.mxu0 0
    %197 = vmatprep.subr.bf16.mxu0 0
    %198 = vmatpush1.bf16.msra.mxu0 0
    %199 = vmatprep.subr.bf16.mxu0 0
    %200 = vmatpush1.bf16.msra.mxu0 0
    %201 = vmatprep.subr.bf16.mxu0 0
    %202 = vmatpush1.bf16.msra.mxu0 0
    %203 = vmatprep.subr.bf16.mxu0 0
    %204 = vmatpush1.bf16.msra.mxu0 0
    %205 = vmatprep.subr.bf16.mxu0 0
    %206 = vmatpush1.bf16.msra.mxu0 0
    %207 = vmatprep.subr.bf16.mxu0 0
    %208 = vmatpush1.bf16.msra.mxu0 0
    %209 = vmatprep.subr.bf16.mxu0 0
    %210 = vmatpush1.bf16.msra.mxu0 0
    %211 = vmatprep.subr.bf16.mxu0 0
    %212 = vmatpush1.bf16.msra.mxu0 0
    %213 = vmatprep.mubr.bf16.mxu0 0
    %214 = vmatmul.mubr.bf16.gmra.mrb[0].mxu0 %v179
    %v215 = vpop.f32.mrb[0].mxu0
    %v216 = vadd.f32 0.0, %v215
    %v217 = vpop.f32.mrb[0].mxu0
    %v218 = vadd.f32 0.0, %v217
    %v219 = vpop.f32.mrb[0].mxu0
    %v220 = vpop.f32.mrb[0].mxu0
    %221 = vdwg.mxu0
    %222 = vmatprep.subr.bf16.mxu0 %v166
    %223 = vmatpush1.bf16.msra.mxu0 %v165
    %224 = vmatprep.subr.bf16.mxu0 0
    %225 = vmatpush1.bf16.msra.mxu0 0
    %226 = vmatprep.subr.bf16.mxu0 0
    %227 = vmatpush1.bf16.msra.mxu0 0
    %228 = vmatprep.subr.bf16.mxu0 0
    %229 = vmatpush1.bf16.msra.mxu0 0
    %230 = vmatprep.subr.bf16.mxu0 0
    %231 = vmatpush1.bf16.msra.mxu0 0
    %232 = vmatprep.subr.bf16.mxu0 0
    %233 = vmatpush1.bf16.msra.mxu0 0
    %234 = vmatprep.subr.bf16.mxu0 0
    %235 = vmatpush1.bf16.msra.mxu0 0
    %236 = vmatprep.subr.bf16.mxu0 0
    %237 = vmatpush1.bf16.msra.mxu0 0
    %238 = vmatprep.subr.bf16.mxu0 0
    %239 = vmatpush1.bf16.msra.mxu0 0
    %240 = vmatprep.subr.bf16.mxu0 0
    %241 = vmatpush1.bf16.msra.mxu0 0
    %242 = vmatprep.subr.bf16.mxu0 0
    %243 = vmatpush1.bf16.msra.mxu0 0
    %244 = vmatprep.subr.bf16.mxu0 0
    %245 = vmatpush1.bf16.msra.mxu0 0
    %246 = vmatprep.subr.bf16.mxu0 0
    %247 = vmatpush1.bf16.msra.mxu0 0
    %248 = vmatprep.subr.bf16.mxu0 0
    %249 = vmatpush1.bf16.msra.mxu0 0
    %250 = vmatprep.subr.bf16.mxu0 0
    %251 = vmatpush1.bf16.msra.mxu0 0
    %252 = vmatprep.subr.bf16.mxu0 0
    %253 = vmatpush1.bf16.msra.mxu0 0
    %254 = vmatprep.mubr.bf16.mxu0 0
    %255 = vmatmul.mubr.bf16.gmra.mrb[0].mxu0 %v179
    %v256 = vpop.f32.mrb[0].mxu0
    %v257 = vadd.f32 0.0, %v256
    %v258 = vpop.f32.mrb[0].mxu0
    %v259 = vadd.f32 0.0, %v258
    %v260 = vpop.f32.mrb[0].mxu0
    %v261 = vpop.f32.mrb[0].mxu0
    %262 = vdwg.mxu0
    %263 = vmatprep.subr.bf16.mxu0 %v168
    %264 = vmatpush1.bf16.msra.mxu0 %v167
    %265 = vmatprep.subr.bf16.mxu0 0
    %266 = vmatpush1.bf16.msra.mxu0 0
    %267 = vmatprep.subr.bf16.mxu0 0
    %268 = vmatpush1.bf16.msra.mxu0 0
    %269 = vmatprep.subr.bf16.mxu0 0
    %270 = vmatpush1.bf16.msra.mxu0 0
    %271 = vmatprep.subr.bf16.mxu0 0
    %272 = vmatpush1.bf16.msra.mxu0 0
    %273 = vmatprep.subr.bf16.mxu0 0
    %274 = vmatpush1.bf16.msra.mxu0 0
    %275 = vmatprep.subr.bf16.mxu0 0
    %276 = vmatpush1.bf16.msra.mxu0 0
    %277 = vmatprep.subr.bf16.mxu0 0
    %278 = vmatpush1.bf16.msra.mxu0 0
    %279 = vmatprep.subr.bf16.mxu0 0
    %280 = vmatpush1.bf16.msra.mxu0 0
    %281 = vmatprep.subr.bf16.mxu0 0
    %282 = vmatpush1.bf16.msra.mxu0 0
    %283 = vmatprep.subr.bf16.mxu0 0
    %284 = vmatpush1.bf16.msra.mxu0 0
    %285 = vmatprep.subr.bf16.mxu0 0
    %286 = vmatpush1.bf16.msra.mxu0 0
    %287 = vmatprep.subr.bf16.mxu0 0
    %288 = vmatpush1.bf16.msra.mxu0 0
    %289 = vmatprep.subr.bf16.mxu0 0
    %290 = vmatpush1.bf16.msra.mxu0 0
    %291 = vmatprep.subr.bf16.mxu0 0
    %292 = vmatpush1.bf16.msra.mxu0 0
    %293 = vmatprep.subr.bf16.mxu0 0
    %294 = vmatpush1.bf16.msra.mxu0 0
    %295 = vmatprep.mubr.bf16.mxu0 0
    %296 = vmatmul.mubr.bf16.gmra.mrb[0].mxu0 %v179
    %v297 = vpop.f32.mrb[0].mxu0
    %v298 = vadd.f32 0.0, %v297
    %v299 = vpop.f32.mrb[0].mxu0
    %v300 = vadd.f32 0.0, %v299
    %v301 = vpop.f32.mrb[0].mxu0
    %v302 = vpop.f32.mrb[0].mxu0
    %303 = vdwg.mxu0
    %304 = vmatprep.subr.bf16.mxu0 0
    %305 = vmatpush1.bf16.msra.mxu0 %v169
    %306 = vmatprep.subr.bf16.mxu0 0
    %307 = vmatpush1.bf16.msra.mxu0 0
    %308 = vmatprep.subr.bf16.mxu0 0
    %309 = vmatpush1.bf16.msra.mxu0 0
    %310 = vmatprep.subr.bf16.mxu0 0
    %311 = vmatpush1.bf16.msra.mxu0 0
    %312 = vmatprep.subr.bf16.mxu0 0
    %313 = vmatpush1.bf16.msra.mxu0 0
    %314 = vmatprep.subr.bf16.mxu0 0
    %315 = vmatpush1.bf16.msra.mxu0 0
    %316 = vmatprep.subr.bf16.mxu0 0
    %317 = vmatpush1.bf16.msra.mxu0 0
    %318 = vmatprep.subr.bf16.mxu0 0
    %319 = vmatpush1.bf16.msra.mxu0 0
    %320 = vmatprep.subr.bf16.mxu0 0
    %321 = vmatpush1.bf16.msra.mxu0 0
    %322 = vmatprep.subr.bf16.mxu0 0
    %323 = vmatpush1.bf16.msra.mxu0 0
    %324 = vmatprep.subr.bf16.mxu0 0
    %325 = vmatpush1.bf16.msra.mxu0 0
    %326 = vmatprep.subr.bf16.mxu0 0
    %327 = vmatpush1.bf16.msra.mxu0 0
    %328 = vmatprep.subr.bf16.mxu0 0
    %329 = vmatpush1.bf16.msra.mxu0 0
    %330 = vmatprep.subr.bf16.mxu0 0
    %331 = vmatpush1.bf16.msra.mxu0 0
    %332 = vmatprep.subr.bf16.mxu0 0
    %333 = vmatpush1.bf16.msra.mxu0 0
    %334 = vmatprep.subr.bf16.mxu0 0
    %335 = vmatpush1.bf16.msra.mxu0 0
    %336 = vmatprep.mubr.bf16.mxu0 0
    %337 = vmatmul.mubr.bf16.gmra.mrb[0].mxu0 %v179
    %v338 = vpop.f32.mrb[0].mxu0
    %v339 = vadd.f32 0.0, %v338
    %v340 = vpop.f32.mrb[0].mxu0
    %v341 = vpop.f32.mrb[0].mxu0
    %v342 = vpop.f32.mrb[0].mxu0
    %343 = vdwg.mxu0
    %v344 = vld [vmem:[#allocation7] sm:$0x7f]
    %v345 = vld [vmem:[#allocation8] sm:$0x7f]
    %vm346 = vcmask 1043456
    %v347 = vsel %vm346, %v216, 0.0
    %v348 = vrot.slane %v347, 4
    %v349 = vadd.f32 %v347, %v348
    %v350 = vrot.slane %v349, 2
    %v351 = vadd.f32 %v349, %v350
    %v352 = vrot.slane %v351, 1
    %v353 = vadd.f32 %v351, %v352
    %v354 = vsel %vm346, %v218, 0.0
    %v355 = vrot.slane %v354, 4
    %v356 = vadd.f32 %v354, %v355
    %v357 = vrot.slane %v356, 2
    %v358 = vadd.f32 %v356, %v357
    %v359 = vrot.slane %v358, 1
    %v360 = vadd.f32 %v358, %v359
    %v361 = vsel %vm346, %v257, 0.0
    %v362 = vrot.slane %v361, 4
    %v363 = vadd.f32 %v361, %v362
    %v364 = vrot.slane %v363, 2
    %v365 = vadd.f32 %v363, %v364
    %v366 = vrot.slane %v365, 1
    %v367 = vadd.f32 %v365, %v366
    %v368 = vsel %vm346, %v259, 0.0
    %v369 = vrot.slane %v368, 4
    %v370 = vadd.f32 %v368, %v369
    %v371 = vrot.slane %v370, 2
    %v372 = vadd.f32 %v370, %v371
    %v373 = vrot.slane %v372, 1
    %v374 = vadd.f32 %v372, %v373
    %v375 = vsel %vm346, %v298, 0.0
    %v376 = vrot.slane %v375, 4
    %v377 = vadd.f32 %v375, %v376
    %v378 = vrot.slane %v377, 2
    %v379 = vadd.f32 %v377, %v378
    %v380 = vrot.slane %v379, 1
    %v381 = vadd.f32 %v379, %v380
    %v382 = vsel %vm346, %v300, 0.0
    %v383 = vrot.slane %v382, 4
    %v384 = vadd.f32 %v382, %v383
    %v385 = vrot.slane %v384, 2
    %v386 = vadd.f32 %v384, %v385
    %v387 = vrot.slane %v386, 1
    %v388 = vadd.f32 %v386, %v387
    %vm389 = vcmask 257024
    %v390 = vsel %vm389, %v339, 0.0
    %v391 = vrot.slane %v390, 4
    %v392 = vadd.f32 %v390, %v391
    %v393 = vrot.slane %v392, 2
    %v394 = vadd.f32 %v392, %v393
    %v395 = vrot.slane %v394, 1
    %v396 = vadd.f32 %v394, %v395
    %v397 = vmul.f32 %v353, 0.25
    %v398 = vmul.f32 %v360, 0.25
    %v399 = vmul.f32 %v367, 0.25
    %v400 = vmul.f32 %v374, 0.25
    %v401 = vmul.f32 %v381, 0.25
    %v402 = vmul.f32 %v388, 0.25
    %v403 = vmul.f32 %v396, 0.25
    %v404 = vmul.f32 %v216, %v216
    %v405 = vmul.f32 %v218, %v218
    %v406 = vmul.f32 %v257, %v257
    %v407 = vmul.f32 %v259, %v259
    %v408 = vmul.f32 %v298, %v298
    %v409 = vmul.f32 %v300, %v300
    %v410 = vmul.f32 %v339, %v339
    %v411 = vsel %vm346, %v404, 0.0
    %v412 = vrot.slane %v411, 4
    %v413 = vadd.f32 %v411, %v412
    %v414 = vrot.slane %v413, 2
    %v415 = vadd.f32 %v413, %v414
    %v416 = vrot.slane %v415, 1
    %v417 = vadd.f32 %v415, %v416
    %v418 = vsel %vm346, %v405, 0.0
    %v419 = vrot.slane %v418, 4
    %v420 = vadd.f32 %v418, %v419
    %v421 = vrot.slane %v420, 2
    %v422 = vadd.f32 %v420, %v421
    %v423 = vrot.slane %v422, 1
    %v424 = vadd.f32 %v422, %v423
    %v425 = vsel %vm346, %v406, 0.0
    %v426 = vrot.slane %v425, 4
    %v427 = vadd.f32 %v425, %v426
    %v428 = vrot.slane %v427, 2
    %v429 = vadd.f32 %v427, %v428
    %v430 = vrot.slane %v429, 1
    %v431 = vadd.f32 %v429, %v430
    %v432 = vsel %vm346, %v407, 0.0
    %v433 = vrot.slane %v432, 4
    %v434 = vadd.f32 %v432, %v433
    %v435 = vrot.slane %v434, 2
    %v436 = vadd.f32 %v434, %v435
    %v437 = vrot.slane %v436, 1
    %v438 = vadd.f32 %v436, %v437
    %v439 = vsel %vm346, %v408, 0.0
    %v440 = vrot.slane %v439, 4
    %v441 = vadd.f32 %v439, %v440
    %v442 = vrot.slane %v441, 2
    %v443 = vadd.f32 %v441, %v442
    %v444 = vrot.slane %v443, 1
    %v445 = vadd.f32 %v443, %v444
    %v446 = vsel %vm346, %v409, 0.0
    %v447 = vrot.slane %v446, 4
    %v448 = vadd.f32 %v446, %v447
    %v449 = vrot.slane %v448, 2
    %v450 = vadd.f32 %v448, %v449
    %v451 = vrot.slane %v450, 1
    %v452 = vadd.f32 %v450, %v451
    %v453 = vsel %vm389, %v410, 0.0
    %v454 = vrot.slane %v453, 4
    %v455 = vadd.f32 %v453, %v454
    %v456 = vrot.slane %v455, 2
    %v457 = vadd.f32 %v455, %v456
    %v458 = vrot.slane %v457, 1
    %v459 = vadd.f32 %v457, %v458
    %v460 = vmul.f32 %v417, 0.25
    %v461 = vmul.f32 %v424, 0.25
    %v462 = vmul.f32 %v431, 0.25
    %v463 = vmul.f32 %v438, 0.25
    %v464 = vmul.f32 %v445, 0.25
    %v465 = vmul.f32 %v452, 0.25
    %v466 = vmul.f32 %v459, 0.25
    %v467 = vmul.f32 %v397, %v397
    %v468 = vmul.f32 %v398, %v398
    %v469 = vmul.f32 %v399, %v399
    %v470 = vmul.f32 %v400, %v400
    %v471 = vmul.f32 %v401, %v401
    %v472 = vmul.f32 %v402, %v402
    %v473 = vmul.f32 %v403, %v403
    %v474 = vsub.f32 %v460, %v467
    %v475 = vsub.f32 %v461, %v468
    %v476 = vsub.f32 %v462, %v469
    %v477 = vsub.f32 %v463, %v470
    %v478 = vsub.f32 %v464, %v471
    %v479 = vsub.f32 %v465, %v472
    %v480 = vsub.f32 %v466, %v473
    %v481 = vmax.f32 %v474, 0.0
    %v482 = vmax.f32 %v475, 0.0
    %v483 = vmax.f32 %v476, 0.0
    %v484 = vmax.f32 %v477, 0.0
    %v485 = vmax.f32 %v478, 0.0
    %v486 = vmax.f32 %v479, 0.0
    %v487 = vmax.f32 %v480, 0.0
    %v488 = vadd.f32 %v481, 1e-05
    %v489 = vadd.f32 %v482, 1e-05
    %v490 = vadd.f32 %v483, 1e-05
    %v491 = vadd.f32 %v484, 1e-05
    %v492 = vadd.f32 %v485, 1e-05
    %v493 = vadd.f32 %v486, 1e-05
    %v494 = vadd.f32 %v487, 1e-05
    %v495 = vrsqrt.pop %v488
    %v496 = vrsqrt.pop %v489
    %v497 = vrsqrt.pop %v490
    %v498 = vrsqrt.pop %v491
    %v499 = vrsqrt.pop %v492
    %v500 = vrsqrt.pop %v493
    %v501 = vrsqrt.pop %v494
    %v509 = vcombine.low %v495, %v496
    %v510 = vcombine.low %v497, %v498
    %v511 = vcombine.low %v499, %v500
    %v513 = vunpack.c.l.s4 1966171168
    %v514 = vunpack.c.0.s8 %v513
    %v515 = vlaneseq
    %v516 = vshrl.u32 %v515, 7
    %v517 = vsub.s32 %v514, %v516
    %v518 = vrot.slane %v509, %v517
    %v520 = vunpack.c.l.s4 1966171168
    %v521 = vunpack.c.0.s8 %v520
    %v522 = vlaneseq
    %v523 = vshrl.u32 %v522, 7
    %v524 = vsub.s32 %v521, %v523
    %v525 = vrot.slane %v510, %v524
    %v527 = vunpack.c.l.s4 1966171168
    %v528 = vunpack.c.0.s8 %v527
    %v529 = vlaneseq
    %v530 = vshrl.u32 %v529, 7
    %v531 = vsub.s32 %v528, %v530
    %v532 = vrot.slane %v511, %v531
    %v534 = vunpack.c.l.s4 1966171168
    %v535 = vunpack.c.0.s8 %v534
    %v536 = vlaneseq
    %v537 = vshrl.u32 %v536, 7
    %v538 = vsub.s32 %v535, %v537
    %v539 = vrot.slane %v501, %v538
    %v540 = vcombine.low %v518, %v525
    %v541 = vcombine.low %v532, %v539
    %v543 = vunpack.c.l.s4 1966171168
    %v544 = vunpack.c.0.s8 %v543
    %v545 = vlaneseq
    %v546 = vshrl.u32 %v545, 7
    %v547 = vsub.s32 %v544, %v546
    %v548 = vrot.slane %v540, %v547
    %v550 = vunpack.c.l.s4 1966171168
    %v551 = vunpack.c.0.s8 %v550
    %v552 = vlaneseq
    %v553 = vshrl.u32 %v552, 7
    %v554 = vsub.s32 %v551, %v553
    %v555 = vrot.slane %v541, %v554
    %v556 = vcombine.low %v548, %v555
    %v558 = vmul.f32 %v344, %v556
    %v560 = vlaneseq
    %v561 = vshrl.u32 %v560, 7
    %v562 = vsub.s32 0, %v561
    %v563 = vrot.slane %v558, %v562
    %v564 = vlaneseq
    %v565 = vshrl.u32 %v564, 7
    %v566 = vsub.s32 1, %v565
    %v567 = vrot.slane %v558, %v566
    %v568 = vlaneseq
    %v569 = vshrl.u32 %v568, 7
    %v570 = vsub.s32 2, %v569
    %v571 = vrot.slane %v558, %v570
    %v572 = vlaneseq
    %v573 = vshrl.u32 %v572, 7
    %v574 = vsub.s32 3, %v573
    %v575 = vrot.slane %v558, %v574
    %v576 = vlaneseq
    %v577 = vshrl.u32 %v576, 7
    %v578 = vsub.s32 4, %v577
    %v579 = vrot.slane %v558, %v578
    %v580 = vlaneseq
    %v581 = vshrl.u32 %v580, 7
    %v582 = vsub.s32 5, %v581
    %v583 = vrot.slane %v558, %v582
    %v584 = vlaneseq
    %v585 = vshrl.u32 %v584, 7
    %v586 = vsub.s32 6, %v585
    %v587 = vrot.slane %v558, %v586
    %v595 = vmul.f32 %v397, %v563
    %v596 = vmul.f32 %v398, %v567
    %v597 = vmul.f32 %v399, %v571
    %v598 = vmul.f32 %v400, %v575
    %v599 = vmul.f32 %v401, %v579
    %v600 = vmul.f32 %v402, %v583
    %v601 = vmul.f32 %v403, %v587
    %v609 = vcombine.low %v595, %v596
    %v610 = vcombine.low %v597, %v598
    %v611 = vcombine.low %v599, %v600
    %v613 = vunpack.c.l.s4 1966171168
    %v614 = vunpack.c.0.s8 %v613
    %v615 = vlaneseq
    %v616 = vshrl.u32 %v615, 7
    %v617 = vsub.s32 %v614, %v616
    %v618 = vrot.slane %v609, %v617
    %v620 = vunpack.c.l.s4 1966171168
    %v621 = vunpack.c.0.s8 %v620
    %v622 = vlaneseq
    %v623 = vshrl.u32 %v622, 7
    %v624 = vsub.s32 %v621, %v623
    %v625 = vrot.slane %v610, %v624
    %v627 = vunpack.c.l.s4 1966171168
    %v628 = vunpack.c.0.s8 %v627
    %v629 = vlaneseq
    %v630 = vshrl.u32 %v629, 7
    %v631 = vsub.s32 %v628, %v630
    %v632 = vrot.slane %v611, %v631
    %v634 = vunpack.c.l.s4 1966171168
    %v635 = vunpack.c.0.s8 %v634
    %v636 = vlaneseq
    %v637 = vshrl.u32 %v636, 7
    %v638 = vsub.s32 %v635, %v637
    %v639 = vrot.slane %v601, %v638
    %v640 = vcombine.low %v618, %v625
    %v641 = vcombine.low %v632, %v639
    %v643 = vunpack.c.l.s4 1966171168
    %v644 = vunpack.c.0.s8 %v643
    %v645 = vlaneseq
    %v646 = vshrl.u32 %v645, 7
    %v647 = vsub.s32 %v644, %v646
    %v648 = vrot.slane %v640, %v647
    %v650 = vunpack.c.l.s4 1966171168
    %v651 = vunpack.c.0.s8 %v650
    %v652 = vlaneseq
    %v653 = vshrl.u32 %v652, 7
    %v654 = vsub.s32 %v651, %v653
    %v655 = vrot.slane %v641, %v654
    %v656 = vcombine.low %v648, %v655
    %v658 = vsub.f32 %v345, %v656
    %v659 = vmul.f32 %v216, %v563
    %v660 = vmul.f32 %v218, %v567
    %v661 = vmul.f32 %v257, %v571
    %v662 = vmul.f32 %v259, %v575
    %v663 = vmul.f32 %v298, %v579
    %v664 = vmul.f32 %v300, %v583
    %v665 = vmul.f32 %v339, %v587
    %v667 = vlaneseq
    %v668 = vshrl.u32 %v667, 7
    %v669 = vsub.s32 0, %v668
    %v670 = vrot.slane %v658, %v669
    %v671 = vlaneseq
    %v672 = vshrl.u32 %v671, 7
    %v673 = vsub.s32 1, %v672
    %v674 = vrot.slane %v658, %v673
    %v675 = vlaneseq
    %v676 = vshrl.u32 %v675, 7
    %v677 = vsub.s32 2, %v676
    %v678 = vrot.slane %v658, %v677
    %v679 = vlaneseq
    %v680 = vshrl.u32 %v679, 7
    %v681 = vsub.s32 3, %v680
    %v682 = vrot.slane %v658, %v681
    %v683 = vlaneseq
    %v684 = vshrl.u32 %v683, 7
    %v685 = vsub.s32 4, %v684
    %v686 = vrot.slane %v658, %v685
    %v687 = vlaneseq
    %v688 = vshrl.u32 %v687, 7
    %v689 = vsub.s32 5, %v688
    %v690 = vrot.slane %v658, %v689
    %v691 = vlaneseq
    %v692 = vshrl.u32 %v691, 7
    %v693 = vsub.s32 6, %v692
    %v694 = vrot.slane %v658, %v693
    %v702 = vadd.f32 %v659, %v670
    %v703 = vadd.f32 %v660, %v674
    %v704 = vadd.f32 %v661, %v678
    %v705 = vadd.f32 %v662, %v682
    %v706 = vadd.f32 %v663, %v686
    %v707 = vadd.f32 %v664, %v690
    %v708 = vadd.f32 %v665, %v694
    %v709 = vmax.f32 %v702, 0.0
    %v710 = vmax.f32 %v703, 0.0
    %v711 = vmax.f32 %v704, 0.0
    %v712 = vmax.f32 %v705, 0.0
    %v713 = vmax.f32 %v706, 0.0
    %v714 = vmax.f32 %v707, 0.0
    %v715 = vmax.f32 %v708, 0.0
    %v716 = vpack.c.bf16 %v709, %v709
    %v717 = vpack.c.bf16 %v710, %v710
    %v718 = vpack.c.bf16 %v711, %v711
    %v719 = vpack.c.bf16 %v712, %v712
    %v720 = vpack.c.bf16 %v713, %v713
    %v721 = vpack.c.bf16 %v714, %v714
    %v722 = vpack.c.bf16 %v715, %v715
    %v723 = vld [vmem:[#allocation10] sm:$0xff]
    %v724 = vld [vmem:[#allocation10 + $0x8] sm:$0xff]
    %v725 = vld [vmem:[#allocation10 + $0x10] sm:$0xff]
    %v726 = vld [vmem:[#allocation10 + $0x18] sm:$0xf]
    %v727 = vld [vmem:[#allocation10 + $0x1c] sm:$0xff]
    %v728 = vld [vmem:[#allocation10 + $0x24] sm:$0xff]
    %v729 = vld [vmem:[#allocation10 + $0x2c] sm:$0xff]
    %v730 = vld [vmem:[#allocation10 + $0x34] sm:$0xf]
    %v731 = vld [vmem:[#allocation10 + $0x38] sm:$0xff]
    %v732 = vld [vmem:[#allocation10 + $0x40] sm:$0xff]
    %v733 = vld [vmem:[#allocation10 + $0x48] sm:$0xff]
    %v734 = vld [vmem:[#allocation10 + $0x50] sm:$0xf]
    %v735 = vld [vmem:[#allocation10 + $0x54] sm:$0xff]
    %v736 = vld [vmem:[#allocation10 + $0x5c] sm:$0xff]
    %v737 = vld [vmem:[#allocation10 + $0x64] sm:$0xff]
    %v738 = vld [vmem:[#allocation10 + $0x6c] sm:$0xf]
    %v739 = vld [vmem:[#allocation10 + $0x70] sm:$0xff]
    %v740 = vld [vmem:[#allocation10 + $0x78] sm:$0xff]
    %v741 = vld [vmem:[#allocation10 + $0x80] sm:$0xff]
    %v742 = vld [vmem:[#allocation10 + $0x88] sm:$0xf]
    %v743 = vld [vmem:[#allocation10 + $0x8c] sm:$0xff]
    %v744 = vld [vmem:[#allocation10 + $0x94] sm:$0xff]
    %v745 = vld [vmem:[#allocation10 + $0x9c] sm:$0xff]
    %v746 = vld [vmem:[#allocation10 + $0xa4] sm:$0xf]
    %v747 = vld [vmem:[#allocation10 + $0xa8] sm:$0xff]
    %v748 = vld [vmem:[#allocation10 + $0xb0] sm:$0xff]
    %v749 = vld [vmem:[#allocation10 + $0xb8] sm:$0xff]
    %v750 = vld [vmem:[#allocation10 + $0xc0] sm:$0xf]
    %v751 = vld [vmem:[#allocation10 + $0xc4] sm:$0xff]
    %v752 = vld [vmem:[#allocation10 + $0xcc] sm:$0xff]
    %v753 = vld [vmem:[#allocation10 + $0xd4] sm:$0xff]
    %v754 = vld [vmem:[#allocation10 + $0xdc] sm:$0xf]
    %v755 = vld [vmem:[#allocation10 + $0xe0] sm:$0xff]
    %v756 = vld [vmem:[#allocation10 + $0xe8] sm:$0xff]
    %v757 = vld [vmem:[#allocation10 + $0xf0] sm:$0xff]
    %v758 = vld [vmem:[#allocation10 + $0xf8] sm:$0xf]
    %v759 = vld [vmem:[#allocation10 + $0xfc] sm:$0xff]
    %v760 = vld [vmem:[#allocation10 + $0x104] sm:$0xff]
    %v761 = vld [vmem:[#allocation10 + $0x10c] sm:$0xff]
    %v762 = vld [vmem:[#allocation10 + $0x114] sm:$0xf]
    %v763 = vld [vmem:[#allocation10 + $0x118] sm:$0xff]
    %v764 = vld [vmem:[#allocation10 + $0x120] sm:$0xff]
    %v765 = vld [vmem:[#allocation10 + $0x128] sm:$0xff]
    %v766 = vld [vmem:[#allocation10 + $0x130] sm:$0xf]
    %v767 = vld [vmem:[#allocation10 + $0x134] sm:$0xff]
    %v768 = vld [vmem:[#allocation10 + $0x13c] sm:$0xff]
    %v769 = vld [vmem:[#allocation10 + $0x144] sm:$0xff]
    %v770 = vld [vmem:[#allocation10 + $0x14c] sm:$0xf]
    %v771 = vld [vmem:[#allocation10 + $0x150] sm:$0xff]
    %v772 = vld [vmem:[#allocation10 + $0x158] sm:$0xff]
    %v773 = vld [vmem:[#allocation10 + $0x160] sm:$0xff]
    %v774 = vld [vmem:[#allocation10 + $0x168] sm:$0xf]
    %v775 = vld [vmem:[#allocation10 + $0x16c] sm:$0xff]
    %v776 = vld [vmem:[#allocation10 + $0x174] sm:$0xff]
    %v777 = vld [vmem:[#allocation10 + $0x17c] sm:$0xff]
    %v778 = vld [vmem:[#allocation10 + $0x184] sm:$0xf]
    %v779 = vld [vmem:[#allocation10 + $0x188] sm:$0xff]
    %v780 = vld [vmem:[#allocation10 + $0x190] sm:$0xff]
    %v781 = vld [vmem:[#allocation10 + $0x198] sm:$0xff]
    %v782 = vld [vmem:[#allocation10 + $0x1a0] sm:$0xf]
    %v783 = vld [vmem:[#allocation10 + $0x1a4] sm:$0xff]
    %v784 = vld [vmem:[#allocation10 + $0x1ac] sm:$0xff]
    %v785 = vld [vmem:[#allocation10 + $0x1b4] sm:$0xff]
    %v786 = vld [vmem:[#allocation10 + $0x1bc] sm:$0xf]
    %v787 = vld [vmem:[#allocation10 + $0x1c0] sm:$0xff]
    %v788 = vld [vmem:[#allocation10 + $0x1c8] sm:$0xff]
    %v789 = vld [vmem:[#allocation10 + $0x1d0] sm:$0xff]
    %v790 = vld [vmem:[#allocation10 + $0x1d8] sm:$0xf]
    %v791 = vld [vmem:[#allocation10 + $0x1dc] sm:$0xff]
    %v792 = vld [vmem:[#allocation10 + $0x1e4] sm:$0xff]
    %v793 = vld [vmem:[#allocation10 + $0x1ec] sm:$0xff]
    %v794 = vld [vmem:[#allocation10 + $0x1f4] sm:$0xf]
    %v795 = vld [vmem:[#allocation10 + $0x1f8] sm:$0xff]
    %v796 = vld [vmem:[#allocation10 + $0x200] sm:$0xff]
    %v797 = vld [vmem:[#allocation10 + $0x208] sm:$0xff]
    %v798 = vld [vmem:[#allocation10 + $0x210] sm:$0xf]
    %v799 = vld [vmem:[#allocation10 + $0x214] sm:$0xff]
    %v800 = vld [vmem:[#allocation10 + $0x21c] sm:$0xff]
    %v801 = vld [vmem:[#allocation10 + $0x224] sm:$0xff]
    %v802 = vld [vmem:[#allocation10 + $0x22c] sm:$0xf]
    %v803 = vld [vmem:[#allocation10 + $0x230] sm:$0xff]
    %v804 = vld [vmem:[#allocation10 + $0x238] sm:$0xff]
    %v805 = vld [vmem:[#allocation10 + $0x240] sm:$0xff]
    %v806 = vld [vmem:[#allocation10 + $0x248] sm:$0xf]
    %v807 = vld [vmem:[#allocation10 + $0x24c] sm:$0xff]
    %v808 = vld [vmem:[#allocation10 + $0x254] sm:$0xff]
    %v809 = vld [vmem:[#allocation10 + $0x25c] sm:$0xff]
    %v810 = vld [vmem:[#allocation10 + $0x264] sm:$0xf]
    %v811 = vld [vmem:[#allocation10 + $0x268] sm:$0xff]
    %v812 = vld [vmem:[#allocation10 + $0x270] sm:$0xff]
    %v813 = vld [vmem:[#allocation10 + $0x278] sm:$0xff]
    %v814 = vld [vmem:[#allocation10 + $0x280] sm:$0xf]
    %v815 = vld [vmem:[#allocation10 + $0x284] sm:$0xff]
    %v816 = vld [vmem:[#allocation10 + $0x28c] sm:$0xff]
    %v817 = vld [vmem:[#allocation10 + $0x294] sm:$0xff]
    %v818 = vld [vmem:[#allocation10 + $0x29c] sm:$0xf]
    %v819 = vld [vmem:[#allocation10 + $0x2a0] sm:$0xff]
    %v820 = vld [vmem:[#allocation10 + $0x2a8] sm:$0xff]
    %v821 = vld [vmem:[#allocation10 + $0x2b0] sm:$0xff]
    %v822 = vld [vmem:[#allocation10 + $0x2b8] sm:$0xf]
    %v823 = vld [vmem:[#allocation10 + $0x2bc] sm:$0xff]
    %v824 = vld [vmem:[#allocation10 + $0x2c4] sm:$0xff]
    %v825 = vld [vmem:[#allocation10 + $0x2cc] sm:$0xff]
    %v826 = vld [vmem:[#allocation10 + $0x2d4] sm:$0xf]
    %v827 = vld [vmem:[#allocation10 + $0x2d8] sm:$0xff]
    %v828 = vld [vmem:[#allocation10 + $0x2e0] sm:$0xff]
    %v829 = vld [vmem:[#allocation10 + $0x2e8] sm:$0xff]
    %v830 = vld [vmem:[#allocation10 + $0x2f0] sm:$0xf]
    %v831 = vld [vmem:[#allocation10 + $0x2f4] sm:$0xff]
    %v832 = vld [vmem:[#allocation10 + $0x2fc] sm:$0xff]
    %v833 = vld [vmem:[#allocation10 + $0x304] sm:$0xff]
    %v834 = vld [vmem:[#allocation10 + $0x30c] sm:$0xf]
    %v835 = vld [vmem:[#allocation10 + $0x310] sm:$0xff]
    %v836 = vld [vmem:[#allocation10 + $0x318] sm:$0xff]
    %v837 = vld [vmem:[#allocation10 + $0x320] sm:$0xff]
    %v838 = vld [vmem:[#allocation10 + $0x328] sm:$0xf]
    %v839 = vld [vmem:[#allocation10 + $0x32c] sm:$0xff]
    %v840 = vld [vmem:[#allocation10 + $0x334] sm:$0xff]
    %v841 = vld [vmem:[#allocation10 + $0x33c] sm:$0xff]
    %v842 = vld [vmem:[#allocation10 + $0x344] sm:$0xf]
    %v843 = vld [vmem:[#allocation10 + $0x348] sm:$0xff]
    %v844 = vld [vmem:[#allocation10 + $0x350] sm:$0xff]
    %v845 = vld [vmem:[#allocation10 + $0x358] sm:$0xff]
    %v846 = vld [vmem:[#allocation10 + $0x360] sm:$0xf]
    %v847 = vld [vmem:[#allocation10 + $0x364] sm:$0xff]
    %v848 = vld [vmem:[#allocation10 + $0x36c] sm:$0xff]
    %v849 = vld [vmem:[#allocation10 + $0x374] sm:$0xff]
    %v850 = vld [vmem:[#allocation10 + $0x37c] sm:$0xf]
    %v851 = vld [vmem:[#allocation10 + $0x380] sm:$0xff]
    %v852 = vld [vmem:[#allocation10 + $0x388] sm:$0xff]
    %v853 = vld [vmem:[#allocation10 + $0x390] sm:$0xff]
    %v854 = vld [vmem:[#allocation10 + $0x398] sm:$0xf]
    %v855 = vld [vmem:[#allocation10 + $0x39c] sm:$0xff]
    %v856 = vld [vmem:[#allocation10 + $0x3a4] sm:$0xff]
    %v857 = vld [vmem:[#allocation10 + $0x3ac] sm:$0xff]
    %v858 = vld [vmem:[#allocation10 + $0x3b4] sm:$0xf]
    %v859 = vld [vmem:[#allocation10 + $0x3b8] sm:$0xff]
    %v860 = vld [vmem:[#allocation10 + $0x3c0] sm:$0xff]
    %v861 = vld [vmem:[#allocation10 + $0x3c8] sm:$0xff]
    %v862 = vld [vmem:[#allocation10 + $0x3d0] sm:$0xf]
    %v863 = vld [vmem:[#allocation10 + $0x3d4] sm:$0xff]
    %v864 = vld [vmem:[#allocation10 + $0x3dc] sm:$0xff]
    %v865 = vld [vmem:[#allocation10 + $0x3e4] sm:$0xff]
    %v866 = vld [vmem:[#allocation10 + $0x3ec] sm:$0xf]
    %v867 = vld [vmem:[#allocation10 + $0x3f0] sm:$0xff]
    %v868 = vld [vmem:[#allocation10 + $0x3f8] sm:$0xff]
    %v869 = vld [vmem:[#allocation10 + $0x400] sm:$0xff]
    %v870 = vld [vmem:[#allocation10 + $0x408] sm:$0xf]
    %v871 = vld [vmem:[#allocation10 + $0x40c] sm:$0xff]
    %v872 = vld [vmem:[#allocation10 + $0x414] sm:$0xff]
    %v873 = vld [vmem:[#allocation10 + $0x41c] sm:$0xff]
    %v874 = vld [vmem:[#allocation10 + $0x424] sm:$0xf]
    %v875 = vld [vmem:[#allocation10 + $0x428] sm:$0xff]
    %v876 = vld [vmem:[#allocation10 + $0x430] sm:$0xff]
    %v877 = vld [vmem:[#allocation10 + $0x438] sm:$0xff]
    %v878 = vld [vmem:[#allocation10 + $0x440] sm:$0xf]
    %v879 = vld [vmem:[#allocation10 + $0x444] sm:$0xff]
    %v880 = vld [vmem:[#allocation10 + $0x44c] sm:$0xff]
    %v881 = vld [vmem:[#allocation10 + $0x454] sm:$0xff]
    %v882 = vld [vmem:[#allocation10 + $0x45c] sm:$0xf]
    %v883 = vld [vmem:[#allocation10 + $0x460] sm:$0xff]
    %v884 = vld [vmem:[#allocation10 + $0x468] sm:$0xff]
    %v885 = vld [vmem:[#allocation10 + $0x470] sm:$0xff]
    %v886 = vld [vmem:[#allocation10 + $0x478] sm:$0xf]
    %v887 = vld [vmem:[#allocation10 + $0x47c] sm:$0xff]
    %v888 = vld [vmem:[#allocation10 + $0x484] sm:$0xff]
    %v889 = vld [vmem:[#allocation10 + $0x48c] sm:$0xff]
    %v890 = vld [vmem:[#allocation10 + $0x494] sm:$0xf]
    %v891 = vld [vmem:[#allocation10 + $0x498] sm:$0xff]
    %v892 = vld [vmem:[#allocation10 + $0x4a0] sm:$0xff]
    %v893 = vld [vmem:[#allocation10 + $0x4a8] sm:$0xff]
    %v894 = vld [vmem:[#allocation10 + $0x4b0] sm:$0xf]
    %v895 = vld [vmem:[#allocation10 + $0x4b4] sm:$0xff]
    %v896 = vld [vmem:[#allocation10 + $0x4bc] sm:$0xff]
    %v897 = vld [vmem:[#allocation10 + $0x4c4] sm:$0xff]
    %v898 = vld [vmem:[#allocation10 + $0x4cc] sm:$0xf]
    %v899 = vld [vmem:[#allocation10 + $0x4d0] sm:$0xff]
    %v900 = vld [vmem:[#allocation10 + $0x4d8] sm:$0xff]
    %v901 = vld [vmem:[#allocation10 + $0x4e0] sm:$0xff]
    %v902 = vld [vmem:[#allocation10 + $0x4e8] sm:$0xf]
    %v903 = vld [vmem:[#allocation10 + $0x4ec] sm:$0xff]
    %v904 = vld [vmem:[#allocation10 + $0x4f4] sm:$0xff]
    %v905 = vld [vmem:[#allocation10 + $0x4fc] sm:$0xff]
    %v906 = vld [vmem:[#allocation10 + $0x504] sm:$0xf]
    %v907 = vld [vmem:[#allocation10 + $0x508] sm:$0xff]
    %v908 = vld [vmem:[#allocation10 + $0x510] sm:$0xff]
    %v909 = vld [vmem:[#allocation10 + $0x518] sm:$0xff]
    %v910 = vld [vmem:[#allocation10 + $0x520] sm:$0xf]
    %v911 = vld [vmem:[#allocation10 + $0x524] sm:$0xff]
    %v912 = vld [vmem:[#allocation10 + $0x52c] sm:$0xff]
    %v913 = vld [vmem:[#allocation10 + $0x534] sm:$0xff]
    %v914 = vld [vmem:[#allocation10 + $0x53c] sm:$0xf]
    %v915 = vld [vmem:[#allocation10 + $0x540] sm:$0xff]
    %v916 = vld [vmem:[#allocation10 + $0x548] sm:$0xff]
    %v917 = vld [vmem:[#allocation10 + $0x550] sm:$0xff]
    %v918 = vld [vmem:[#allocation10 + $0x558] sm:$0xf]
    %v919 = vld [vmem:[#allocation10 + $0x55c] sm:$0xff]
    %v920 = vld [vmem:[#allocation10 + $0x564] sm:$0xff]
    %v921 = vld [vmem:[#allocation10 + $0x56c] sm:$0xff]
    %v922 = vld [vmem:[#allocation10 + $0x574] sm:$0xf]
    %v923 = vld [vmem:[#allocation10 + $0x578] sm:$0xff]
    %v924 = vld [vmem:[#allocation10 + $0x580] sm:$0xff]
    %v925 = vld [vmem:[#allocation10 + $0x588] sm:$0xff]
    %v926 = vld [vmem:[#allocation10 + $0x590] sm:$0xf]
    %v927 = vld [vmem:[#allocation10 + $0x594] sm:$0xff]
    %v928 = vld [vmem:[#allocation10 + $0x59c] sm:$0xff]
    %v929 = vld [vmem:[#allocation10 + $0x5a4] sm:$0xff]
    %v930 = vld [vmem:[#allocation10 + $0x5ac] sm:$0xf]
    %v931 = vld [vmem:[#allocation10 + $0x5b0] sm:$0xff]
    %v932 = vld [vmem:[#allocation10 + $0x5b8] sm:$0xff]
    %v933 = vld [vmem:[#allocation10 + $0x5c0] sm:$0xff]
    %v934 = vld [vmem:[#allocation10 + $0x5c8] sm:$0xf]
    %v935 = vld [vmem:[#allocation10 + $0x5cc] sm:$0xff]
    %v936 = vld [vmem:[#allocation10 + $0x5d4] sm:$0xff]
    %v937 = vld [vmem:[#allocation10 + $0x5dc] sm:$0xff]
    %v938 = vld [vmem:[#allocation10 + $0x5e4] sm:$0xf]
    %v939 = vld [vmem:[#allocation10 + $0x5e8] sm:$0xff]
    %v940 = vld [vmem:[#allocation10 + $0x5f0] sm:$0xff]
    %v941 = vld [vmem:[#allocation10 + $0x5f8] sm:$0xff]
    %v942 = vld [vmem:[#allocation10 + $0x600] sm:$0xf]
    %v943 = vld [vmem:[#allocation10 + $0x604] sm:$0xff]
    %v944 = vld [vmem:[#allocation10 + $0x60c] sm:$0xff]
    %v945 = vld [vmem:[#allocation10 + $0x614] sm:$0xff]
    %v946 = vld [vmem:[#allocation10 + $0x61c] sm:$0xf]
    %v947 = vld [vmem:[#allocation10 + $0x620] sm:$0xff]
    %v948 = vld [vmem:[#allocation10 + $0x628] sm:$0xff]
    %v949 = vld [vmem:[#allocation10 + $0x630] sm:$0xff]
    %v950 = vld [vmem:[#allocation10 + $0x638] sm:$0xf]
    %v951 = vld [vmem:[#allocation10 + $0x63c] sm:$0xff]
    %v952 = vld [vmem:[#allocation10 + $0x644] sm:$0xff]
    %v953 = vld [vmem:[#allocation10 + $0x64c] sm:$0xff]
    %v954 = vld [vmem:[#allocation10 + $0x654] sm:$0xf]
    %v955 = vld [vmem:[#allocation10 + $0x658] sm:$0xff]
    %v956 = vld [vmem:[#allocation10 + $0x660] sm:$0xff]
    %v957 = vld [vmem:[#allocation10 + $0x668] sm:$0xff]
    %v958 = vld [vmem:[#allocation10 + $0x670] sm:$0xf]
    %v959 = vld [vmem:[#allocation10 + $0x674] sm:$0xff]
    %v960 = vld [vmem:[#allocation10 + $0x67c] sm:$0xff]
    %v961 = vld [vmem:[#allocation10 + $0x684] sm:$0xff]
    %v962 = vld [vmem:[#allocation10 + $0x68c] sm:$0xf]
    %v963 = vld [vmem:[#allocation10 + $0x690] sm:$0xff]
    %v964 = vld [vmem:[#allocation10 + $0x698] sm:$0xff]
    %v965 = vld [vmem:[#allocation10 + $0x6a0] sm:$0xff]
    %v966 = vld [vmem:[#allocation10 + $0x6a8] sm:$0xf]
    %v967 = vld [vmem:[#allocation10 + $0x6ac] sm:$0xff]
    %v968 = vld [vmem:[#allocation10 + $0x6b4] sm:$0xff]
    %v969 = vld [vmem:[#allocation10 + $0x6bc] sm:$0xff]
    %v970 = vld [vmem:[#allocation10 + $0x6c4] sm:$0xf]
    %v971 = vld [vmem:[#allocation10 + $0x6c8] sm:$0xff]
    %v972 = vld [vmem:[#allocation10 + $0x6d0] sm:$0xff]
    %v973 = vld [vmem:[#allocation10 + $0x6d8] sm:$0xff]
    %v974 = vld [vmem:[#allocation10 + $0x6e0] sm:$0xf]
    %v975 = vld [vmem:[#allocation10 + $0x6e4] sm:$0xff]
    %v976 = vld [vmem:[#allocation10 + $0x6ec] sm:$0xff]
    %v977 = vld [vmem:[#allocation10 + $0x6f4] sm:$0xff]
    %v978 = vld [vmem:[#allocation10 + $0x6fc] sm:$0xf]
    %v979 = vld [vmem:[#allocation10 + $0x700] sm:$0xff]
    %v980 = vld [vmem:[#allocation10 + $0x708] sm:$0xff]
    %v981 = vld [vmem:[#allocation10 + $0x710] sm:$0xff]
    %v982 = vld [vmem:[#allocation10 + $0x718] sm:$0xf]
    %v983 = vld [vmem:[#allocation10 + $0x71c] sm:$0xff]
    %v984 = vld [vmem:[#allocation10 + $0x724] sm:$0xff]
    %v985 = vld [vmem:[#allocation10 + $0x72c] sm:$0xff]
    %v986 = vld [vmem:[#allocation10 + $0x734] sm:$0xf]
    %v987 = vld [vmem:[#allocation10 + $0x738] sm:$0xff]
    %v988 = vld [vmem:[#allocation10 + $0x740] sm:$0xff]
    %v989 = vld [vmem:[#allocation10 + $0x748] sm:$0xff]
    %v990 = vld [vmem:[#allocation10 + $0x750] sm:$0xf]
    %v991 = vld [vmem:[#allocation10 + $0x754] sm:$0xff]
    %v992 = vld [vmem:[#allocation10 + $0x75c] sm:$0xff]
    %v993 = vld [vmem:[#allocation10 + $0x764] sm:$0xff]
    %v994 = vld [vmem:[#allocation10 + $0x76c] sm:$0xf]
    %v995 = vld [vmem:[#allocation10 + $0x770] sm:$0xff]
    %v996 = vld [vmem:[#allocation10 + $0x778] sm:$0xff]
    %v997 = vld [vmem:[#allocation10 + $0x780] sm:$0xff]
    %v998 = vld [vmem:[#allocation10 + $0x788] sm:$0xf]
    %v999 = vld [vmem:[#allocation10 + $0x78c] sm:$0xff]
    %v1000 = vld [vmem:[#allocation10 + $0x794] sm:$0xff]
    %v1001 = vld [vmem:[#allocation10 + $0x79c] sm:$0xff]
    %v1002 = vld [vmem:[#allocation10 + $0x7a4] sm:$0xf]
    %v1003 = vld [vmem:[#allocation10 + $0x7a8] sm:$0xff]
    %v1004 = vld [vmem:[#allocation10 + $0x7b0] sm:$0xff]
    %v1005 = vld [vmem:[#allocation10 + $0x7b8] sm:$0xff]
    %v1006 = vld [vmem:[#allocation10 + $0x7c0] sm:$0xf]
    %v1007 = vld [vmem:[#allocation10 + $0x7c4] sm:$0xff]
    %v1008 = vld [vmem:[#allocation10 + $0x7cc] sm:$0xff]
    %v1009 = vld [vmem:[#allocation10 + $0x7d4] sm:$0xff]
    %v1010 = vld [vmem:[#allocation10 + $0x7dc] sm:$0xf]
    %v1011 = vld [vmem:[#allocation10 + $0x7e0] sm:$0xff]
    %v1012 = vld [vmem:[#allocation10 + $0x7e8] sm:$0xff]
    %v1013 = vld [vmem:[#allocation10 + $0x7f0] sm:$0xff]
    %v1014 = vld [vmem:[#allocation10 + $0x7f8] sm:$0xf]
    %v1015 = vld [vmem:[#allocation10 + $0x7fc] sm:$0xff]
    %v1016 = vld [vmem:[#allocation10 + $0x804] sm:$0xff]
    %v1017 = vld [vmem:[#allocation10 + $0x80c] sm:$0xff]
    %v1018 = vld [vmem:[#allocation10 + $0x814] sm:$0xf]
    %v1019 = vld [vmem:[#allocation10 + $0x818] sm:$0xff]
    %v1020 = vld [vmem:[#allocation10 + $0x820] sm:$0xff]
    %v1021 = vld [vmem:[#allocation10 + $0x828] sm:$0xff]
    %v1022 = vld [vmem:[#allocation10 + $0x830] sm:$0xf]
    %v1023 = vld [vmem:[#allocation10 + $0x834] sm:$0xff]
    %v1024 = vld [vmem:[#allocation10 + $0x83c] sm:$0xff]
    %v1025 = vld [vmem:[#allocation10 + $0x844] sm:$0xff]
    %v1026 = vld [vmem:[#allocation10 + $0x84c] sm:$0xf]
    %v1027 = vld [vmem:[#allocation10 + $0x850] sm:$0xff]
    %v1028 = vld [vmem:[#allocation10 + $0x858] sm:$0xff]
    %v1029 = vld [vmem:[#allocation10 + $0x860] sm:$0xff]
    %v1030 = vld [vmem:[#allocation10 + $0x868] sm:$0xf]
    %v1031 = vld [vmem:[#allocation10 + $0x86c] sm:$0xff]
    %v1032 = vld [vmem:[#allocation10 + $0x874] sm:$0xff]
    %v1033 = vld [vmem:[#allocation10 + $0x87c] sm:$0xff]
    %v1034 = vld [vmem:[#allocation10 + $0x884] sm:$0xf]
    %v1035 = vld [vmem:[#allocation10 + $0x888] sm:$0xff]
    %v1036 = vld [vmem:[#allocation10 + $0x890] sm:$0xff]
    %v1037 = vld [vmem:[#allocation10 + $0x898] sm:$0xff]
    %v1038 = vld [vmem:[#allocation10 + $0x8a0] sm:$0xf]
    %v1039 = vld [vmem:[#allocation10 + $0x8a4] sm:$0xff]
    %v1040 = vld [vmem:[#allocation10 + $0x8ac] sm:$0xff]
    %v1041 = vld [vmem:[#allocation10 + $0x8b4] sm:$0xff]
    %v1042 = vld [vmem:[#allocation10 + $0x8bc] sm:$0xf]
    %v1043 = vld [vmem:[#allocation10 + $0x8c0] sm:$0xff]
    %v1044 = vld [vmem:[#allocation10 + $0x8c8] sm:$0xff]
    %v1045 = vld [vmem:[#allocation10 + $0x8d0] sm:$0xff]
    %v1046 = vld [vmem:[#allocation10 + $0x8d8] sm:$0xf]
    %v1047 = vld [vmem:[#allocation10 + $0x8dc] sm:$0xff]
    %v1048 = vld [vmem:[#allocation10 + $0x8e4] sm:$0xff]
    %v1049 = vld [vmem:[#allocation10 + $0x8ec] sm:$0xff]
    %v1050 = vld [vmem:[#allocation10 + $0x8f4] sm:$0xf]
    %v1051 = vld [vmem:[#allocation10 + $0x8f8] sm:$0xff]
    %v1052 = vld [vmem:[#allocation10 + $0x900] sm:$0xff]
    %v1053 = vld [vmem:[#allocation10 + $0x908] sm:$0xff]
    %v1054 = vld [vmem:[#allocation10 + $0x910] sm:$0xf]
    %v1055 = vld [vmem:[#allocation10 + $0x914] sm:$0xff]
    %v1056 = vld [vmem:[#allocation10 + $0x91c] sm:$0xff]
    %v1057 = vld [vmem:[#allocation10 + $0x924] sm:$0xff]
    %v1058 = vld [vmem:[#allocation10 + $0x92c] sm:$0xf]
    %v1059 = vld [vmem:[#allocation10 + $0x930] sm:$0xff]
    %v1060 = vld [vmem:[#allocation10 + $0x938] sm:$0xff]
    %v1061 = vld [vmem:[#allocation10 + $0x940] sm:$0xff]
    %v1062 = vld [vmem:[#allocation10 + $0x948] sm:$0xf]
    %v1063 = vld [vmem:[#allocation10 + $0x94c] sm:$0xff]
    %v1064 = vld [vmem:[#allocation10 + $0x954] sm:$0xff]
    %v1065 = vld [vmem:[#allocation10 + $0x95c] sm:$0xff]
    %v1066 = vld [vmem:[#allocation10 + $0x964] sm:$0xf]
    %v1067 = vld [vmem:[#allocation10 + $0x968] sm:$0xff]
    %v1068 = vld [vmem:[#allocation10 + $0x970] sm:$0xff]
    %v1069 = vld [vmem:[#allocation10 + $0x978] sm:$0xff]
    %v1070 = vld [vmem:[#allocation10 + $0x980] sm:$0xf]
    %v1071 = vld [vmem:[#allocation10 + $0x984] sm:$0xff]
    %v1072 = vld [vmem:[#allocation10 + $0x98c] sm:$0xff]
    %v1073 = vld [vmem:[#allocation10 + $0x994] sm:$0xff]
    %v1074 = vld [vmem:[#allocation10 + $0x99c] sm:$0xf]
    %v1075 = vld [vmem:[#allocation10 + $0x9a0] sm:$0xff]
    %v1076 = vld [vmem:[#allocation10 + $0x9a8] sm:$0xff]
    %v1077 = vld [vmem:[#allocation10 + $0x9b0] sm:$0xff]
    %v1078 = vld [vmem:[#allocation10 + $0x9b8] sm:$0xf]
    %v1079 = vld [vmem:[#allocation10 + $0x9bc] sm:$0xff]
    %v1080 = vld [vmem:[#allocation10 + $0x9c4] sm:$0xff]
    %v1081 = vld [vmem:[#allocation10 + $0x9cc] sm:$0xff]
    %v1082 = vld [vmem:[#allocation10 + $0x9d4] sm:$0xf]
    %v1083 = vld [vmem:[#allocation10 + $0x9d8] sm:$0xff]
    %v1084 = vld [vmem:[#allocation10 + $0x9e0] sm:$0xff]
    %v1085 = vld [vmem:[#allocation10 + $0x9e8] sm:$0xff]
    %v1086 = vld [vmem:[#allocation10 + $0x9f0] sm:$0xf]
    %v1087 = vld [vmem:[#allocation10 + $0x9f4] sm:$0xff]
    %v1088 = vld [vmem:[#allocation10 + $0x9fc] sm:$0xff]
    %v1089 = vld [vmem:[#allocation10 + $0xa04] sm:$0xff]
    %v1090 = vld [vmem:[#allocation10 + $0xa0c] sm:$0xf]
    %v1091 = vld [vmem:[#allocation10 + $0xa10] sm:$0xff]
    %v1092 = vld [vmem:[#allocation10 + $0xa18] sm:$0xff]
    %v1093 = vld [vmem:[#allocation10 + $0xa20] sm:$0xff]
    %v1094 = vld [vmem:[#allocation10 + $0xa28] sm:$0xf]
    %v1095 = vld [vmem:[#allocation10 + $0xa2c] sm:$0xff]
    %v1096 = vld [vmem:[#allocation10 + $0xa34] sm:$0xff]
    %v1097 = vld [vmem:[#allocation10 + $0xa3c] sm:$0xff]
    %v1098 = vld [vmem:[#allocation10 + $0xa44] sm:$0xf]
    %v1099 = vld [vmem:[#allocation10 + $0xa48] sm:$0xff]
    %v1100 = vld [vmem:[#allocation10 + $0xa50] sm:$0xff]
    %v1101 = vld [vmem:[#allocation10 + $0xa58] sm:$0xff]
    %v1102 = vld [vmem:[#allocation10 + $0xa60] sm:$0xf]
    %v1103 = vld [vmem:[#allocation10 + $0xa64] sm:$0xff]
    %v1104 = vld [vmem:[#allocation10 + $0xa6c] sm:$0xff]
    %v1105 = vld [vmem:[#allocation10 + $0xa74] sm:$0xff]
    %v1106 = vld [vmem:[#allocation10 + $0xa7c] sm:$0xf]
    %v1107 = vld [vmem:[#allocation10 + $0xa80] sm:$0xff]
    %v1108 = vld [vmem:[#allocation10 + $0xa88] sm:$0xff]
    %v1109 = vld [vmem:[#allocation10 + $0xa90] sm:$0xff]
    %v1110 = vld [vmem:[#allocation10 + $0xa98] sm:$0xf]
    %v1111 = vld [vmem:[#allocation10 + $0xa9c] sm:$0xff]
    %v1112 = vld [vmem:[#allocation10 + $0xaa4] sm:$0xff]
    %v1113 = vld [vmem:[#allocation10 + $0xaac] sm:$0xff]
    %v1114 = vld [vmem:[#allocation10 + $0xab4] sm:$0xf]
    %v1115 = vld [vmem:[#allocation10 + $0xab8] sm:$0xff]
    %v1116 = vld [vmem:[#allocation10 + $0xac0] sm:$0xff]
    %v1117 = vld [vmem:[#allocation10 + $0xac8] sm:$0xff]
    %v1118 = vld [vmem:[#allocation10 + $0xad0] sm:$0xf]
    %v1119 = vld [vmem:[#allocation10 + $0xad4] sm:$0xff]
    %v1120 = vld [vmem:[#allocation10 + $0xadc] sm:$0xff]
    %v1121 = vld [vmem:[#allocation10 + $0xae4] sm:$0xff]
    %v1122 = vld [vmem:[#allocation10 + $0xaec] sm:$0xf]
    %v1523 = vunpack.c.l.b16 %v723
    %v1524 = vunpack.c.h.b16 %v723
    %v1525 = vunpack.c.l.b16 %v724
    %v1526 = vunpack.c.h.b16 %v724
    %v1527 = vunpack.c.l.b16 %v725
    %v1528 = vunpack.c.h.b16 %v725
    %v1529 = vunpack.c.l.b16 %v726
    %v1530 = vunpack.c.l.b16 %v727
    %v1531 = vunpack.c.h.b16 %v727
    %v1532 = vunpack.c.l.b16 %v728
    %v1533 = vunpack.c.h.b16 %v728
    %v1534 = vunpack.c.l.b16 %v729
    %v1535 = vunpack.c.h.b16 %v729
    %v1536 = vunpack.c.l.b16 %v730
    %v1537 = vunpack.c.l.b16 %v731
    %v1538 = vunpack.c.h.b16 %v731
    %v1539 = vunpack.c.l.b16 %v732
    %v1540 = vunpack.c.h.b16 %v732
    %v1541 = vunpack.c.l.b16 %v733
    %v1542 = vunpack.c.h.b16 %v733
    %v1543 = vunpack.c.l.b16 %v734
    %v1544 = vunpack.c.l.b16 %v735
    %v1545 = vunpack.c.h.b16 %v735
    %v1546 = vunpack.c.l.b16 %v736
    %v1547 = vunpack.c.h.b16 %v736
    %v1548 = vunpack.c.l.b16 %v737
    %v1549 = vunpack.c.h.b16 %v737
    %v1550 = vunpack.c.l.b16 %v738
    %v1551 = vunpack.c.l.b16 %v739
    %v1552 = vunpack.c.h.b16 %v739
    %v1553 = vunpack.c.l.b16 %v740
    %v1554 = vunpack.c.h.b16 %v740
    %v1555 = vunpack.c.l.b16 %v741
    %v1556 = vunpack.c.h.b16 %v741
    %v1557 = vunpack.c.l.b16 %v742
    %v1558 = vunpack.c.l.b16 %v743
    %v1559 = vunpack.c.h.b16 %v743
    %v1560 = vunpack.c.l.b16 %v744
    %v1561 = vunpack.c.h.b16 %v744
    %v1562 = vunpack.c.l.b16 %v745
    %v1563 = vunpack.c.h.b16 %v745
    %v1564 = vunpack.c.l.b16 %v746
    %v1565 = vunpack.c.l.b16 %v747
    %v1566 = vunpack.c.h.b16 %v747
    %v1567 = vunpack.c.l.b16 %v748
    %v1568 = vunpack.c.h.b16 %v748
    %v1569 = vunpack.c.l.b16 %v749
    %v1570 = vunpack.c.h.b16 %v749
    %v1571 = vunpack.c.l.b16 %v750
    %v1572 = vunpack.c.l.b16 %v751
    %v1573 = vunpack.c.h.b16 %v751
    %v1574 = vunpack.c.l.b16 %v752
    %v1575 = vunpack.c.h.b16 %v752
    %v1576 = vunpack.c.l.b16 %v753
    %v1577 = vunpack.c.h.b16 %v753
    %v1578 = vunpack.c.l.b16 %v754
    %v1579 = vunpack.c.l.b16 %v755
    %v1580 = vunpack.c.h.b16 %v755
    %v1581 = vunpack.c.l.b16 %v756
    %v1582 = vunpack.c.h.b16 %v756
    %v1583 = vunpack.c.l.b16 %v757
    %v1584 = vunpack.c.h.b16 %v757
    %v1585 = vunpack.c.l.b16 %v758
    %v1586 = vunpack.c.l.b16 %v759
    %v1587 = vunpack.c.h.b16 %v759
    %v1588 = vunpack.c.l.b16 %v760
    %v1589 = vunpack.c.h.b16 %v760
    %v1590 = vunpack.c.l.b16 %v761
    %v1591 = vunpack.c.h.b16 %v761
    %v1592 = vunpack.c.l.b16 %v762
    %v1593 = vunpack.c.l.b16 %v763
    %v1594 = vunpack.c.h.b16 %v763
    %v1595 = vunpack.c.l.b16 %v764
    %v1596 = vunpack.c.h.b16 %v764
    %v1597 = vunpack.c.l.b16 %v765
    %v1598 = vunpack.c.h.b16 %v765
    %v1599 = vunpack.c.l.b16 %v766
    %v1600 = vunpack.c.l.b16 %v767
    %v1601 = vunpack.c.h.b16 %v767
    %v1602 = vunpack.c.l.b16 %v768
    %v1603 = vunpack.c.h.b16 %v768
    %v1604 = vunpack.c.l.b16 %v769
    %v1605 = vunpack.c.h.b16 %v769
    %v1606 = vunpack.c.l.b16 %v770
    %v1607 = vunpack.c.l.b16 %v771
    %v1608 = vunpack.c.h.b16 %v771
    %v1609 = vunpack.c.l.b16 %v772
    %v1610 = vunpack.c.h.b16 %v772
    %v1611 = vunpack.c.l.b16 %v773
    %v1612 = vunpack.c.h.b16 %v773
    %v1613 = vunpack.c.l.b16 %v774
    %v1614 = vunpack.c.l.b16 %v775
    %v1615 = vunpack.c.h.b16 %v775
    %v1616 = vunpack.c.l.b16 %v776
    %v1617 = vunpack.c.h.b16 %v776
    %v1618 = vunpack.c.l.b16 %v777
    %v1619 = vunpack.c.h.b16 %v777
    %v1620 = vunpack.c.l.b16 %v778
    %v1621 = vunpack.c.l.b16 %v779
    %v1622 = vunpack.c.h.b16 %v779
    %v1623 = vunpack.c.l.b16 %v780
    %v1624 = vunpack.c.h.b16 %v780
    %v1625 = vunpack.c.l.b16 %v781
    %v1626 = vunpack.c.h.b16 %v781
    %v1627 = vunpack.c.l.b16 %v782
    %v1628 = vunpack.c.l.b16 %v783
    %v1629 = vunpack.c.h.b16 %v783
    %v1630 = vunpack.c.l.b16 %v784
    %v1631 = vunpack.c.h.b16 %v784
    %v1632 = vunpack.c.l.b16 %v785
    %v1633 = vunpack.c.h.b16 %v785
    %v1634 = vunpack.c.l.b16 %v786
    %v1635 = vunpack.c.l.b16 %v787
    %v1636 = vunpack.c.h.b16 %v787
    %v1637 = vunpack.c.l.b16 %v788
    %v1638 = vunpack.c.h.b16 %v788
    %v1639 = vunpack.c.l.b16 %v789
    %v1640 = vunpack.c.h.b16 %v789
    %v1641 = vunpack.c.l.b16 %v790
    %v1642 = vunpack.c.l.b16 %v791
    %v1643 = vunpack.c.h.b16 %v791
    %v1644 = vunpack.c.l.b16 %v792
    %v1645 = vunpack.c.h.b16 %v792
    %v1646 = vunpack.c.l.b16 %v793
    %v1647 = vunpack.c.h.b16 %v793
    %v1648 = vunpack.c.l.b16 %v794
    %v1649 = vunpack.c.l.b16 %v795
    %v1650 = vunpack.c.h.b16 %v795
    %v1651 = vunpack.c.l.b16 %v796
    %v1652 = vunpack.c.h.b16 %v796
    %v1653 = vunpack.c.l.b16 %v797
    %v1654 = vunpack.c.h.b16 %v797
    %v1655 = vunpack.c.l.b16 %v798
    %v1656 = vunpack.c.l.b16 %v799
    %v1657 = vunpack.c.h.b16 %v799
    %v1658 = vunpack.c.l.b16 %v800
    %v1659 = vunpack.c.h.b16 %v800
    %v1660 = vunpack.c.l.b16 %v801
    %v1661 = vunpack.c.h.b16 %v801
    %v1662 = vunpack.c.l.b16 %v802
    %v1663 = vunpack.c.l.b16 %v803
    %v1664 = vunpack.c.h.b16 %v803
    %v1665 = vunpack.c.l.b16 %v804
    %v1666 = vunpack.c.h.b16 %v804
    %v1667 = vunpack.c.l.b16 %v805
    %v1668 = vunpack.c.h.b16 %v805
    %v1669 = vunpack.c.l.b16 %v806
    %v1670 = vunpack.c.l.b16 %v807
    %v1671 = vunpack.c.h.b16 %v807
    %v1672 = vunpack.c.l.b16 %v808
    %v1673 = vunpack.c.h.b16 %v808
    %v1674 = vunpack.c.l.b16 %v809
    %v1675 = vunpack.c.h.b16 %v809
    %v1676 = vunpack.c.l.b16 %v810
    %v1677 = vunpack.c.l.b16 %v811
    %v1678 = vunpack.c.h.b16 %v811
    %v1679 = vunpack.c.l.b16 %v812
    %v1680 = vunpack.c.h.b16 %v812
    %v1681 = vunpack.c.l.b16 %v813
    %v1682 = vunpack.c.h.b16 %v813
    %v1683 = vunpack.c.l.b16 %v814
    %v1684 = vunpack.c.l.b16 %v815
    %v1685 = vunpack.c.h.b16 %v815
    %v1686 = vunpack.c.l.b16 %v816
    %v1687 = vunpack.c.h.b16 %v816
    %v1688 = vunpack.c.l.b16 %v817
    %v1689 = vunpack.c.h.b16 %v817
    %v1690 = vunpack.c.l.b16 %v818
    %v1691 = vunpack.c.l.b16 %v819
    %v1692 = vunpack.c.h.b16 %v819
    %v1693 = vunpack.c.l.b16 %v820
    %v1694 = vunpack.c.h.b16 %v820
    %v1695 = vunpack.c.l.b16 %v821
    %v1696 = vunpack.c.h.b16 %v821
    %v1697 = vunpack.c.l.b16 %v822
    %v1698 = vunpack.c.l.b16 %v823
    %v1699 = vunpack.c.h.b16 %v823
    %v1700 = vunpack.c.l.b16 %v824
    %v1701 = vunpack.c.h.b16 %v824
    %v1702 = vunpack.c.l.b16 %v825
    %v1703 = vunpack.c.h.b16 %v825
    %v1704 = vunpack.c.l.b16 %v826
    %v1705 = vunpack.c.l.b16 %v827
    %v1706 = vunpack.c.h.b16 %v827
    %v1707 = vunpack.c.l.b16 %v828
    %v1708 = vunpack.c.h.b16 %v828
    %v1709 = vunpack.c.l.b16 %v829
    %v1710 = vunpack.c.h.b16 %v829
    %v1711 = vunpack.c.l.b16 %v830
    %v1712 = vunpack.c.l.b16 %v831
    %v1713 = vunpack.c.h.b16 %v831
    %v1714 = vunpack.c.l.b16 %v832
    %v1715 = vunpack.c.h.b16 %v832
    %v1716 = vunpack.c.l.b16 %v833
    %v1717 = vunpack.c.h.b16 %v833
    %v1718 = vunpack.c.l.b16 %v834
    %v1719 = vunpack.c.l.b16 %v835
    %v1720 = vunpack.c.h.b16 %v835
    %v1721 = vunpack.c.l.b16 %v836
    %v1722 = vunpack.c.h.b16 %v836
    %v1723 = vunpack.c.l.b16 %v837
    %v1724 = vunpack.c.h.b16 %v837
    %v1725 = vunpack.c.l.b16 %v838
    %v1726 = vunpack.c.l.b16 %v839
    %v1727 = vunpack.c.h.b16 %v839
    %v1728 = vunpack.c.l.b16 %v840
    %v1729 = vunpack.c.h.b16 %v840
    %v1730 = vunpack.c.l.b16 %v841
    %v1731 = vunpack.c.h.b16 %v841
    %v1732 = vunpack.c.l.b16 %v842
    %v1733 = vunpack.c.l.b16 %v843
    %v1734 = vunpack.c.h.b16 %v843
    %v1735 = vunpack.c.l.b16 %v844
    %v1736 = vunpack.c.h.b16 %v844
    %v1737 = vunpack.c.l.b16 %v845
    %v1738 = vunpack.c.h.b16 %v845
    %v1739 = vunpack.c.l.b16 %v846
    %v1740 = vunpack.c.l.b16 %v847
    %v1741 = vunpack.c.h.b16 %v847
    %v1742 = vunpack.c.l.b16 %v848
    %v1743 = vunpack.c.h.b16 %v848
    %v1744 = vunpack.c.l.b16 %v849
    %v1745 = vunpack.c.h.b16 %v849
    %v1746 = vunpack.c.l.b16 %v850
    %v1747 = vunpack.c.l.b16 %v851
    %v1748 = vunpack.c.h.b16 %v851
    %v1749 = vunpack.c.l.b16 %v852
    %v1750 = vunpack.c.h.b16 %v852
    %v1751 = vunpack.c.l.b16 %v853
    %v1752 = vunpack.c.h.b16 %v853
    %v1753 = vunpack.c.l.b16 %v854
    %v1754 = vunpack.c.l.b16 %v855
    %v1755 = vunpack.c.h.b16 %v855
    %v1756 = vunpack.c.l.b16 %v856
    %v1757 = vunpack.c.h.b16 %v856
    %v1758 = vunpack.c.l.b16 %v857
    %v1759 = vunpack.c.h.b16 %v857
    %v1760 = vunpack.c.l.b16 %v858
    %v1761 = vunpack.c.l.b16 %v859
    %v1762 = vunpack.c.h.b16 %v859
    %v1763 = vunpack.c.l.b16 %v860
    %v1764 = vunpack.c.h.b16 %v860
    %v1765 = vunpack.c.l.b16 %v861
    %v1766 = vunpack.c.h.b16 %v861
    %v1767 = vunpack.c.l.b16 %v862
    %v1768 = vunpack.c.l.b16 %v863
    %v1769 = vunpack.c.h.b16 %v863
    %v1770 = vunpack.c.l.b16 %v864
    %v1771 = vunpack.c.h.b16 %v864
    %v1772 = vunpack.c.l.b16 %v865
    %v1773 = vunpack.c.h.b16 %v865
    %v1774 = vunpack.c.l.b16 %v866
    %v1775 = vunpack.c.l.b16 %v867
    %v1776 = vunpack.c.h.b16 %v867
    %v1777 = vunpack.c.l.b16 %v868
    %v1778 = vunpack.c.h.b16 %v868
    %v1779 = vunpack.c.l.b16 %v869
    %v1780 = vunpack.c.h.b16 %v869
    %v1781 = vunpack.c.l.b16 %v870
    %v1782 = vunpack.c.l.b16 %v871
    %v1783 = vunpack.c.h.b16 %v871
    %v1784 = vunpack.c.l.b16 %v872
    %v1785 = vunpack.c.h.b16 %v872
    %v1786 = vunpack.c.l.b16 %v873
    %v1787 = vunpack.c.h.b16 %v873
    %v1788 = vunpack.c.l.b16 %v874
    %v1789 = vunpack.c.l.b16 %v875
    %v1790 = vunpack.c.h.b16 %v875
    %v1791 = vunpack.c.l.b16 %v876
    %v1792 = vunpack.c.h.b16 %v876
    %v1793 = vunpack.c.l.b16 %v877
    %v1794 = vunpack.c.h.b16 %v877
    %v1795 = vunpack.c.l.b16 %v878
    %v1796 = vunpack.c.l.b16 %v879
    %v1797 = vunpack.c.h.b16 %v879
    %v1798 = vunpack.c.l.b16 %v880
    %v1799 = vunpack.c.h.b16 %v880
    %v1800 = vunpack.c.l.b16 %v881
    %v1801 = vunpack.c.h.b16 %v881
    %v1802 = vunpack.c.l.b16 %v882
    %v1803 = vunpack.c.l.b16 %v883
    %v1804 = vunpack.c.h.b16 %v883
    %v1805 = vunpack.c.l.b16 %v884
    %v1806 = vunpack.c.h.b16 %v884
    %v1807 = vunpack.c.l.b16 %v885
    %v1808 = vunpack.c.h.b16 %v885
    %v1809 = vunpack.c.l.b16 %v886
    %v1810 = vunpack.c.l.b16 %v887
    %v1811 = vunpack.c.h.b16 %v887
    %v1812 = vunpack.c.l.b16 %v888
    %v1813 = vunpack.c.h.b16 %v888
    %v1814 = vunpack.c.l.b16 %v889
    %v1815 = vunpack.c.h.b16 %v889
    %v1816 = vunpack.c.l.b16 %v890
    %v1817 = vunpack.c.l.b16 %v891
    %v1818 = vunpack.c.h.b16 %v891
    %v1819 = vunpack.c.l.b16 %v892
    %v1820 = vunpack.c.h.b16 %v892
    %v1821 = vunpack.c.l.b16 %v893
    %v1822 = vunpack.c.h.b16 %v893
    %v1823 = vunpack.c.l.b16 %v894
    %v1824 = vunpack.c.l.b16 %v895
    %v1825 = vunpack.c.h.b16 %v895
    %v1826 = vunpack.c.l.b16 %v896
    %v1827 = vunpack.c.h.b16 %v896
    %v1828 = vunpack.c.l.b16 %v897
    %v1829 = vunpack.c.h.b16 %v897
    %v1830 = vunpack.c.l.b16 %v898
    %v1831 = vunpack.c.l.b16 %v899
    %v1832 = vunpack.c.h.b16 %v899
    %v1833 = vunpack.c.l.b16 %v900
    %v1834 = vunpack.c.h.b16 %v900
    %v1835 = vunpack.c.l.b16 %v901
    %v1836 = vunpack.c.h.b16 %v901
    %v1837 = vunpack.c.l.b16 %v902
    %v1838 = vunpack.c.l.b16 %v903
    %v1839 = vunpack.c.h.b16 %v903
    %v1840 = vunpack.c.l.b16 %v904
    %v1841 = vunpack.c.h.b16 %v904
    %v1842 = vunpack.c.l.b16 %v905
    %v1843 = vunpack.c.h.b16 %v905
    %v1844 = vunpack.c.l.b16 %v906
    %v1845 = vunpack.c.l.b16 %v907
    %v1846 = vunpack.c.h.b16 %v907
    %v1847 = vunpack.c.l.b16 %v908
    %v1848 = vunpack.c.h.b16 %v908
    %v1849 = vunpack.c.l.b16 %v909
    %v1850 = vunpack.c.h.b16 %v909
    %v1851 = vunpack.c.l.b16 %v910
    %v1852 = vunpack.c.l.b16 %v911
    %v1853 = vunpack.c.h.b16 %v911
    %v1854 = vunpack.c.l.b16 %v912
    %v1855 = vunpack.c.h.b16 %v912
    %v1856 = vunpack.c.l.b16 %v913
    %v1857 = vunpack.c.h.b16 %v913
    %v1858 = vunpack.c.l.b16 %v914
    %v1859 = vunpack.c.l.b16 %v915
    %v1860 = vunpack.c.h.b16 %v915
    %v1861 = vunpack.c.l.b16 %v916
    %v1862 = vunpack.c.h.b16 %v916
    %v1863 = vunpack.c.l.b16 %v917
    %v1864 = vunpack.c.h.b16 %v917
    %v1865 = vunpack.c.l.b16 %v918
    %v1866 = vunpack.c.l.b16 %v919
    %v1867 = vunpack.c.h.b16 %v919
    %v1868 = vunpack.c.l.b16 %v920
    %v1869 = vunpack.c.h.b16 %v920
    %v1870 = vunpack.c.l.b16 %v921
    %v1871 = vunpack.c.h.b16 %v921
    %v1872 = vunpack.c.l.b16 %v922
    %v1873 = vunpack.c.l.b16 %v923
    %v1874 = vunpack.c.h.b16 %v923
    %v1875 = vunpack.c.l.b16 %v924
    %v1876 = vunpack.c.h.b16 %v924
    %v1877 = vunpack.c.l.b16 %v925
    %v1878 = vunpack.c.h.b16 %v925
    %v1879 = vunpack.c.l.b16 %v926
    %v1880 = vunpack.c.l.b16 %v927
    %v1881 = vunpack.c.h.b16 %v927
    %v1882 = vunpack.c.l.b16 %v928
    %v1883 = vunpack.c.h.b16 %v928
    %v1884 = vunpack.c.l.b16 %v929
    %v1885 = vunpack.c.h.b16 %v929
    %v1886 = vunpack.c.l.b16 %v930
    %v1887 = vunpack.c.l.b16 %v931
    %v1888 = vunpack.c.h.b16 %v931
    %v1889 = vunpack.c.l.b16 %v932
    %v1890 = vunpack.c.h.b16 %v932
    %v1891 = vunpack.c.l.b16 %v933
    %v1892 = vunpack.c.h.b16 %v933
    %v1893 = vunpack.c.l.b16 %v934
    %v1894 = vunpack.c.l.b16 %v935
    %v1895 = vunpack.c.h.b16 %v935
    %v1896 = vunpack.c.l.b16 %v936
    %v1897 = vunpack.c.h.b16 %v936
    %v1898 = vunpack.c.l.b16 %v937
    %v1899 = vunpack.c.h.b16 %v937
    %v1900 = vunpack.c.l.b16 %v938
    %v1901 = vunpack.c.l.b16 %v939
    %v1902 = vunpack.c.h.b16 %v939
    %v1903 = vunpack.c.l.b16 %v940
    %v1904 = vunpack.c.h.b16 %v940
    %v1905 = vunpack.c.l.b16 %v941
    %v1906 = vunpack.c.h.b16 %v941
    %v1907 = vunpack.c.l.b16 %v942
    %v1908 = vunpack.c.l.b16 %v943
    %v1909 = vunpack.c.h.b16 %v943
    %v1910 = vunpack.c.l.b16 %v944
    %v1911 = vunpack.c.h.b16 %v944
    %v1912 = vunpack.c.l.b16 %v945
    %v1913 = vunpack.c.h.b16 %v945
    %v1914 = vunpack.c.l.b16 %v946
    %v1915 = vunpack.c.l.b16 %v947
    %v1916 = vunpack.c.h.b16 %v947
    %v1917 = vunpack.c.l.b16 %v948
    %v1918 = vunpack.c.h.b16 %v948
    %v1919 = vunpack.c.l.b16 %v949
    %v1920 = vunpack.c.h.b16 %v949
    %v1921 = vunpack.c.l.b16 %v950
    %v1922 = vunpack.c.l.b16 %v951
    %v1923 = vunpack.c.h.b16 %v951
    %v1924 = vunpack.c.l.b16 %v952
    %v1925 = vunpack.c.h.b16 %v952
    %v1926 = vunpack.c.l.b16 %v953
    %v1927 = vunpack.c.h.b16 %v953
    %v1928 = vunpack.c.l.b16 %v954
    %v1929 = vunpack.c.l.b16 %v955
    %v1930 = vunpack.c.h.b16 %v955
    %v1931 = vunpack.c.l.b16 %v956
    %v1932 = vunpack.c.h.b16 %v956
    %v1933 = vunpack.c.l.b16 %v957
    %v1934 = vunpack.c.h.b16 %v957
    %v1935 = vunpack.c.l.b16 %v958
    %v1936 = vunpack.c.l.b16 %v959
    %v1937 = vunpack.c.h.b16 %v959
    %v1938 = vunpack.c.l.b16 %v960
    %v1939 = vunpack.c.h.b16 %v960
    %v1940 = vunpack.c.l.b16 %v961
    %v1941 = vunpack.c.h.b16 %v961
    %v1942 = vunpack.c.l.b16 %v962
    %v1943 = vunpack.c.l.b16 %v963
    %v1944 = vunpack.c.h.b16 %v963
    %v1945 = vunpack.c.l.b16 %v964
    %v1946 = vunpack.c.h.b16 %v964
    %v1947 = vunpack.c.l.b16 %v965
    %v1948 = vunpack.c.h.b16 %v965
    %v1949 = vunpack.c.l.b16 %v966
    %v1950 = vunpack.c.l.b16 %v967
    %v1951 = vunpack.c.h.b16 %v967
    %v1952 = vunpack.c.l.b16 %v968
    %v1953 = vunpack.c.h.b16 %v968
    %v1954 = vunpack.c.l.b16 %v969
    %v1955 = vunpack.c.h.b16 %v969
    %v1956 = vunpack.c.l.b16 %v970
    %v1957 = vunpack.c.l.b16 %v971
    %v1958 = vunpack.c.h.b16 %v971
    %v1959 = vunpack.c.l.b16 %v972
    %v1960 = vunpack.c.h.b16 %v972
    %v1961 = vunpack.c.l.b16 %v973
    %v1962 = vunpack.c.h.b16 %v973
    %v1963 = vunpack.c.l.b16 %v974
    %v1964 = vunpack.c.l.b16 %v975
    %v1965 = vunpack.c.h.b16 %v975
    %v1966 = vunpack.c.l.b16 %v976
    %v1967 = vunpack.c.h.b16 %v976
    %v1968 = vunpack.c.l.b16 %v977
    %v1969 = vunpack.c.h.b16 %v977
    %v1970 = vunpack.c.l.b16 %v978
    %v1971 = vunpack.c.l.b16 %v979
    %v1972 = vunpack.c.h.b16 %v979
    %v1973 = vunpack.c.l.b16 %v980
    %v1974 = vunpack.c.h.b16 %v980
    %v1975 = vunpack.c.l.b16 %v981
    %v1976 = vunpack.c.h.b16 %v981
    %v1977 = vunpack.c.l.b16 %v982
    %v1978 = vunpack.c.l.b16 %v983
    %v1979 = vunpack.c.h.b16 %v983
    %v1980 = vunpack.c.l.b16 %v984
    %v1981 = vunpack.c.h.b16 %v984
    %v1982 = vunpack.c.l.b16 %v985
    %v1983 = vunpack.c.h.b16 %v985
    %v1984 = vunpack.c.l.b16 %v986
    %v1985 = vunpack.c.l.b16 %v987
    %v1986 = vunpack.c.h.b16 %v987
    %v1987 = vunpack.c.l.b16 %v988
    %v1988 = vunpack.c.h.b16 %v988
    %v1989 = vunpack.c.l.b16 %v989
    %v1990 = vunpack.c.h.b16 %v989
    %v1991 = vunpack.c.l.b16 %v990
    %v1992 = vunpack.c.l.b16 %v991
    %v1993 = vunpack.c.h.b16 %v991
    %v1994 = vunpack.c.l.b16 %v992
    %v1995 = vunpack.c.h.b16 %v992
    %v1996 = vunpack.c.l.b16 %v993
    %v1997 = vunpack.c.h.b16 %v993
    %v1998 = vunpack.c.l.b16 %v994
    %v1999 = vunpack.c.l.b16 %v995
    %v2000 = vunpack.c.h.b16 %v995
    %v2001 = vunpack.c.l.b16 %v996
    %v2002 = vunpack.c.h.b16 %v996
    %v2003 = vunpack.c.l.b16 %v997
    %v2004 = vunpack.c.h.b16 %v997
    %v2005 = vunpack.c.l.b16 %v998
    %v2006 = vunpack.c.l.b16 %v999
    %v2007 = vunpack.c.h.b16 %v999
    %v2008 = vunpack.c.l.b16 %v1000
    %v2009 = vunpack.c.h.b16 %v1000
    %v2010 = vunpack.c.l.b16 %v1001
    %v2011 = vunpack.c.h.b16 %v1001
    %v2012 = vunpack.c.l.b16 %v1002
    %v2013 = vunpack.c.l.b16 %v1003
    %v2014 = vunpack.c.h.b16 %v1003
    %v2015 = vunpack.c.l.b16 %v1004
    %v2016 = vunpack.c.h.b16 %v1004
    %v2017 = vunpack.c.l.b16 %v1005
    %v2018 = vunpack.c.h.b16 %v1005
    %v2019 = vunpack.c.l.b16 %v1006
    %v2020 = vunpack.c.l.b16 %v1007
    %v2021 = vunpack.c.h.b16 %v1007
    %v2022 = vunpack.c.l.b16 %v1008
    %v2023 = vunpack.c.h.b16 %v1008
    %v2024 = vunpack.c.l.b16 %v1009
    %v2025 = vunpack.c.h.b16 %v1009
    %v2026 = vunpack.c.l.b16 %v1010
    %v2027 = vunpack.c.l.b16 %v1011
    %v2028 = vunpack.c.h.b16 %v1011
    %v2029 = vunpack.c.l.b16 %v1012
    %v2030 = vunpack.c.h.b16 %v1012
    %v2031 = vunpack.c.l.b16 %v1013
    %v2032 = vunpack.c.h.b16 %v1013
    %v2033 = vunpack.c.l.b16 %v1014
    %v2034 = vunpack.c.l.b16 %v1015
    %v2035 = vunpack.c.h.b16 %v1015
    %v2036 = vunpack.c.l.b16 %v1016
    %v2037 = vunpack.c.h.b16 %v1016
    %v2038 = vunpack.c.l.b16 %v1017
    %v2039 = vunpack.c.h.b16 %v1017
    %v2040 = vunpack.c.l.b16 %v1018
    %v2041 = vunpack.c.l.b16 %v1019
    %v2042 = vunpack.c.h.b16 %v1019
    %v2043 = vunpack.c.l.b16 %v1020
    %v2044 = vunpack.c.h.b16 %v1020
    %v2045 = vunpack.c.l.b16 %v1021
    %v2046 = vunpack.c.h.b16 %v1021
    %v2047 = vunpack.c.l.b16 %v1022
    %v2048 = vunpack.c.l.b16 %v1023
    %v2049 = vunpack.c.h.b16 %v1023
    %v2050 = vunpack.c.l.b16 %v1024
    %v2051 = vunpack.c.h.b16 %v1024
    %v2052 = vunpack.c.l.b16 %v1025
    %v2053 = vunpack.c.h.b16 %v1025
    %v2054 = vunpack.c.l.b16 %v1026
    %v2055 = vunpack.c.l.b16 %v1027
    %v2056 = vunpack.c.h.b16 %v1027
    %v2057 = vunpack.c.l.b16 %v1028
    %v2058 = vunpack.c.h.b16 %v1028
    %v2059 = vunpack.c.l.b16 %v1029
    %v2060 = vunpack.c.h.b16 %v1029
    %v2061 = vunpack.c.l.b16 %v1030
    %v2062 = vunpack.c.l.b16 %v1031
    %v2063 = vunpack.c.h.b16 %v1031
    %v2064 = vunpack.c.l.b16 %v1032
    %v2065 = vunpack.c.h.b16 %v1032
    %v2066 = vunpack.c.l.b16 %v1033
    %v2067 = vunpack.c.h.b16 %v1033
    %v2068 = vunpack.c.l.b16 %v1034
    %v2069 = vunpack.c.l.b16 %v1035
    %v2070 = vunpack.c.h.b16 %v1035
    %v2071 = vunpack.c.l.b16 %v1036
    %v2072 = vunpack.c.h.b16 %v1036
    %v2073 = vunpack.c.l.b16 %v1037
    %v2074 = vunpack.c.h.b16 %v1037
    %v2075 = vunpack.c.l.b16 %v1038
    %v2076 = vunpack.c.l.b16 %v1039
    %v2077 = vunpack.c.h.b16 %v1039
    %v2078 = vunpack.c.l.b16 %v1040
    %v2079 = vunpack.c.h.b16 %v1040
    %v2080 = vunpack.c.l.b16 %v1041
    %v2081 = vunpack.c.h.b16 %v1041
    %v2082 = vunpack.c.l.b16 %v1042
    %v2083 = vunpack.c.l.b16 %v1043
    %v2084 = vunpack.c.h.b16 %v1043
    %v2085 = vunpack.c.l.b16 %v1044
    %v2086 = vunpack.c.h.b16 %v1044
    %v2087 = vunpack.c.l.b16 %v1045
    %v2088 = vunpack.c.h.b16 %v1045
    %v2089 = vunpack.c.l.b16 %v1046
    %v2090 = vunpack.c.l.b16 %v1047
    %v2091 = vunpack.c.h.b16 %v1047
    %v2092 = vunpack.c.l.b16 %v1048
    %v2093 = vunpack.c.h.b16 %v1048
    %v2094 = vunpack.c.l.b16 %v1049
    %v2095 = vunpack.c.h.b16 %v1049
    %v2096 = vunpack.c.l.b16 %v1050
    %v2097 = vunpack.c.l.b16 %v1051
    %v2098 = vunpack.c.h.b16 %v1051
    %v2099 = vunpack.c.l.b16 %v1052
    %v2100 = vunpack.c.h.b16 %v1052
    %v2101 = vunpack.c.l.b16 %v1053
    %v2102 = vunpack.c.h.b16 %v1053
    %v2103 = vunpack.c.l.b16 %v1054
    %v2104 = vunpack.c.l.b16 %v1055
    %v2105 = vunpack.c.h.b16 %v1055
    %v2106 = vunpack.c.l.b16 %v1056
    %v2107 = vunpack.c.h.b16 %v1056
    %v2108 = vunpack.c.l.b16 %v1057
    %v2109 = vunpack.c.h.b16 %v1057
    %v2110 = vunpack.c.l.b16 %v1058
    %v2111 = vunpack.c.l.b16 %v1059
    %v2112 = vunpack.c.h.b16 %v1059
    %v2113 = vunpack.c.l.b16 %v1060
    %v2114 = vunpack.c.h.b16 %v1060
    %v2115 = vunpack.c.l.b16 %v1061
    %v2116 = vunpack.c.h.b16 %v1061
    %v2117 = vunpack.c.l.b16 %v1062
    %v2118 = vunpack.c.l.b16 %v1063
    %v2119 = vunpack.c.h.b16 %v1063
    %v2120 = vunpack.c.l.b16 %v1064
    %v2121 = vunpack.c.h.b16 %v1064
    %v2122 = vunpack.c.l.b16 %v1065
    %v2123 = vunpack.c.h.b16 %v1065
    %v2124 = vunpack.c.l.b16 %v1066
    %v2125 = vunpack.c.l.b16 %v1067
    %v2126 = vunpack.c.h.b16 %v1067
    %v2127 = vunpack.c.l.b16 %v1068
    %v2128 = vunpack.c.h.b16 %v1068
    %v2129 = vunpack.c.l.b16 %v1069
    %v2130 = vunpack.c.h.b16 %v1069
    %v2131 = vunpack.c.l.b16 %v1070
    %v2132 = vunpack.c.l.b16 %v1071
    %v2133 = vunpack.c.h.b16 %v1071
    %v2134 = vunpack.c.l.b16 %v1072
    %v2135 = vunpack.c.h.b16 %v1072
    %v2136 = vunpack.c.l.b16 %v1073
    %v2137 = vunpack.c.h.b16 %v1073
    %v2138 = vunpack.c.l.b16 %v1074
    %v2139 = vunpack.c.l.b16 %v1075
    %v2140 = vunpack.c.h.b16 %v1075
    %v2141 = vunpack.c.l.b16 %v1076
    %v2142 = vunpack.c.h.b16 %v1076
    %v2143 = vunpack.c.l.b16 %v1077
    %v2144 = vunpack.c.h.b16 %v1077
    %v2145 = vunpack.c.l.b16 %v1078
    %v2146 = vunpack.c.l.b16 %v1079
    %v2147 = vunpack.c.h.b16 %v1079
    %v2148 = vunpack.c.l.b16 %v1080
    %v2149 = vunpack.c.h.b16 %v1080
    %v2150 = vunpack.c.l.b16 %v1081
    %v2151 = vunpack.c.h.b16 %v1081
    %v2152 = vunpack.c.l.b16 %v1082
    %v2153 = vunpack.c.l.b16 %v1083
    %v2154 = vunpack.c.h.b16 %v1083
    %v2155 = vunpack.c.l.b16 %v1084
    %v2156 = vunpack.c.h.b16 %v1084
    %v2157 = vunpack.c.l.b16 %v1085
    %v2158 = vunpack.c.h.b16 %v1085
    %v2159 = vunpack.c.l.b16 %v1086
    %v2160 = vunpack.c.l.b16 %v1087
    %v2161 = vunpack.c.h.b16 %v1087
    %v2162 = vunpack.c.l.b16 %v1088
    %v2163 = vunpack.c.h.b16 %v1088
    %v2164 = vunpack.c.l.b16 %v1089
    %v2165 = vunpack.c.h.b16 %v1089
    %v2166 = vunpack.c.l.b16 %v1090
    %v2167 = vunpack.c.l.b16 %v1091
    %v2168 = vunpack.c.h.b16 %v1091
    %v2169 = vunpack.c.l.b16 %v1092
    %v2170 = vunpack.c.h.b16 %v1092
    %v2171 = vunpack.c.l.b16 %v1093
    %v2172 = vunpack.c.h.b16 %v1093
    %v2173 = vunpack.c.l.b16 %v1094
    %v2174 = vunpack.c.l.b16 %v1095
    %v2175 = vunpack.c.h.b16 %v1095
    %v2176 = vunpack.c.l.b16 %v1096
    %v2177 = vunpack.c.h.b16 %v1096
    %v2178 = vunpack.c.l.b16 %v1097
    %v2179 = vunpack.c.h.b16 %v1097
    %v2180 = vunpack.c.l.b16 %v1098
    %v2181 = vunpack.c.l.b16 %v1099
    %v2182 = vunpack.c.h.b16 %v1099
    %v2183 = vunpack.c.l.b16 %v1100
    %v2184 = vunpack.c.h.b16 %v1100
    %v2185 = vunpack.c.l.b16 %v1101
    %v2186 = vunpack.c.h.b16 %v1101
    %v2187 = vunpack.c.l.b16 %v1102
    %v2188 = vunpack.c.l.b16 %v1103
    %v2189 = vunpack.c.h.b16 %v1103
    %v2190 = vunpack.c.l.b16 %v1104
    %v2191 = vunpack.c.h.b16 %v1104
    %v2192 = vunpack.c.l.b16 %v1105
    %v2193 = vunpack.c.h.b16 %v1105
    %v2194 = vunpack.c.l.b16 %v1106
    %v2195 = vunpack.c.l.b16 %v1107
    %v2196 = vunpack.c.h.b16 %v1107
    %v2197 = vunpack.c.l.b16 %v1108
    %v2198 = vunpack.c.h.b16 %v1108
    %v2199 = vunpack.c.l.b16 %v1109
    %v2200 = vunpack.c.h.b16 %v1109
    %v2201 = vunpack.c.l.b16 %v1110
    %v2202 = vunpack.c.l.b16 %v1111
    %v2203 = vunpack.c.h.b16 %v1111
    %v2204 = vunpack.c.l.b16 %v1112
    %v2205 = vunpack.c.h.b16 %v1112
    %v2206 = vunpack.c.l.b16 %v1113
    %v2207 = vunpack.c.h.b16 %v1113
    %v2208 = vunpack.c.l.b16 %v1114
    %v2209 = vunpack.c.l.b16 %v1115
    %v2210 = vunpack.c.h.b16 %v1115
    %v2211 = vunpack.c.l.b16 %v1116
    %v2212 = vunpack.c.h.b16 %v1116
    %v2213 = vunpack.c.l.b16 %v1117
    %v2214 = vunpack.c.h.b16 %v1117
    %v2215 = vunpack.c.l.b16 %v1118
    %v2216 = vunpack.c.l.b16 %v1119
    %v2217 = vunpack.c.h.b16 %v1119
    %v2218 = vunpack.c.l.b16 %v1120
    %v2219 = vunpack.c.h.b16 %v1120
    %v2220 = vunpack.c.l.b16 %v1121
    %v2221 = vunpack.c.h.b16 %v1121
    %v2222 = vunpack.c.l.b16 %v1122
    %v2223 = vpack.c.b16 %v1530, %v1523
    %v2224 = vpack.c.b16 %v1531, %v1524
    %v2225 = vpack.c.b16 %v1532, %v1525
    %v2226 = vpack.c.b16 %v1533, %v1526
    %v2227 = vpack.c.b16 %v1534, %v1527
    %v2228 = vpack.c.b16 %v1535, %v1528
    %v2229 = vpack.c.b16 %v1536, %v1529
    %v2230 = vpack.c.b16 %v1544, %v1537
    %v2231 = vpack.c.b16 %v1545, %v1538
    %v2232 = vpack.c.b16 %v1546, %v1539
    %v2233 = vpack.c.b16 %v1547, %v1540
    %v2234 = vpack.c.b16 %v1548, %v1541
    %v2235 = vpack.c.b16 %v1549, %v1542
    %v2236 = vpack.c.b16 %v1550, %v1543
    %v2237 = vpack.c.b16 %v1558, %v1551
    %v2238 = vpack.c.b16 %v1559, %v1552
    %v2239 = vpack.c.b16 %v1560, %v1553
    %v2240 = vpack.c.b16 %v1561, %v1554
    %v2241 = vpack.c.b16 %v1562, %v1555
    %v2242 = vpack.c.b16 %v1563, %v1556
    %v2243 = vpack.c.b16 %v1564, %v1557
    %v2244 = vpack.c.b16 %v1572, %v1565
    %v2245 = vpack.c.b16 %v1573, %v1566
    %v2246 = vpack.c.b16 %v1574, %v1567
    %v2247 = vpack.c.b16 %v1575, %v1568
    %v2248 = vpack.c.b16 %v1576, %v1569
    %v2249 = vpack.c.b16 %v1577, %v1570
    %v2250 = vpack.c.b16 %v1578, %v1571
    %v2251 = vpack.c.b16 %v1586, %v1579
    %v2252 = vpack.c.b16 %v1587, %v1580
    %v2253 = vpack.c.b16 %v1588, %v1581
    %v2254 = vpack.c.b16 %v1589, %v1582
    %v2255 = vpack.c.b16 %v1590, %v1583
    %v2256 = vpack.c.b16 %v1591, %v1584
    %v2257 = vpack.c.b16 %v1592, %v1585
    %v2258 = vpack.c.b16 %v1600, %v1593
    %v2259 = vpack.c.b16 %v1601, %v1594
    %v2260 = vpack.c.b16 %v1602, %v1595
    %v2261 = vpack.c.b16 %v1603, %v1596
    %v2262 = vpack.c.b16 %v1604, %v1597
    %v2263 = vpack.c.b16 %v1605, %v1598
    %v2264 = vpack.c.b16 %v1606, %v1599
    %v2265 = vpack.c.b16 %v1614, %v1607
    %v2266 = vpack.c.b16 %v1615, %v1608
    %v2267 = vpack.c.b16 %v1616, %v1609
    %v2268 = vpack.c.b16 %v1617, %v1610
    %v2269 = vpack.c.b16 %v1618, %v1611
    %v2270 = vpack.c.b16 %v1619, %v1612
    %v2271 = vpack.c.b16 %v1620, %v1613
    %v2272 = vpack.c.b16 %v1628, %v1621
    %v2273 = vpack.c.b16 %v1629, %v1622
    %v2274 = vpack.c.b16 %v1630, %v1623
    %v2275 = vpack.c.b16 %v1631, %v1624
    %v2276 = vpack.c.b16 %v1632, %v1625
    %v2277 = vpack.c.b16 %v1633, %v1626
    %v2278 = vpack.c.b16 %v1634, %v1627
    %v2279 = vpack.c.b16 %v1642, %v1635
    %v2280 = vpack.c.b16 %v1643, %v1636
    %v2281 = vpack.c.b16 %v1644, %v1637
    %v2282 = vpack.c.b16 %v1645, %v1638
    %v2283 = vpack.c.b16 %v1646, %v1639
    %v2284 = vpack.c.b16 %v1647, %v1640
    %v2285 = vpack.c.b16 %v1648, %v1641
    %v2286 = vpack.c.b16 %v1656, %v1649
    %v2287 = vpack.c.b16 %v1657, %v1650
    %v2288 = vpack.c.b16 %v1658, %v1651
    %v2289 = vpack.c.b16 %v1659, %v1652
    %v2290 = vpack.c.b16 %v1660, %v1653
    %v2291 = vpack.c.b16 %v1661, %v1654
    %v2292 = vpack.c.b16 %v1662, %v1655
    %v2293 = vpack.c.b16 %v1670, %v1663
    %v2294 = vpack.c.b16 %v1671, %v1664
    %v2295 = vpack.c.b16 %v1672, %v1665
    %v2296 = vpack.c.b16 %v1673, %v1666
    %v2297 = vpack.c.b16 %v1674, %v1667
    %v2298 = vpack.c.b16 %v1675, %v1668
    %v2299 = vpack.c.b16 %v1676, %v1669
    %v2300 = vpack.c.b16 %v1684, %v1677
    %v2301 = vpack.c.b16 %v1685, %v1678
    %v2302 = vpack.c.b16 %v1686, %v1679
    %v2303 = vpack.c.b16 %v1687, %v1680
    %v2304 = vpack.c.b16 %v1688, %v1681
    %v2305 = vpack.c.b16 %v1689, %v1682
    %v2306 = vpack.c.b16 %v1690, %v1683
    %v2307 = vpack.c.b16 %v1698, %v1691
    %v2308 = vpack.c.b16 %v1699, %v1692
    %v2309 = vpack.c.b16 %v1700, %v1693
    %v2310 = vpack.c.b16 %v1701, %v1694
    %v2311 = vpack.c.b16 %v1702, %v1695
    %v2312 = vpack.c.b16 %v1703, %v1696
    %v2313 = vpack.c.b16 %v1704, %v1697
    %v2314 = vpack.c.b16 %v1712, %v1705
    %v2315 = vpack.c.b16 %v1713, %v1706
    %v2316 = vpack.c.b16 %v1714, %v1707
    %v2317 = vpack.c.b16 %v1715, %v1708
    %v2318 = vpack.c.b16 %v1716, %v1709
    %v2319 = vpack.c.b16 %v1717, %v1710
    %v2320 = vpack.c.b16 %v1718, %v1711
    %v2321 = vpack.c.b16 %v1726, %v1719
    %v2322 = vpack.c.b16 %v1727, %v1720
    %v2323 = vpack.c.b16 %v1728, %v1721
    %v2324 = vpack.c.b16 %v1729, %v1722
    %v2325 = vpack.c.b16 %v1730, %v1723
    %v2326 = vpack.c.b16 %v1731, %v1724
    %v2327 = vpack.c.b16 %v1732, %v1725
    %v2328 = vpack.c.b16 %v1740, %v1733
    %v2329 = vpack.c.b16 %v1741, %v1734
    %v2330 = vpack.c.b16 %v1742, %v1735
    %v2331 = vpack.c.b16 %v1743, %v1736
    %v2332 = vpack.c.b16 %v1744, %v1737
    %v2333 = vpack.c.b16 %v1745, %v1738
    %v2334 = vpack.c.b16 %v1746, %v1739
    %v2335 = vpack.c.b16 %v1754, %v1747
    %v2336 = vpack.c.b16 %v1755, %v1748
    %v2337 = vpack.c.b16 %v1756, %v1749
    %v2338 = vpack.c.b16 %v1757, %v1750
    %v2339 = vpack.c.b16 %v1758, %v1751
    %v2340 = vpack.c.b16 %v1759, %v1752
    %v2341 = vpack.c.b16 %v1760, %v1753
    %v2342 = vpack.c.b16 %v1768, %v1761
    %v2343 = vpack.c.b16 %v1769, %v1762
    %v2344 = vpack.c.b16 %v1770, %v1763
    %v2345 = vpack.c.b16 %v1771, %v1764
    %v2346 = vpack.c.b16 %v1772, %v1765
    %v2347 = vpack.c.b16 %v1773, %v1766
    %v2348 = vpack.c.b16 %v1774, %v1767
    %v2349 = vpack.c.b16 %v1782, %v1775
    %v2350 = vpack.c.b16 %v1783, %v1776
    %v2351 = vpack.c.b16 %v1784, %v1777
    %v2352 = vpack.c.b16 %v1785, %v1778
    %v2353 = vpack.c.b16 %v1786, %v1779
    %v2354 = vpack.c.b16 %v1787, %v1780
    %v2355 = vpack.c.b16 %v1788, %v1781
    %v2356 = vpack.c.b16 %v1796, %v1789
    %v2357 = vpack.c.b16 %v1797, %v1790
    %v2358 = vpack.c.b16 %v1798, %v1791
    %v2359 = vpack.c.b16 %v1799, %v1792
    %v2360 = vpack.c.b16 %v1800, %v1793
    %v2361 = vpack.c.b16 %v1801, %v1794
    %v2362 = vpack.c.b16 %v1802, %v1795
    %v2363 = vpack.c.b16 %v1810, %v1803
    %v2364 = vpack.c.b16 %v1811, %v1804
    %v2365 = vpack.c.b16 %v1812, %v1805
    %v2366 = vpack.c.b16 %v1813, %v1806
    %v2367 = vpack.c.b16 %v1814, %v1807
    %v2368 = vpack.c.b16 %v1815, %v1808
    %v2369 = vpack.c.b16 %v1816, %v1809
    %v2370 = vpack.c.b16 %v1824, %v1817
    %v2371 = vpack.c.b16 %v1825, %v1818
    %v2372 = vpack.c.b16 %v1826, %v1819
    %v2373 = vpack.c.b16 %v1827, %v1820
    %v2374 = vpack.c.b16 %v1828, %v1821
    %v2375 = vpack.c.b16 %v1829, %v1822
    %v2376 = vpack.c.b16 %v1830, %v1823
    %v2377 = vpack.c.b16 %v1838, %v1831
    %v2378 = vpack.c.b16 %v1839, %v1832
    %v2379 = vpack.c.b16 %v1840, %v1833
    %v2380 = vpack.c.b16 %v1841, %v1834
    %v2381 = vpack.c.b16 %v1842, %v1835
    %v2382 = vpack.c.b16 %v1843, %v1836
    %v2383 = vpack.c.b16 %v1844, %v1837
    %v2384 = vpack.c.b16 %v1852, %v1845
    %v2385 = vpack.c.b16 %v1853, %v1846
    %v2386 = vpack.c.b16 %v1854, %v1847
    %v2387 = vpack.c.b16 %v1855, %v1848
    %v2388 = vpack.c.b16 %v1856, %v1849
    %v2389 = vpack.c.b16 %v1857, %v1850
    %v2390 = vpack.c.b16 %v1858, %v1851
    %v2391 = vpack.c.b16 %v1866, %v1859
    %v2392 = vpack.c.b16 %v1867, %v1860
    %v2393 = vpack.c.b16 %v1868, %v1861
    %v2394 = vpack.c.b16 %v1869, %v1862
    %v2395 = vpack.c.b16 %v1870, %v1863
    %v2396 = vpack.c.b16 %v1871, %v1864
    %v2397 = vpack.c.b16 %v1872, %v1865
    %v2398 = vpack.c.b16 %v1880, %v1873
    %v2399 = vpack.c.b16 %v1881, %v1874
    %v2400 = vpack.c.b16 %v1882, %v1875
    %v2401 = vpack.c.b16 %v1883, %v1876
    %v2402 = vpack.c.b16 %v1884, %v1877
    %v2403 = vpack.c.b16 %v1885, %v1878
    %v2404 = vpack.c.b16 %v1886, %v1879
    %v2405 = vpack.c.b16 %v1894, %v1887
    %v2406 = vpack.c.b16 %v1895, %v1888
    %v2407 = vpack.c.b16 %v1896, %v1889
    %v2408 = vpack.c.b16 %v1897, %v1890
    %v2409 = vpack.c.b16 %v1898, %v1891
    %v2410 = vpack.c.b16 %v1899, %v1892
    %v2411 = vpack.c.b16 %v1900, %v1893
    %v2412 = vpack.c.b16 %v1908, %v1901
    %v2413 = vpack.c.b16 %v1909, %v1902
    %v2414 = vpack.c.b16 %v1910, %v1903
    %v2415 = vpack.c.b16 %v1911, %v1904
    %v2416 = vpack.c.b16 %v1912, %v1905
    %v2417 = vpack.c.b16 %v1913, %v1906
    %v2418 = vpack.c.b16 %v1914, %v1907
    %v2419 = vpack.c.b16 %v1922, %v1915
    %v2420 = vpack.c.b16 %v1923, %v1916
    %v2421 = vpack.c.b16 %v1924, %v1917
    %v2422 = vpack.c.b16 %v1925, %v1918
    %v2423 = vpack.c.b16 %v1926, %v1919
    %v2424 = vpack.c.b16 %v1927, %v1920
    %v2425 = vpack.c.b16 %v1928, %v1921
    %v2426 = vpack.c.b16 %v1936, %v1929
    %v2427 = vpack.c.b16 %v1937, %v1930
    %v2428 = vpack.c.b16 %v1938, %v1931
    %v2429 = vpack.c.b16 %v1939, %v1932
    %v2430 = vpack.c.b16 %v1940, %v1933
    %v2431 = vpack.c.b16 %v1941, %v1934
    %v2432 = vpack.c.b16 %v1942, %v1935
    %v2433 = vpack.c.b16 %v1950, %v1943
    %v2434 = vpack.c.b16 %v1951, %v1944
    %v2435 = vpack.c.b16 %v1952, %v1945
    %v2436 = vpack.c.b16 %v1953, %v1946
    %v2437 = vpack.c.b16 %v1954, %v1947
    %v2438 = vpack.c.b16 %v1955, %v1948
    %v2439 = vpack.c.b16 %v1956, %v1949
    %v2440 = vpack.c.b16 %v1964, %v1957
    %v2441 = vpack.c.b16 %v1965, %v1958
    %v2442 = vpack.c.b16 %v1966, %v1959
    %v2443 = vpack.c.b16 %v1967, %v1960
    %v2444 = vpack.c.b16 %v1968, %v1961
    %v2445 = vpack.c.b16 %v1969, %v1962
    %v2446 = vpack.c.b16 %v1970, %v1963
    %v2447 = vpack.c.b16 %v1978, %v1971
    %v2448 = vpack.c.b16 %v1979, %v1972
    %v2449 = vpack.c.b16 %v1980, %v1973
    %v2450 = vpack.c.b16 %v1981, %v1974
    %v2451 = vpack.c.b16 %v1982, %v1975
    %v2452 = vpack.c.b16 %v1983, %v1976
    %v2453 = vpack.c.b16 %v1984, %v1977
    %v2454 = vpack.c.b16 %v1992, %v1985
    %v2455 = vpack.c.b16 %v1993, %v1986
    %v2456 = vpack.c.b16 %v1994, %v1987
    %v2457 = vpack.c.b16 %v1995, %v1988
    %v2458 = vpack.c.b16 %v1996, %v1989
    %v2459 = vpack.c.b16 %v1997, %v1990
    %v2460 = vpack.c.b16 %v1998, %v1991
    %v2461 = vpack.c.b16 %v2006, %v1999
    %v2462 = vpack.c.b16 %v2007, %v2000
    %v2463 = vpack.c.b16 %v2008, %v2001
    %v2464 = vpack.c.b16 %v2009, %v2002
    %v2465 = vpack.c.b16 %v2010, %v2003
    %v2466 = vpack.c.b16 %v2011, %v2004
    %v2467 = vpack.c.b16 %v2012, %v2005
    %v2468 = vpack.c.b16 %v2020, %v2013
    %v2469 = vpack.c.b16 %v2021, %v2014
    %v2470 = vpack.c.b16 %v2022, %v2015
    %v2471 = vpack.c.b16 %v2023, %v2016
    %v2472 = vpack.c.b16 %v2024, %v2017
    %v2473 = vpack.c.b16 %v2025, %v2018
    %v2474 = vpack.c.b16 %v2026, %v2019
    %v2475 = vpack.c.b16 %v2034, %v2027
    %v2476 = vpack.c.b16 %v2035, %v2028
    %v2477 = vpack.c.b16 %v2036, %v2029
    %v2478 = vpack.c.b16 %v2037, %v2030
    %v2479 = vpack.c.b16 %v2038, %v2031
    %v2480 = vpack.c.b16 %v2039, %v2032
    %v2481 = vpack.c.b16 %v2040, %v2033
    %v2482 = vpack.c.b16 %v2048, %v2041
    %v2483 = vpack.c.b16 %v2049, %v2042
    %v2484 = vpack.c.b16 %v2050, %v2043
    %v2485 = vpack.c.b16 %v2051, %v2044
    %v2486 = vpack.c.b16 %v2052, %v2045
    %v2487 = vpack.c.b16 %v2053, %v2046
    %v2488 = vpack.c.b16 %v2054, %v2047
    %v2489 = vpack.c.b16 %v2062, %v2055
    %v2490 = vpack.c.b16 %v2063, %v2056
    %v2491 = vpack.c.b16 %v2064, %v2057
    %v2492 = vpack.c.b16 %v2065, %v2058
    %v2493 = vpack.c.b16 %v2066, %v2059
    %v2494 = vpack.c.b16 %v2067, %v2060
    %v2495 = vpack.c.b16 %v2068, %v2061
    %v2496 = vpack.c.b16 %v2076, %v2069
    %v2497 = vpack.c.b16 %v2077, %v2070
    %v2498 = vpack.c.b16 %v2078, %v2071
    %v2499 = vpack.c.b16 %v2079, %v2072
    %v2500 = vpack.c.b16 %v2080, %v2073
    %v2501 = vpack.c.b16 %v2081, %v2074
    %v2502 = vpack.c.b16 %v2082, %v2075
    %v2503 = vpack.c.b16 %v2090, %v2083
    %v2504 = vpack.c.b16 %v2091, %v2084
    %v2505 = vpack.c.b16 %v2092, %v2085
    %v2506 = vpack.c.b16 %v2093, %v2086
    %v2507 = vpack.c.b16 %v2094, %v2087
    %v2508 = vpack.c.b16 %v2095, %v2088
    %v2509 = vpack.c.b16 %v2096, %v2089
    %v2510 = vpack.c.b16 %v2104, %v2097
    %v2511 = vpack.c.b16 %v2105, %v2098
    %v2512 = vpack.c.b16 %v2106, %v2099
    %v2513 = vpack.c.b16 %v2107, %v2100
    %v2514 = vpack.c.b16 %v2108, %v2101
    %v2515 = vpack.c.b16 %v2109, %v2102
    %v2516 = vpack.c.b16 %v2110, %v2103
    %v2517 = vpack.c.b16 %v2118, %v2111
    %v2518 = vpack.c.b16 %v2119, %v2112
    %v2519 = vpack.c.b16 %v2120, %v2113
    %v2520 = vpack.c.b16 %v2121, %v2114
    %v2521 = vpack.c.b16 %v2122, %v2115
    %v2522 = vpack.c.b16 %v2123, %v2116
    %v2523 = vpack.c.b16 %v2124, %v2117
    %v2524 = vpack.c.b16 %v2132, %v2125
    %v2525 = vpack.c.b16 %v2133, %v2126
    %v2526 = vpack.c.b16 %v2134, %v2127
    %v2527 = vpack.c.b16 %v2135, %v2128
    %v2528 = vpack.c.b16 %v2136, %v2129
    %v2529 = vpack.c.b16 %v2137, %v2130
    %v2530 = vpack.c.b16 %v2138, %v2131
    %v2531 = vpack.c.b16 %v2146, %v2139
    %v2532 = vpack.c.b16 %v2147, %v2140
    %v2533 = vpack.c.b16 %v2148, %v2141
    %v2534 = vpack.c.b16 %v2149, %v2142
    %v2535 = vpack.c.b16 %v2150, %v2143
    %v2536 = vpack.c.b16 %v2151, %v2144
    %v2537 = vpack.c.b16 %v2152, %v2145
    %v2538 = vpack.c.b16 %v2160, %v2153
    %v2539 = vpack.c.b16 %v2161, %v2154
    %v2540 = vpack.c.b16 %v2162, %v2155
    %v2541 = vpack.c.b16 %v2163, %v2156
    %v2542 = vpack.c.b16 %v2164, %v2157
    %v2543 = vpack.c.b16 %v2165, %v2158
    %v2544 = vpack.c.b16 %v2166, %v2159
    %v2545 = vpack.c.b16 %v2174, %v2167
    %v2546 = vpack.c.b16 %v2175, %v2168
    %v2547 = vpack.c.b16 %v2176, %v2169
    %v2548 = vpack.c.b16 %v2177, %v2170
    %v2549 = vpack.c.b16 %v2178, %v2171
    %v2550 = vpack.c.b16 %v2179, %v2172
    %v2551 = vpack.c.b16 %v2180, %v2173
    %v2552 = vpack.c.b16 %v2188, %v2181
    %v2553 = vpack.c.b16 %v2189, %v2182
    %v2554 = vpack.c.b16 %v2190, %v2183
    %v2555 = vpack.c.b16 %v2191, %v2184
    %v2556 = vpack.c.b16 %v2192, %v2185
    %v2557 = vpack.c.b16 %v2193, %v2186
    %v2558 = vpack.c.b16 %v2194, %v2187
    %v2559 = vpack.c.b16 %v2202, %v2195
    %v2560 = vpack.c.b16 %v2203, %v2196
    %v2561 = vpack.c.b16 %v2204, %v2197
    %v2562 = vpack.c.b16 %v2205, %v2198
    %v2563 = vpack.c.b16 %v2206, %v2199
    %v2564 = vpack.c.b16 %v2207, %v2200
    %v2565 = vpack.c.b16 %v2208, %v2201
    %v2566 = vpack.c.b16 %v2216, %v2209
    %v2567 = vpack.c.b16 %v2217, %v2210
    %v2568 = vpack.c.b16 %v2218, %v2211
    %v2569 = vpack.c.b16 %v2219, %v2212
    %v2570 = vpack.c.b16 %v2220, %v2213
    %v2571 = vpack.c.b16 %v2221, %v2214
    %v2572 = vpack.c.b16 %v2222, %v2215
    %vm2923 = vcmask 261120
    %v2925 = vsel %vm2923, %v722, 0
    %2927 = vmatprep.subr.bf16.mxu0 %v2224
    %2928 = vmatpush1.bf16.msra.mxu0 %v2223
    %2929 = vmatprep.subr.bf16.mxu0 %v2231
    %2930 = vmatpush1.bf16.msra.mxu0 %v2230
    %2931 = vmatprep.subr.bf16.mxu0 %v2238
    %2932 = vmatpush1.bf16.msra.mxu0 %v2237
    %2933 = vmatprep.subr.bf16.mxu0 %v2245
    %2934 = vmatpush1.bf16.msra.mxu0 %v2244
    %2935 = vmatprep.subr.bf16.mxu0 %v2252
    %2936 = vmatpush1.bf16.msra.mxu0 %v2251
    %2937 = vmatprep.subr.bf16.mxu0 %v2259
    %2938 = vmatpush1.bf16.msra.mxu0 %v2258
    %2939 = vmatprep.subr.bf16.mxu0 %v2266
    %2940 = vmatpush1.bf16.msra.mxu0 %v2265
    %2941 = vmatprep.subr.bf16.mxu0 %v2273
    %2942 = vmatpush1.bf16.msra.mxu0 %v2272
    %2943 = vmatprep.subr.bf16.mxu0 %v2280
    %2944 = vmatpush1.bf16.msra.mxu0 %v2279
    %2945 = vmatprep.subr.bf16.mxu0 %v2287
    %2946 = vmatpush1.bf16.msra.mxu0 %v2286
    %2947 = vmatprep.subr.bf16.mxu0 %v2294
    %2948 = vmatpush1.bf16.msra.mxu0 %v2293
    %2949 = vmatprep.subr.bf16.mxu0 %v2301
    %2950 = vmatpush1.bf16.msra.mxu0 %v2300
    %2951 = vmatprep.subr.bf16.mxu0 %v2308
    %2952 = vmatpush1.bf16.msra.mxu0 %v2307
    %2953 = vmatprep.subr.bf16.mxu0 %v2315
    %2954 = vmatpush1.bf16.msra.mxu0 %v2314
    %2955 = vmatprep.subr.bf16.mxu0 %v2322
    %2956 = vmatpush1.bf16.msra.mxu0 %v2321
    %2957 = vmatprep.subr.bf16.mxu0 %v2329
    %2958 = vmatpush1.bf16.msra.mxu0 %v2328
    %2959 = vmatprep.mubr.bf16.mxu0 %v717
    %2960 = vmatmul.mubr.bf16.gmra.mrb[0].mxu0 %v716
    %v2961 = vpop.f32.mrb[0].mxu0
    %v2962 = vadd.f32 0.0, %v2961
    %v2963 = vpop.f32.mrb[0].mxu0
    %v2964 = vadd.f32 0.0, %v2963
    %v2965 = vpop.f32.mrb[0].mxu0
    %v2966 = vpop.f32.mrb[0].mxu0
    %2967 = vdwg.mxu0
    %2968 = vmatprep.subr.bf16.mxu0 %v2336
    %2969 = vmatpush1.bf16.msra.mxu0 %v2335
    %2970 = vmatprep.subr.bf16.mxu0 %v2343
    %2971 = vmatpush1.bf16.msra.mxu0 %v2342
    %2972 = vmatprep.subr.bf16.mxu0 %v2350
    %2973 = vmatpush1.bf16.msra.mxu0 %v2349
    %2974 = vmatprep.subr.bf16.mxu0 %v2357
    %2975 = vmatpush1.bf16.msra.mxu0 %v2356
    %2976 = vmatprep.subr.bf16.mxu0 %v2364
    %2977 = vmatpush1.bf16.msra.mxu0 %v2363
    %2978 = vmatprep.subr.bf16.mxu0 %v2371
    %2979 = vmatpush1.bf16.msra.mxu0 %v2370
    %2980 = vmatprep.subr.bf16.mxu0 %v2378
    %2981 = vmatpush1.bf16.msra.mxu0 %v2377
    %2982 = vmatprep.subr.bf16.mxu0 %v2385
    %2983 = vmatpush1.bf16.msra.mxu0 %v2384
    %2984 = vmatprep.subr.bf16.mxu0 %v2392
    %2985 = vmatpush1.bf16.msra.mxu0 %v2391
    %2986 = vmatprep.subr.bf16.mxu0 %v2399
    %2987 = vmatpush1.bf16.msra.mxu0 %v2398
    %2988 = vmatprep.subr.bf16.mxu0 %v2406
    %2989 = vmatpush1.bf16.msra.mxu0 %v2405
    %2990 = vmatprep.subr.bf16.mxu0 %v2413
    %2991 = vmatpush1.bf16.msra.mxu0 %v2412
    %2992 = vmatprep.subr.bf16.mxu0 %v2420
    %2993 = vmatpush1.bf16.msra.mxu0 %v2419
    %2994 = vmatprep.subr.bf16.mxu0 %v2427
    %2995 = vmatpush1.bf16.msra.mxu0 %v2426
    %2996 = vmatprep.subr.bf16.mxu0 %v2434
    %2997 = vmatpush1.bf16.msra.mxu0 %v2433
    %2998 = vmatprep.subr.bf16.mxu0 %v2441
    %2999 = vmatpush1.bf16.msra.mxu0 %v2440
    %3000 = vmatprep.mubr.bf16.mxu0 %v719
    %3001 = vmatmul.mubr.bf16.gmra.mrb[0].mxu0 %v718
    %v3002 = vpop.f32.mrb[0].mxu0
    %v3003 = vadd.f32 %v2962, %v3002
    %v3004 = vpop.f32.mrb[0].mxu0
    %v3005 = vadd.f32 %v2964, %v3004
    %v3006 = vpop.f32.mrb[0].mxu0
    %v3007 = vpop.f32.mrb[0].mxu0
    %3008 = vdwg.mxu0
    %3009 = vmatprep.subr.bf16.mxu0 %v2448
    %3010 = vmatpush1.bf16.msra.mxu0 %v2447
    %3011 = vmatprep.subr.bf16.mxu0 %v2455
    %3012 = vmatpush1.bf16.msra.mxu0 %v2454
    %3013 = vmatprep.subr.bf16.mxu0 %v2462
    %3014 = vmatpush1.bf16.msra.mxu0 %v2461
    %3015 = vmatprep.subr.bf16.mxu0 %v2469
    %3016 = vmatpush1.bf16.msra.mxu0 %v2468
    %3017 = vmatprep.subr.bf16.mxu0 %v2476
    %3018 = vmatpush1.bf16.msra.mxu0 %v2475
    %3019 = vmatprep.subr.bf16.mxu0 %v2483
    %3020 = vmatpush1.bf16.msra.mxu0 %v2482
    %3021 = vmatprep.subr.bf16.mxu0 %v2490
    %3022 = vmatpush1.bf16.msra.mxu0 %v2489
    %3023 = vmatprep.subr.bf16.mxu0 %v2497
    %3024 = vmatpush1.bf16.msra.mxu0 %v2496
    %3025 = vmatprep.subr.bf16.mxu0 %v2504
    %3026 = vmatpush1.bf16.msra.mxu0 %v2503
    %3027 = vmatprep.subr.bf16.mxu0 %v2511
    %3028 = vmatpush1.bf16.msra.mxu0 %v2510
    %3029 = vmatprep.subr.bf16.mxu0 %v2518
    %3030 = vmatpush1.bf16.msra.mxu0 %v2517
    %3031 = vmatprep.subr.bf16.mxu0 %v2525
    %3032 = vmatpush1.bf16.msra.mxu0 %v2524
    %3033 = vmatprep.subr.bf16.mxu0 %v2532
    %3034 = vmatpush1.bf16.msra.mxu0 %v2531
    %3035 = vmatprep.subr.bf16.mxu0 %v2539
    %3036 = vmatpush1.bf16.msra.mxu0 %v2538
    %3037 = vmatprep.subr.bf16.mxu0 %v2546
    %3038 = vmatpush1.bf16.msra.mxu0 %v2545
    %3039 = vmatprep.subr.bf16.mxu0 %v2553
    %3040 = vmatpush1.bf16.msra.mxu0 %v2552
    %3041 = vmatprep.mubr.bf16.mxu0 %v721
    %3042 = vmatmul.mubr.bf16.gmra.mrb[0].mxu0 %v720
    %v3043 = vpop.f32.mrb[0].mxu0
    %v3044 = vadd.f32 %v3003, %v3043
    %v3045 = vpop.f32.mrb[0].mxu0
    %v3046 = vadd.f32 %v3005, %v3045
    %v3047 = vpop.f32.mrb[0].mxu0
    %v3048 = vpop.f32.mrb[0].mxu0
    %3049 = vdwg.mxu0
    %3050 = vmatprep.subr.bf16.mxu0 %v2560
    %3051 = vmatpush1.bf16.msra.mxu0 %v2559
    %3052 = vmatprep.subr.bf16.mxu0 %v2567
    %3053 = vmatpush1.bf16.msra.mxu0 %v2566
    %3054 = vmatprep.subr.bf16.mxu0 0
    %3055 = vmatpush1.bf16.msra.mxu0 0
    %3056 = vmatprep.subr.bf16.mxu0 0
    %3057 = vmatpush1.bf16.msra.mxu0 0
    %3058 = vmatprep.subr.bf16.mxu0 0
    %3059 = vmatpush1.bf16.msra.mxu0 0
    %3060 = vmatprep.subr.bf16.mxu0 0
    %3061 = vmatpush1.bf16.msra.mxu0 0
    %3062 = vmatprep.subr.bf16.mxu0 0
    %3063 = vmatpush1.bf16.msra.mxu0 0
    %3064 = vmatprep.subr.bf16.mxu0 0
    %3065 = vmatpush1.bf16.msra.mxu0 0
    %3066 = vmatprep.subr.bf16.mxu0 0
    %3067 = vmatpush1.bf16.msra.mxu0 0
    %3068 = vmatprep.subr.bf16.mxu0 0
    %3069 = vmatpush1.bf16.msra.mxu0 0
    %3070 = vmatprep.subr.bf16.mxu0 0
    %3071 = vmatpush1.bf16.msra.mxu0 0
    %3072 = vmatprep.subr.bf16.mxu0 0
    %3073 = vmatpush1.bf16.msra.mxu0 0
    %3074 = vmatprep.subr.bf16.mxu0 0
    %3075 = vmatpush1.bf16.msra.mxu0 0
    %3076 = vmatprep.subr.bf16.mxu0 0
    %3077 = vmatpush1.bf16.msra.mxu0 0
    %3078 = vmatprep.subr.bf16.mxu0 0
    %3079 = vmatpush1.bf16.msra.mxu0 0
    %3080 = vmatprep.subr.bf16.mxu0 0
    %3081 = vmatpush1.bf16.msra.mxu0 0
    %3082 = vmatprep.mubr.bf16.mxu0 0
    %3083 = vmatmul.mubr.bf16.gmra.mrb[0].mxu0 %v2925
    %v3084 = vpop.f32.mrb[0].mxu0
    %v3085 = vadd.f32 %v3044, %v3084
    %v3086 = vpop.f32.mrb[0].mxu0
    %v3087 = vadd.f32 %v3046, %v3086
    %v3088 = vpop.f32.mrb[0].mxu0
    %v3089 = vpop.f32.mrb[0].mxu0
    %3090 = vdwg.mxu0
    %3091 = vmatprep.subr.bf16.mxu0 %v2226
    %3092 = vmatpush1.bf16.msra.mxu0 %v2225
    %3093 = vmatprep.subr.bf16.mxu0 %v2233
    %3094 = vmatpush1.bf16.msra.mxu0 %v2232
    %3095 = vmatprep.subr.bf16.mxu0 %v2240
    %3096 = vmatpush1.bf16.msra.mxu0 %v2239
    %3097 = vmatprep.subr.bf16.mxu0 %v2247
    %3098 = vmatpush1.bf16.msra.mxu0 %v2246
    %3099 = vmatprep.subr.bf16.mxu0 %v2254
    %3100 = vmatpush1.bf16.msra.mxu0 %v2253
    %3101 = vmatprep.subr.bf16.mxu0 %v2261
    %3102 = vmatpush1.bf16.msra.mxu0 %v2260
    %3103 = vmatprep.subr.bf16.mxu0 %v2268
    %3104 = vmatpush1.bf16.msra.mxu0 %v2267
    %3105 = vmatprep.subr.bf16.mxu0 %v2275
    %3106 = vmatpush1.bf16.msra.mxu0 %v2274
    %3107 = vmatprep.subr.bf16.mxu0 %v2282
    %3108 = vmatpush1.bf16.msra.mxu0 %v2281
    %3109 = vmatprep.subr.bf16.mxu0 %v2289
    %3110 = vmatpush1.bf16.msra.mxu0 %v2288
    %3111 = vmatprep.subr.bf16.mxu0 %v2296
    %3112 = vmatpush1.bf16.msra.mxu0 %v2295
    %3113 = vmatprep.subr.bf16.mxu0 %v2303
    %3114 = vmatpush1.bf16.msra.mxu0 %v2302
    %3115 = vmatprep.subr.bf16.mxu0 %v2310
    %3116 = vmatpush1.bf16.msra.mxu0 %v2309
    %3117 = vmatprep.subr.bf16.mxu0 %v2317
    %3118 = vmatpush1.bf16.msra.mxu0 %v2316
    %3119 = vmatprep.subr.bf16.mxu0 %v2324
    %3120 = vmatpush1.bf16.msra.mxu0 %v2323
    %3121 = vmatprep.subr.bf16.mxu0 %v2331
    %3122 = vmatpush1.bf16.msra.mxu0 %v2330
    %3123 = vmatprep.mubr.bf16.mxu0 %v717
    %3124 = vmatmul.mubr.bf16.gmra.mrb[0].mxu0 %v716
    %v3125 = vpop.f32.mrb[0].mxu0
    %v3126 = vadd.f32 0.0, %v3125
    %v3127 = vpop.f32.mrb[0].mxu0
    %v3128 = vadd.f32 0.0, %v3127
    %v3129 = vpop.f32.mrb[0].mxu0
    %v3130 = vpop.f32.mrb[0].mxu0
    %3131 = vdwg.mxu0
    %3132 = vmatprep.subr.bf16.mxu0 %v2338
    %3133 = vmatpush1.bf16.msra.mxu0 %v2337
    %3134 = vmatprep.subr.bf16.mxu0 %v2345
    %3135 = vmatpush1.bf16.msra.mxu0 %v2344
    %3136 = vmatprep.subr.bf16.mxu0 %v2352
    %3137 = vmatpush1.bf16.msra.mxu0 %v2351
    %3138 = vmatprep.subr.bf16.mxu0 %v2359
    %3139 = vmatpush1.bf16.msra.mxu0 %v2358
    %3140 = vmatprep.subr.bf16.mxu0 %v2366
    %3141 = vmatpush1.bf16.msra.mxu0 %v2365
    %3142 = vmatprep.subr.bf16.mxu0 %v2373
    %3143 = vmatpush1.bf16.msra.mxu0 %v2372
    %3144 = vmatprep.subr.bf16.mxu0 %v2380
    %3145 = vmatpush1.bf16.msra.mxu0 %v2379
    %3146 = vmatprep.subr.bf16.mxu0 %v2387
    %3147 = vmatpush1.bf16.msra.mxu0 %v2386
    %3148 = vmatprep.subr.bf16.mxu0 %v2394
    %3149 = vmatpush1.bf16.msra.mxu0 %v2393
    %3150 = vmatprep.subr.bf16.mxu0 %v2401
    %3151 = vmatpush1.bf16.msra.mxu0 %v2400
    %3152 = vmatprep.subr.bf16.mxu0 %v2408
    %3153 = vmatpush1.bf16.msra.mxu0 %v2407
    %3154 = vmatprep.subr.bf16.mxu0 %v2415
    %3155 = vmatpush1.bf16.msra.mxu0 %v2414
    %3156 = vmatprep.subr.bf16.mxu0 %v2422
    %3157 = vmatpush1.bf16.msra.mxu0 %v2421
    %3158 = vmatprep.subr.bf16.mxu0 %v2429
    %3159 = vmatpush1.bf16.msra.mxu0 %v2428
    %3160 = vmatprep.subr.bf16.mxu0 %v2436
    %3161 = vmatpush1.bf16.msra.mxu0 %v2435
    %3162 = vmatprep.subr.bf16.mxu0 %v2443
    %3163 = vmatpush1.bf16.msra.mxu0 %v2442
    %3164 = vmatprep.mubr.bf16.mxu0 %v719
    %3165 = vmatmul.mubr.bf16.gmra.mrb[0].mxu0 %v718
    %v3166 = vpop.f32.mrb[0].mxu0
    %v3167 = vadd.f32 %v3126, %v3166
    %v3168 = vpop.f32.mrb[0].mxu0
    %v3169 = vadd.f32 %v3128, %v3168
    %v3170 = vpop.f32.mrb[0].mxu0
    %v3171 = vpop.f32.mrb[0].mxu0
    %3172 = vdwg.mxu0
    %3173 = vmatprep.subr.bf16.mxu0 %v2450
    %3174 = vmatpush1.bf16.msra.mxu0 %v2449
    %3175 = vmatprep.subr.bf16.mxu0 %v2457
    %3176 = vmatpush1.bf16.msra.mxu0 %v2456
    %3177 = vmatprep.subr.bf16.mxu0 %v2464
    %3178 = vmatpush1.bf16.msra.mxu0 %v2463
    %3179 = vmatprep.subr.bf16.mxu0 %v2471
    %3180 = vmatpush1.bf16.msra.mxu0 %v2470
    %3181 = vmatprep.subr.bf16.mxu0 %v2478
    %3182 = vmatpush1.bf16.msra.mxu0 %v2477
    %3183 = vmatprep.subr.bf16.mxu0 %v2485
    %3184 = vmatpush1.bf16.msra.mxu0 %v2484
    %3185 = vmatprep.subr.bf16.mxu0 %v2492
    %3186 = vmatpush1.bf16.msra.mxu0 %v2491
    %3187 = vmatprep.subr.bf16.mxu0 %v2499
    %3188 = vmatpush1.bf16.msra.mxu0 %v2498
    %3189 = vmatprep.subr.bf16.mxu0 %v2506
    %3190 = vmatpush1.bf16.msra.mxu0 %v2505
    %3191 = vmatprep.subr.bf16.mxu0 %v2513
    %3192 = vmatpush1.bf16.msra.mxu0 %v2512
    %3193 = vmatprep.subr.bf16.mxu0 %v2520
    %3194 = vmatpush1.bf16.msra.mxu0 %v2519
    %3195 = vmatprep.subr.bf16.mxu0 %v2527
    %3196 = vmatpush1.bf16.msra.mxu0 %v2526
    %3197 = vmatprep.subr.bf16.mxu0 %v2534
    %3198 = vmatpush1.bf16.msra.mxu0 %v2533
    %3199 = vmatprep.subr.bf16.mxu0 %v2541
    %3200 = vmatpush1.bf16.msra.mxu0 %v2540
    %3201 = vmatprep.subr.bf16.mxu0 %v2548
    %3202 = vmatpush1.bf16.msra.mxu0 %v2547
    %3203 = vmatprep.subr.bf16.mxu0 %v2555
    %3204 = vmatpush1.bf16.msra.mxu0 %v2554
    %3205 = vmatprep.mubr.bf16.mxu0 %v721
    %3206 = vmatmul.mubr.bf16.gmra.mrb[0].mxu0 %v720
    %v3207 = vpop.f32.mrb[0].mxu0
    %v3208 = vadd.f32 %v3167, %v3207
    %v3209 = vpop.f32.mrb[0].mxu0
    %v3210 = vadd.f32 %v3169, %v3209
    %v3211 = vpop.f32.mrb[0].mxu0
    %v3212 = vpop.f32.mrb[0].mxu0
    %3213 = vdwg.mxu0
    %3214 = vmatprep.subr.bf16.mxu0 %v2562
    %3215 = vmatpush1.bf16.msra.mxu0 %v2561
    %3216 = vmatprep.subr.bf16.mxu0 %v2569
    %3217 = vmatpush1.bf16.msra.mxu0 %v2568
    %3218 = vmatprep.subr.bf16.mxu0 0
    %3219 = vmatpush1.bf16.msra.mxu0 0
    %3220 = vmatprep.subr.bf16.mxu0 0
    %3221 = vmatpush1.bf16.msra.mxu0 0
    %3222 = vmatprep.subr.bf16.mxu0 0
    %3223 = vmatpush1.bf16.msra.mxu0 0
    %3224 = vmatprep.subr.bf16.mxu0 0
    %3225 = vmatpush1.bf16.msra.mxu0 0
    %3226 = vmatprep.subr.bf16.mxu0 0
    %3227 = vmatpush1.bf16.msra.mxu0 0
    %3228 = vmatprep.subr.bf16.mxu0 0
    %3229 = vmatpush1.bf16.msra.mxu0 0
    %3230 = vmatprep.subr.bf16.mxu0 0
    %3231 = vmatpush1.bf16.msra.mxu0 0
    %3232 = vmatprep.subr.bf16.mxu0 0
    %3233 = vmatpush1.bf16.msra.mxu0 0
    %3234 = vmatprep.subr.bf16.mxu0 0
    %3235 = vmatpush1.bf16.msra.mxu0 0
    %3236 = vmatprep.subr.bf16.mxu0 0
    %3237 = vmatpush1.bf16.msra.mxu0 0
    %3238 = vmatprep.subr.bf16.mxu0 0
    %3239 = vmatpush1.bf16.msra.mxu0 0
    %3240 = vmatprep.subr.bf16.mxu0 0
    %3241 = vmatpush1.bf16.msra.mxu0 0
    %3242 = vmatprep.subr.bf16.mxu0 0
    %3243 = vmatpush1.bf16.msra.mxu0 0
    %3244 = vmatprep.subr.bf16.mxu0 0
    %3245 = vmatpush1.bf16.msra.mxu0 0
    %3246 = vmatprep.mubr.bf16.mxu0 0
    %3247 = vmatmul.mubr.bf16.gmra.mrb[0].mxu0 %v2925
    %v3248 = vpop.f32.mrb[0].mxu0
    %v3249 = vadd.f32 %v3208, %v3248
    %v3250 = vpop.f32.mrb[0].mxu0
    %v3251 = vadd.f32 %v3210, %v3250
    %v3252 = vpop.f32.mrb[0].mxu0
    %v3253 = vpop.f32.mrb[0].mxu0
    %3254 = vdwg.mxu0
    %3255 = vmatprep.subr.bf16.mxu0 %v2228
    %3256 = vmatpush1.bf16.msra.mxu0 %v2227
    %3257 = vmatprep.subr.bf16.mxu0 %v2235
    %3258 = vmatpush1.bf16.msra.mxu0 %v2234
    %3259 = vmatprep.subr.bf16.mxu0 %v2242
    %3260 = vmatpush1.bf16.msra.mxu0 %v2241
    %3261 = vmatprep.subr.bf16.mxu0 %v2249
    %3262 = vmatpush1.bf16.msra.mxu0 %v2248
    %3263 = vmatprep.subr.bf16.mxu0 %v2256
    %3264 = vmatpush1.bf16.msra.mxu0 %v2255
    %3265 = vmatprep.subr.bf16.mxu0 %v2263
    %3266 = vmatpush1.bf16.msra.mxu0 %v2262
    %3267 = vmatprep.subr.bf16.mxu0 %v2270
    %3268 = vmatpush1.bf16.msra.mxu0 %v2269
    %3269 = vmatprep.subr.bf16.mxu0 %v2277
    %3270 = vmatpush1.bf16.msra.mxu0 %v2276
    %3271 = vmatprep.subr.bf16.mxu0 %v2284
    %3272 = vmatpush1.bf16.msra.mxu0 %v2283
    %3273 = vmatprep.subr.bf16.mxu0 %v2291
    %3274 = vmatpush1.bf16.msra.mxu0 %v2290
    %3275 = vmatprep.subr.bf16.mxu0 %v2298
    %3276 = vmatpush1.bf16.msra.mxu0 %v2297
    %3277 = vmatprep.subr.bf16.mxu0 %v2305
    %3278 = vmatpush1.bf16.msra.mxu0 %v2304
    %3279 = vmatprep.subr.bf16.mxu0 %v2312
    %3280 = vmatpush1.bf16.msra.mxu0 %v2311
    %3281 = vmatprep.subr.bf16.mxu0 %v2319
    %3282 = vmatpush1.bf16.msra.mxu0 %v2318
    %3283 = vmatprep.subr.bf16.mxu0 %v2326
    %3284 = vmatpush1.bf16.msra.mxu0 %v2325
    %3285 = vmatprep.subr.bf16.mxu0 %v2333
    %3286 = vmatpush1.bf16.msra.mxu0 %v2332
    %3287 = vmatprep.mubr.bf16.mxu0 %v717
    %3288 = vmatmul.mubr.bf16.gmra.mrb[0].mxu0 %v716
    %v3289 = vpop.f32.mrb[0].mxu0
    %v3290 = vadd.f32 0.0, %v3289
    %v3291 = vpop.f32.mrb[0].mxu0
    %v3292 = vadd.f32 0.0, %v3291
    %v3293 = vpop.f32.mrb[0].mxu0
    %v3294 = vpop.f32.mrb[0].mxu0
    %3295 = vdwg.mxu0
    %3296 = vmatprep.subr.bf16.mxu0 %v2340
    %3297 = vmatpush1.bf16.msra.mxu0 %v2339
    %3298 = vmatprep.subr.bf16.mxu0 %v2347
    %3299 = vmatpush1.bf16.msra.mxu0 %v2346
    %3300 = vmatprep.subr.bf16.mxu0 %v2354
    %3301 = vmatpush1.bf16.msra.mxu0 %v2353
    %3302 = vmatprep.subr.bf16.mxu0 %v2361
    %3303 = vmatpush1.bf16.msra.mxu0 %v2360
    %3304 = vmatprep.subr.bf16.mxu0 %v2368
    %3305 = vmatpush1.bf16.msra.mxu0 %v2367
    %3306 = vmatprep.subr.bf16.mxu0 %v2375
    %3307 = vmatpush1.bf16.msra.mxu0 %v2374
    %3308 = vmatprep.subr.bf16.mxu0 %v2382
    %3309 = vmatpush1.bf16.msra.mxu0 %v2381
    %3310 = vmatprep.subr.bf16.mxu0 %v2389
    %3311 = vmatpush1.bf16.msra.mxu0 %v2388
    %3312 = vmatprep.subr.bf16.mxu0 %v2396
    %3313 = vmatpush1.bf16.msra.mxu0 %v2395
    %3314 = vmatprep.subr.bf16.mxu0 %v2403
    %3315 = vmatpush1.bf16.msra.mxu0 %v2402
    %3316 = vmatprep.subr.bf16.mxu0 %v2410
    %3317 = vmatpush1.bf16.msra.mxu0 %v2409
    %3318 = vmatprep.subr.bf16.mxu0 %v2417
    %3319 = vmatpush1.bf16.msra.mxu0 %v2416
    %3320 = vmatprep.subr.bf16.mxu0 %v2424
    %3321 = vmatpush1.bf16.msra.mxu0 %v2423
    %3322 = vmatprep.subr.bf16.mxu0 %v2431
    %3323 = vmatpush1.bf16.msra.mxu0 %v2430
    %3324 = vmatprep.subr.bf16.mxu0 %v2438
    %3325 = vmatpush1.bf16.msra.mxu0 %v2437
    %3326 = vmatprep.subr.bf16.mxu0 %v2445
    %3327 = vmatpush1.bf16.msra.mxu0 %v2444
    %3328 = vmatprep.mubr.bf16.mxu0 %v719
    %3329 = vmatmul.mubr.bf16.gmra.mrb[0].mxu0 %v718
    %v3330 = vpop.f32.mrb[0].mxu0
    %v3331 = vadd.f32 %v3290, %v3330
    %v3332 = vpop.f32.mrb[0].mxu0
    %v3333 = vadd.f32 %v3292, %v3332
    %v3334 = vpop.f32.mrb[0].mxu0
    %v3335 = vpop.f32.mrb[0].mxu0
    %3336 = vdwg.mxu0
    %3337 = vmatprep.subr.bf16.mxu0 %v2452
    %3338 = vmatpush1.bf16.msra.mxu0 %v2451
    %3339 = vmatprep.subr.bf16.mxu0 %v2459
    %3340 = vmatpush1.bf16.msra.mxu0 %v2458
    %3341 = vmatprep.subr.bf16.mxu0 %v2466
    %3342 = vmatpush1.bf16.msra.mxu0 %v2465
    %3343 = vmatprep.subr.bf16.mxu0 %v2473
    %3344 = vmatpush1.bf16.msra.mxu0 %v2472
    %3345 = vmatprep.subr.bf16.mxu0 %v2480
    %3346 = vmatpush1.bf16.msra.mxu0 %v2479
    %3347 = vmatprep.subr.bf16.mxu0 %v2487
    %3348 = vmatpush1.bf16.msra.mxu0 %v2486
    %3349 = vmatprep.subr.bf16.mxu0 %v2494
    %3350 = vmatpush1.bf16.msra.mxu0 %v2493
    %3351 = vmatprep.subr.bf16.mxu0 %v2501
    %3352 = vmatpush1.bf16.msra.mxu0 %v2500
    %3353 = vmatprep.subr.bf16.mxu0 %v2508
    %3354 = vmatpush1.bf16.msra.mxu0 %v2507
    %3355 = vmatprep.subr.bf16.mxu0 %v2515
    %3356 = vmatpush1.bf16.msra.mxu0 %v2514
    %3357 = vmatprep.subr.bf16.mxu0 %v2522
    %3358 = vmatpush1.bf16.msra.mxu0 %v2521
    %3359 = vmatprep.subr.bf16.mxu0 %v2529
    %3360 = vmatpush1.bf16.msra.mxu0 %v2528
    %3361 = vmatprep.subr.bf16.mxu0 %v2536
    %3362 = vmatpush1.bf16.msra.mxu0 %v2535
    %3363 = vmatprep.subr.bf16.mxu0 %v2543
    %3364 = vmatpush1.bf16.msra.mxu0 %v2542
    %3365 = vmatprep.subr.bf16.mxu0 %v2550
    %3366 = vmatpush1.bf16.msra.mxu0 %v2549
    %3367 = vmatprep.subr.bf16.mxu0 %v2557
    %3368 = vmatpush1.bf16.msra.mxu0 %v2556
    %3369 = vmatprep.mubr.bf16.mxu0 %v721
    %3370 = vmatmul.mubr.bf16.gmra.mrb[0].mxu0 %v720
    %v3371 = vpop.f32.mrb[0].mxu0
    %v3372 = vadd.f32 %v3331, %v3371
    %v3373 = vpop.f32.mrb[0].mxu0
    %v3374 = vadd.f32 %v3333, %v3373
    %v3375 = vpop.f32.mrb[0].mxu0
    %v3376 = vpop.f32.mrb[0].mxu0
    %3377 = vdwg.mxu0
    %3378 = vmatprep.subr.bf16.mxu0 %v2564
    %3379 = vmatpush1.bf16.msra.mxu0 %v2563
    %3380 = vmatprep.subr.bf16.mxu0 %v2571
    %3381 = vmatpush1.bf16.msra.mxu0 %v2570
    %3382 = vmatprep.subr.bf16.mxu0 0
    %3383 = vmatpush1.bf16.msra.mxu0 0
    %3384 = vmatprep.subr.bf16.mxu0 0
    %3385 = vmatpush1.bf16.msra.mxu0 0
    %3386 = vmatprep.subr.bf16.mxu0 0
    %3387 = vmatpush1.bf16.msra.mxu0 0
    %3388 = vmatprep.subr.bf16.mxu0 0
    %3389 = vmatpush1.bf16.msra.mxu0 0
    %3390 = vmatprep.subr.bf16.mxu0 0
    %3391 = vmatpush1.bf16.msra.mxu0 0
    %3392 = vmatprep.subr.bf16.mxu0 0
    %3393 = vmatpush1.bf16.msra.mxu0 0
    %3394 = vmatprep.subr.bf16.mxu0 0
    %3395 = vmatpush1.bf16.msra.mxu0 0
    %3396 = vmatprep.subr.bf16.mxu0 0
    %3397 = vmatpush1.bf16.msra.mxu0 0
    %3398 = vmatprep.subr.bf16.mxu0 0
    %3399 = vmatpush1.bf16.msra.mxu0 0
    %3400 = vmatprep.subr.bf16.mxu0 0
    %3401 = vmatpush1.bf16.msra.mxu0 0
    %3402 = vmatprep.subr.bf16.mxu0 0
    %3403 = vmatpush1.bf16.msra.mxu0 0
    %3404 = vmatprep.subr.bf16.mxu0 0
    %3405 = vmatpush1.bf16.msra.mxu0 0
    %3406 = vmatprep.subr.bf16.mxu0 0
    %3407 = vmatpush1.bf16.msra.mxu0 0
    %3408 = vmatprep.subr.bf16.mxu0 0
    %3409 = vmatpush1.bf16.msra.mxu0 0
    %3410 = vmatprep.mubr.bf16.mxu0 0
    %3411 = vmatmul.mubr.bf16.gmra.mrb[0].mxu0 %v2925
    %v3412 = vpop.f32.mrb[0].mxu0
    %v3413 = vadd.f32 %v3372, %v3412
    %v3414 = vpop.f32.mrb[0].mxu0
    %v3415 = vadd.f32 %v3374, %v3414
    %v3416 = vpop.f32.mrb[0].mxu0
    %v3417 = vpop.f32.mrb[0].mxu0
    %3418 = vdwg.mxu0
    %3419 = vmatprep.subr.bf16.mxu0 0
    %3420 = vmatpush1.bf16.msra.mxu0 %v2229
    %3421 = vmatprep.subr.bf16.mxu0 0
    %3422 = vmatpush1.bf16.msra.mxu0 %v2236
    %3423 = vmatprep.subr.bf16.mxu0 0
    %3424 = vmatpush1.bf16.msra.mxu0 %v2243
    %3425 = vmatprep.subr.bf16.mxu0 0
    %3426 = vmatpush1.bf16.msra.mxu0 %v2250
    %3427 = vmatprep.subr.bf16.mxu0 0
    %3428 = vmatpush1.bf16.msra.mxu0 %v2257
    %3429 = vmatprep.subr.bf16.mxu0 0
    %3430 = vmatpush1.bf16.msra.mxu0 %v2264
    %3431 = vmatprep.subr.bf16.mxu0 0
    %3432 = vmatpush1.bf16.msra.mxu0 %v2271
    %3433 = vmatprep.subr.bf16.mxu0 0
    %3434 = vmatpush1.bf16.msra.mxu0 %v2278
    %3435 = vmatprep.subr.bf16.mxu0 0
    %3436 = vmatpush1.bf16.msra.mxu0 %v2285
    %3437 = vmatprep.subr.bf16.mxu0 0
    %3438 = vmatpush1.bf16.msra.mxu0 %v2292
    %3439 = vmatprep.subr.bf16.mxu0 0
    %3440 = vmatpush1.bf16.msra.mxu0 %v2299
    %3441 = vmatprep.subr.bf16.mxu0 0
    %3442 = vmatpush1.bf16.msra.mxu0 %v2306
    %3443 = vmatprep.subr.bf16.mxu0 0
    %3444 = vmatpush1.bf16.msra.mxu0 %v2313
    %3445 = vmatprep.subr.bf16.mxu0 0
    %3446 = vmatpush1.bf16.msra.mxu0 %v2320
    %3447 = vmatprep.subr.bf16.mxu0 0
    %3448 = vmatpush1.bf16.msra.mxu0 %v2327
    %3449 = vmatprep.subr.bf16.mxu0 0
    %3450 = vmatpush1.bf16.msra.mxu0 %v2334
    %3451 = vmatprep.mubr.bf16.mxu0 %v717
    %3452 = vmatmul.mubr.bf16.gmra.mrb[0].mxu0 %v716
    %v3453 = vpop.f32.mrb[0].mxu0
    %v3454 = vadd.f32 0.0, %v3453
    %v3455 = vpop.f32.mrb[0].mxu0
    %v3456 = vpop.f32.mrb[0].mxu0
    %v3457 = vpop.f32.mrb[0].mxu0
    %3458 = vdwg.mxu0
    %3459 = vmatprep.subr.bf16.mxu0 0
    %3460 = vmatpush1.bf16.msra.mxu0 %v2341
    %3461 = vmatprep.subr.bf16.mxu0 0
    %3462 = vmatpush1.bf16.msra.mxu0 %v2348
    %3463 = vmatprep.subr.bf16.mxu0 0
    %3464 = vmatpush1.bf16.msra.mxu0 %v2355
    %3465 = vmatprep.subr.bf16.mxu0 0
    %3466 = vmatpush1.bf16.msra.mxu0 %v2362
    %3467 = vmatprep.subr.bf16.mxu0 0
    %3468 = vmatpush1.bf16.msra.mxu0 %v2369
    %3469 = vmatprep.subr.bf16.mxu0 0
    %3470 = vmatpush1.bf16.msra.mxu0 %v2376
    %3471 = vmatprep.subr.bf16.mxu0 0
    %3472 = vmatpush1.bf16.msra.mxu0 %v2383
    %3473 = vmatprep.subr.bf16.mxu0 0
    %3474 = vmatpush1.bf16.msra.mxu0 %v2390
    %3475 = vmatprep.subr.bf16.mxu0 0
    %3476 = vmatpush1.bf16.msra.mxu0 %v2397
    %3477 = vmatprep.subr.bf16.mxu0 0
    %3478 = vmatpush1.bf16.msra.mxu0 %v2404
    %3479 = vmatprep.subr.bf16.mxu0 0
    %3480 = vmatpush1.bf16.msra.mxu0 %v2411
    %3481 = vmatprep.subr.bf16.mxu0 0
    %3482 = vmatpush1.bf16.msra.mxu0 %v2418
    %3483 = vmatprep.subr.bf16.mxu0 0
    %3484 = vmatpush1.bf16.msra.mxu0 %v2425
    %3485 = vmatprep.subr.bf16.mxu0 0
    %3486 = vmatpush1.bf16.msra.mxu0 %v2432
    %3487 = vmatprep.subr.bf16.mxu0 0
    %3488 = vmatpush1.bf16.msra.mxu0 %v2439
    %3489 = vmatprep.subr.bf16.mxu0 0
    %3490 = vmatpush1.bf16.msra.mxu0 %v2446
    %3491 = vmatprep.mubr.bf16.mxu0 %v719
    %3492 = vmatmul.mubr.bf16.gmra.mrb[0].mxu0 %v718
    %v3493 = vpop.f32.mrb[0].mxu0
    %v3494 = vadd.f32 %v3454, %v3493
    %v3495 = vpop.f32.mrb[0].mxu0
    %v3496 = vpop.f32.mrb[0].mxu0
    %v3497 = vpop.f32.mrb[0].mxu0
    %3498 = vdwg.mxu0
    %3499 = vmatprep.subr.bf16.mxu0 0
    %3500 = vmatpush1.bf16.msra.mxu0 %v2453
    %3501 = vmatprep.subr.bf16.mxu0 0
    %3502 = vmatpush1.bf16.msra.mxu0 %v2460
    %3503 = vmatprep.subr.bf16.mxu0 0
    %3504 = vmatpush1.bf16.msra.mxu0 %v2467
    %3505 = vmatprep.subr.bf16.mxu0 0
    %3506 = vmatpush1.bf16.msra.mxu0 %v2474
    %3507 = vmatprep.subr.bf16.mxu0 0
    %3508 = vmatpush1.bf16.msra.mxu0 %v2481
    %3509 = vmatprep.subr.bf16.mxu0 0
    %3510 = vmatpush1.bf16.msra.mxu0 %v2488
    %3511 = vmatprep.subr.bf16.mxu0 0
    %3512 = vmatpush1.bf16.msra.mxu0 %v2495
    %3513 = vmatprep.subr.bf16.mxu0 0
    %3514 = vmatpush1.bf16.msra.mxu0 %v2502
    %3515 = vmatprep.subr.bf16.mxu0 0
    %3516 = vmatpush1.bf16.msra.mxu0 %v2509
    %3517 = vmatprep.subr.bf16.mxu0 0
    %3518 = vmatpush1.bf16.msra.mxu0 %v2516
    %3519 = vmatprep.subr.bf16.mxu0 0
    %3520 = vmatpush1.bf16.msra.mxu0 %v2523
    %3521 = vmatprep.subr.bf16.mxu0 0
    %3522 = vmatpush1.bf16.msra.mxu0 %v2530
    %3523 = vmatprep.subr.bf16.mxu0 0
    %3524 = vmatpush1.bf16.msra.mxu0 %v2537
    %3525 = vmatprep.subr.bf16.mxu0 0
    %3526 = vmatpush1.bf16.msra.mxu0 %v2544
    %3527 = vmatprep.subr.bf16.mxu0 0
    %3528 = vmatpush1.bf16.msra.mxu0 %v2551
    %3529 = vmatprep.subr.bf16.mxu0 0
    %3530 = vmatpush1.bf16.msra.mxu0 %v2558
    %3531 = vmatprep.mubr.bf16.mxu0 %v721
    %3532 = vmatmul.mubr.bf16.gmra.mrb[0].mxu0 %v720
    %v3533 = vpop.f32.mrb[0].mxu0
    %v3534 = vadd.f32 %v3494, %v3533
    %v3535 = vpop.f32.mrb[0].mxu0
    %v3536 = vpop.f32.mrb[0].mxu0
    %v3537 = vpop.f32.mrb[0].mxu0
    %3538 = vdwg.mxu0
    %3539 = vmatprep.subr.bf16.mxu0 0
    %3540 = vmatpush1.bf16.msra.mxu0 %v2565
    %3541 = vmatprep.subr.bf16.mxu0 0
    %3542 = vmatpush1.bf16.msra.mxu0 %v2572
    %3543 = vmatprep.subr.bf16.mxu0 0
    %3544 = vmatpush1.bf16.msra.mxu0 0
    %3545 = vmatprep.subr.bf16.mxu0 0
    %3546 = vmatpush1.bf16.msra.mxu0 0
    %3547 = vmatprep.subr.bf16.mxu0 0
    %3548 = vmatpush1.bf16.msra.mxu0 0
    %3549 = vmatprep.subr.bf16.mxu0 0
    %3550 = vmatpush1.bf16.msra.mxu0 0
    %3551 = vmatprep.subr.bf16.mxu0 0
    %3552 = vmatpush1.bf16.msra.mxu0 0
    %3553 = vmatprep.subr.bf16.mxu0 0
    %3554 = vmatpush1.bf16.msra.mxu0 0
    %3555 = vmatprep.subr.bf16.mxu0 0
    %3556 = vmatpush1.bf16.msra.mxu0 0
    %3557 = vmatprep.subr.bf16.mxu0 0
    %3558 = vmatpush1.bf16.msra.mxu0 0
    %3559 = vmatprep.subr.bf16.mxu0 0
    %3560 = vmatpush1.bf16.msra.mxu0 0
    %3561 = vmatprep.subr.bf16.mxu0 0
    %3562 = vmatpush1.bf16.msra.mxu0 0
    %3563 = vmatprep.subr.bf16.mxu0 0
    %3564 = vmatpush1.bf16.msra.mxu0 0
    %3565 = vmatprep.subr.bf16.mxu0 0
    %3566 = vmatpush1.bf16.msra.mxu0 0
    %3567 = vmatprep.subr.bf16.mxu0 0
    %3568 = vmatpush1.bf16.msra.mxu0 0
    %3569 = vmatprep.subr.bf16.mxu0 0
    %3570 = vmatpush1.bf16.msra.mxu0 0
    %3571 = vmatprep.mubr.bf16.mxu0 0
    %3572 = vmatmul.mubr.bf16.gmra.mrb[0].mxu0 %v2925
    %v3573 = vpop.f32.mrb[0].mxu0
    %v3574 = vadd.f32 %v3534, %v3573
    %v3575 = vpop.f32.mrb[0].mxu0
    %v3576 = vpop.f32.mrb[0].mxu0
    %v3577 = vpop.f32.mrb[0].mxu0
    %3578 = vdwg.mxu0
    %v3579 = vld [vmem:[#allocation11] sm:$0x7f]
    %v3580 = vld [vmem:[#allocation13] sm:$0x7f]
    %v3581 = vsel %vm346, %v3085, 0.0
    %v3582 = vrot.slane %v3581, 4
    %v3583 = vadd.f32 %v3581, %v3582
    %v3584 = vrot.slane %v3583, 2
    %v3585 = vadd.f32 %v3583, %v3584
    %v3586 = vrot.slane %v3585, 1
    %v3587 = vadd.f32 %v3585, %v3586
    %v3588 = vsel %vm346, %v3087, 0.0
    %v3589 = vrot.slane %v3588, 4
    %v3590 = vadd.f32 %v3588, %v3589
    %v3591 = vrot.slane %v3590, 2
    %v3592 = vadd.f32 %v3590, %v3591
    %v3593 = vrot.slane %v3592, 1
    %v3594 = vadd.f32 %v3592, %v3593
    %v3595 = vsel %vm346, %v3249, 0.0
    %v3596 = vrot.slane %v3595, 4
    %v3597 = vadd.f32 %v3595, %v3596
    %v3598 = vrot.slane %v3597, 2
    %v3599 = vadd.f32 %v3597, %v3598
    %v3600 = vrot.slane %v3599, 1
    %v3601 = vadd.f32 %v3599, %v3600
    %v3602 = vsel %vm346, %v3251, 0.0
    %v3603 = vrot.slane %v3602, 4
    %v3604 = vadd.f32 %v3602, %v3603
    %v3605 = vrot.slane %v3604, 2
    %v3606 = vadd.f32 %v3604, %v3605
    %v3607 = vrot.slane %v3606, 1
    %v3608 = vadd.f32 %v3606, %v3607
    %v3609 = vsel %vm346, %v3413, 0.0
    %v3610 = vrot.slane %v3609, 4
    %v3611 = vadd.f32 %v3609, %v3610
    %v3612 = vrot.slane %v3611, 2
    %v3613 = vadd.f32 %v3611, %v3612
    %v3614 = vrot.slane %v3613, 1
    %v3615 = vadd.f32 %v3613, %v3614
    %v3616 = vsel %vm346, %v3415, 0.0
    %v3617 = vrot.slane %v3616, 4
    %v3618 = vadd.f32 %v3616, %v3617
    %v3619 = vrot.slane %v3618, 2
    %v3620 = vadd.f32 %v3618, %v3619
    %v3621 = vrot.slane %v3620, 1
    %v3622 = vadd.f32 %v3620, %v3621
    %v3623 = vsel %vm389, %v3574, 0.0
    %v3624 = vrot.slane %v3623, 4
    %v3625 = vadd.f32 %v3623, %v3624
    %v3626 = vrot.slane %v3625, 2
    %v3627 = vadd.f32 %v3625, %v3626
    %v3628 = vrot.slane %v3627, 1
    %v3629 = vadd.f32 %v3627, %v3628
    %v3630 = vmul.f32 %v3587, 0.25
    %v3631 = vmul.f32 %v3594, 0.25
    %v3632 = vmul.f32 %v3601, 0.25
    %v3633 = vmul.f32 %v3608, 0.25
    %v3634 = vmul.f32 %v3615, 0.25
    %v3635 = vmul.f32 %v3622, 0.25
    %v3636 = vmul.f32 %v3629, 0.25
    %v3637 = vmul.f32 %v3085, %v3085
    %v3638 = vmul.f32 %v3087, %v3087
    %v3639 = vmul.f32 %v3249, %v3249
    %v3640 = vmul.f32 %v3251, %v3251
    %v3641 = vmul.f32 %v3413, %v3413
    %v3642 = vmul.f32 %v3415, %v3415
    %v3643 = vmul.f32 %v3574, %v3574
    %v3644 = vsel %vm346, %v3637, 0.0
    %v3645 = vrot.slane %v3644, 4
    %v3646 = vadd.f32 %v3644, %v3645
    %v3647 = vrot.slane %v3646, 2
    %v3648 = vadd.f32 %v3646, %v3647
    %v3649 = vrot.slane %v3648, 1
    %v3650 = vadd.f32 %v3648, %v3649
    %v3651 = vsel %vm346, %v3638, 0.0
    %v3652 = vrot.slane %v3651, 4
    %v3653 = vadd.f32 %v3651, %v3652
    %v3654 = vrot.slane %v3653, 2
    %v3655 = vadd.f32 %v3653, %v3654
    %v3656 = vrot.slane %v3655, 1
    %v3657 = vadd.f32 %v3655, %v3656
    %v3658 = vsel %vm346, %v3639, 0.0
    %v3659 = vrot.slane %v3658, 4
    %v3660 = vadd.f32 %v3658, %v3659
    %v3661 = vrot.slane %v3660, 2
    %v3662 = vadd.f32 %v3660, %v3661
    %v3663 = vrot.slane %v3662, 1
    %v3664 = vadd.f32 %v3662, %v3663
    %v3665 = vsel %vm346, %v3640, 0.0
    %v3666 = vrot.slane %v3665, 4
    %v3667 = vadd.f32 %v3665, %v3666
    %v3668 = vrot.slane %v3667, 2
    %v3669 = vadd.f32 %v3667, %v3668
    %v3670 = vrot.slane %v3669, 1
    %v3671 = vadd.f32 %v3669, %v3670
    %v3672 = vsel %vm346, %v3641, 0.0
    %v3673 = vrot.slane %v3672, 4
    %v3674 = vadd.f32 %v3672, %v3673
    %v3675 = vrot.slane %v3674, 2
    %v3676 = vadd.f32 %v3674, %v3675
    %v3677 = vrot.slane %v3676, 1
    %v3678 = vadd.f32 %v3676, %v3677
    %v3679 = vsel %vm346, %v3642, 0.0
    %v3680 = vrot.slane %v3679, 4
    %v3681 = vadd.f32 %v3679, %v3680
    %v3682 = vrot.slane %v3681, 2
    %v3683 = vadd.f32 %v3681, %v3682
    %v3684 = vrot.slane %v3683, 1
    %v3685 = vadd.f32 %v3683, %v3684
    %v3686 = vsel %vm389, %v3643, 0.0
    %v3687 = vrot.slane %v3686, 4
    %v3688 = vadd.f32 %v3686, %v3687
    %v3689 = vrot.slane %v3688, 2
    %v3690 = vadd.f32 %v3688, %v3689
    %v3691 = vrot.slane %v3690, 1
    %v3692 = vadd.f32 %v3690, %v3691
    %v3693 = vmul.f32 %v3650, 0.25
    %v3694 = vmul.f32 %v3657, 0.25
    %v3695 = vmul.f32 %v3664, 0.25
    %v3696 = vmul.f32 %v3671, 0.25
    %v3697 = vmul.f32 %v3678, 0.25
    %v3698 = vmul.f32 %v3685, 0.25
    %v3699 = vmul.f32 %v3692, 0.25
    %v3700 = vmul.f32 %v3630, %v3630
    %v3701 = vmul.f32 %v3631, %v3631
    %v3702 = vmul.f32 %v3632, %v3632
    %v3703 = vmul.f32 %v3633, %v3633
    %v3704 = vmul.f32 %v3634, %v3634
    %v3705 = vmul.f32 %v3635, %v3635
    %v3706 = vmul.f32 %v3636, %v3636
    %v3707 = vsub.f32 %v3693, %v3700
    %v3708 = vsub.f32 %v3694, %v3701
    %v3709 = vsub.f32 %v3695, %v3702
    %v3710 = vsub.f32 %v3696, %v3703
    %v3711 = vsub.f32 %v3697, %v3704
    %v3712 = vsub.f32 %v3698, %v3705
    %v3713 = vsub.f32 %v3699, %v3706
    %v3714 = vmax.f32 %v3707, 0.0
    %v3715 = vmax.f32 %v3708, 0.0
    %v3716 = vmax.f32 %v3709, 0.0
    %v3717 = vmax.f32 %v3710, 0.0
    %v3718 = vmax.f32 %v3711, 0.0
    %v3719 = vmax.f32 %v3712, 0.0
    %v3720 = vmax.f32 %v3713, 0.0
    %v3721 = vadd.f32 %v3714, 1e-05
    %v3722 = vadd.f32 %v3715, 1e-05
    %v3723 = vadd.f32 %v3716, 1e-05
    %v3724 = vadd.f32 %v3717, 1e-05
    %v3725 = vadd.f32 %v3718, 1e-05
    %v3726 = vadd.f32 %v3719, 1e-05
    %v3727 = vadd.f32 %v3720, 1e-05
    %v3728 = vrsqrt.pop %v3721
    %v3729 = vrsqrt.pop %v3722
    %v3730 = vrsqrt.pop %v3723
    %v3731 = vrsqrt.pop %v3724
    %v3732 = vrsqrt.pop %v3725
    %v3733 = vrsqrt.pop %v3726
    %v3734 = vrsqrt.pop %v3727
    %v3742 = vcombine.low %v3728, %v3729
    %v3743 = vcombine.low %v3730, %v3731
    %v3744 = vcombine.low %v3732, %v3733
    %v3746 = vunpack.c.l.s4 1966171168
    %v3747 = vunpack.c.0.s8 %v3746
    %v3748 = vlaneseq
    %v3749 = vshrl.u32 %v3748, 7
    %v3750 = vsub.s32 %v3747, %v3749
    %v3751 = vrot.slane %v3742, %v3750
    %v3753 = vunpack.c.l.s4 1966171168
    %v3754 = vunpack.c.0.s8 %v3753
    %v3755 = vlaneseq
    %v3756 = vshrl.u32 %v3755, 7
    %v3757 = vsub.s32 %v3754, %v3756
    %v3758 = vrot.slane %v3743, %v3757
    %v3760 = vunpack.c.l.s4 1966171168
    %v3761 = vunpack.c.0.s8 %v3760
    %v3762 = vlaneseq
    %v3763 = vshrl.u32 %v3762, 7
    %v3764 = vsub.s32 %v3761, %v3763
    %v3765 = vrot.slane %v3744, %v3764
    %v3767 = vunpack.c.l.s4 1966171168
    %v3768 = vunpack.c.0.s8 %v3767
    %v3769 = vlaneseq
    %v3770 = vshrl.u32 %v3769, 7
    %v3771 = vsub.s32 %v3768, %v3770
    %v3772 = vrot.slane %v3734, %v3771
    %v3773 = vcombine.low %v3751, %v3758
    %v3774 = vcombine.low %v3765, %v3772
    %v3776 = vunpack.c.l.s4 1966171168
    %v3777 = vunpack.c.0.s8 %v3776
    %v3778 = vlaneseq
    %v3779 = vshrl.u32 %v3778, 7
    %v3780 = vsub.s32 %v3777, %v3779
    %v3781 = vrot.slane %v3773, %v3780
    %v3783 = vunpack.c.l.s4 1966171168
    %v3784 = vunpack.c.0.s8 %v3783
    %v3785 = vlaneseq
    %v3786 = vshrl.u32 %v3785, 7
    %v3787 = vsub.s32 %v3784, %v3786
    %v3788 = vrot.slane %v3774, %v3787
    %v3789 = vcombine.low %v3781, %v3788
    %v3791 = vmul.f32 %v3579, %v3789
    %v3793 = vlaneseq
    %v3794 = vshrl.u32 %v3793, 7
    %v3795 = vsub.s32 0, %v3794
    %v3796 = vrot.slane %v3791, %v3795
    %v3797 = vlaneseq
    %v3798 = vshrl.u32 %v3797, 7
    %v3799 = vsub.s32 1, %v3798
    %v3800 = vrot.slane %v3791, %v3799
    %v3801 = vlaneseq
    %v3802 = vshrl.u32 %v3801, 7
    %v3803 = vsub.s32 2, %v3802
    %v3804 = vrot.slane %v3791, %v3803
    %v3805 = vlaneseq
    %v3806 = vshrl.u32 %v3805, 7
    %v3807 = vsub.s32 3, %v3806
    %v3808 = vrot.slane %v3791, %v3807
    %v3809 = vlaneseq
    %v3810 = vshrl.u32 %v3809, 7
    %v3811 = vsub.s32 4, %v3810
    %v3812 = vrot.slane %v3791, %v3811
    %v3813 = vlaneseq
    %v3814 = vshrl.u32 %v3813, 7
    %v3815 = vsub.s32 5, %v3814
    %v3816 = vrot.slane %v3791, %v3815
    %v3817 = vlaneseq
    %v3818 = vshrl.u32 %v3817, 7
    %v3819 = vsub.s32 6, %v3818
    %v3820 = vrot.slane %v3791, %v3819
    %v3828 = vmul.f32 %v3630, %v3796
    %v3829 = vmul.f32 %v3631, %v3800
    %v3830 = vmul.f32 %v3632, %v3804
    %v3831 = vmul.f32 %v3633, %v3808
    %v3832 = vmul.f32 %v3634, %v3812
    %v3833 = vmul.f32 %v3635, %v3816
    %v3834 = vmul.f32 %v3636, %v3820
    %v3842 = vcombine.low %v3828, %v3829
    %v3843 = vcombine.low %v3830, %v3831
    %v3844 = vcombine.low %v3832, %v3833
    %v3846 = vunpack.c.l.s4 1966171168
    %v3847 = vunpack.c.0.s8 %v3846
    %v3848 = vlaneseq
    %v3849 = vshrl.u32 %v3848, 7
    %v3850 = vsub.s32 %v3847, %v3849
    %v3851 = vrot.slane %v3842, %v3850
    %v3853 = vunpack.c.l.s4 1966171168
    %v3854 = vunpack.c.0.s8 %v3853
    %v3855 = vlaneseq
    %v3856 = vshrl.u32 %v3855, 7
    %v3857 = vsub.s32 %v3854, %v3856
    %v3858 = vrot.slane %v3843, %v3857
    %v3860 = vunpack.c.l.s4 1966171168
    %v3861 = vunpack.c.0.s8 %v3860
    %v3862 = vlaneseq
    %v3863 = vshrl.u32 %v3862, 7
    %v3864 = vsub.s32 %v3861, %v3863
    %v3865 = vrot.slane %v3844, %v3864
    %v3867 = vunpack.c.l.s4 1966171168
    %v3868 = vunpack.c.0.s8 %v3867
    %v3869 = vlaneseq
    %v3870 = vshrl.u32 %v3869, 7
    %v3871 = vsub.s32 %v3868, %v3870
    %v3872 = vrot.slane %v3834, %v3871
    %v3873 = vcombine.low %v3851, %v3858
    %v3874 = vcombine.low %v3865, %v3872
    %v3876 = vunpack.c.l.s4 1966171168
    %v3877 = vunpack.c.0.s8 %v3876
    %v3878 = vlaneseq
    %v3879 = vshrl.u32 %v3878, 7
    %v3880 = vsub.s32 %v3877, %v3879
    %v3881 = vrot.slane %v3873, %v3880
    %v3883 = vunpack.c.l.s4 1966171168
    %v3884 = vunpack.c.0.s8 %v3883
    %v3885 = vlaneseq
    %v3886 = vshrl.u32 %v3885, 7
    %v3887 = vsub.s32 %v3884, %v3886
    %v3888 = vrot.slane %v3874, %v3887
    %v3889 = vcombine.low %v3881, %v3888
    %v3891 = vsub.f32 %v3580, %v3889
    %v3892 = vmul.f32 %v3085, %v3796
    %v3893 = vmul.f32 %v3087, %v3800
    %v3894 = vmul.f32 %v3249, %v3804
    %v3895 = vmul.f32 %v3251, %v3808
    %v3896 = vmul.f32 %v3413, %v3812
    %v3897 = vmul.f32 %v3415, %v3816
    %v3898 = vmul.f32 %v3574, %v3820
    %v3900 = vlaneseq
    %v3901 = vshrl.u32 %v3900, 7
    %v3902 = vsub.s32 0, %v3901
    %v3903 = vrot.slane %v3891, %v3902
    %v3904 = vlaneseq
    %v3905 = vshrl.u32 %v3904, 7
    %v3906 = vsub.s32 1, %v3905
    %v3907 = vrot.slane %v3891, %v3906
    %v3908 = vlaneseq
    %v3909 = vshrl.u32 %v3908, 7
    %v3910 = vsub.s32 2, %v3909
    %v3911 = vrot.slane %v3891, %v3910
    %v3912 = vlaneseq
    %v3913 = vshrl.u32 %v3912, 7
    %v3914 = vsub.s32 3, %v3913
    %v3915 = vrot.slane %v3891, %v3914
    %v3916 = vlaneseq
    %v3917 = vshrl.u32 %v3916, 7
    %v3918 = vsub.s32 4, %v3917
    %v3919 = vrot.slane %v3891, %v3918
    %v3920 = vlaneseq
    %v3921 = vshrl.u32 %v3920, 7
    %v3922 = vsub.s32 5, %v3921
    %v3923 = vrot.slane %v3891, %v3922
    %v3924 = vlaneseq
    %v3925 = vshrl.u32 %v3924, 7
    %v3926 = vsub.s32 6, %v3925
    %v3927 = vrot.slane %v3891, %v3926
    %v3935 = vadd.f32 %v3892, %v3903
    %v3936 = vadd.f32 %v3893, %v3907
    %v3937 = vadd.f32 %v3894, %v3911
    %v3938 = vadd.f32 %v3895, %v3915
    %v3939 = vadd.f32 %v3896, %v3919
    %v3940 = vadd.f32 %v3897, %v3923
    %v3941 = vadd.f32 %v3898, %v3927
    %v3942 = vmax.f32 %v3935, 0.0
    %v3943 = vmax.f32 %v3936, 0.0
    %v3944 = vmax.f32 %v3937, 0.0
    %v3945 = vmax.f32 %v3938, 0.0
    %v3946 = vmax.f32 %v3939, 0.0
    %v3947 = vmax.f32 %v3940, 0.0
    %v3948 = vmax.f32 %v3941, 0.0
    %v3949 = vpack.c.bf16 %v3942, %v3942
    %v3950 = vpack.c.bf16 %v3943, %v3943
    %v3951 = vpack.c.bf16 %v3944, %v3944
    %v3952 = vpack.c.bf16 %v3945, %v3945
    %v3953 = vpack.c.bf16 %v3946, %v3946
    %v3954 = vpack.c.bf16 %v3947, %v3947
    %v3955 = vpack.c.bf16 %v3948, %v3948
    %v3956 = vld [vmem:[%s7] sm:$0xf]
    %v3957 = vld [vmem:[%s7 + $0x4] sm:$0xf]
    %v3958 = vld [vmem:[%s7 + $0x8] sm:$0xf]
    %v3959 = vld [vmem:[%s7 + $0xc] sm:$0xf]
    %v3960 = vld [vmem:[%s7 + $0x10] sm:$0xf]
    %v3961 = vld [vmem:[%s7 + $0x14] sm:$0xf]
    %v3962 = vld [vmem:[%s7 + $0x18] sm:$0xf]
    %v3963 = vld [vmem:[%s7 + $0x1c] sm:$0xf]
    %v3964 = vld [vmem:[%s7 + $0x20] sm:$0xf]
    %v3965 = vld [vmem:[%s7 + $0x24] sm:$0xf]
    %v3966 = vld [vmem:[%s7 + $0x28] sm:$0xf]
    %v3967 = vld [vmem:[%s7 + $0x2c] sm:$0xf]
    %v3968 = vld [vmem:[%s7 + $0x30] sm:$0xf]
    %v3969 = vld [vmem:[%s7 + $0x34] sm:$0xf]
    %v3970 = vld [vmem:[%s7 + $0x38] sm:$0xf]
    %v3971 = vld [vmem:[%s7 + $0x3c] sm:$0xf]
    %v3972 = vld [vmem:[%s7 + $0x40] sm:$0xf]
    %v3973 = vld [vmem:[%s7 + $0x44] sm:$0xf]
    %v3974 = vld [vmem:[%s7 + $0x48] sm:$0xf]
    %v3975 = vld [vmem:[%s7 + $0x4c] sm:$0xf]
    %v3976 = vld [vmem:[%s7 + $0x50] sm:$0xf]
    %v3977 = vld [vmem:[%s7 + $0x54] sm:$0xf]
    %v3978 = vld [vmem:[%s7 + $0x58] sm:$0xf]
    %v3979 = vld [vmem:[%s7 + $0x5c] sm:$0xf]
    %v3980 = vld [vmem:[%s7 + $0x60] sm:$0xf]
    %v3981 = vld [vmem:[%s7 + $0x64] sm:$0xf]
    %v3982 = vld [vmem:[%s7 + $0x68] sm:$0xf]
    %v3983 = vld [vmem:[%s7 + $0x6c] sm:$0xf]
    %v3984 = vld [vmem:[%s7 + $0x70] sm:$0xf]
    %v3985 = vld [vmem:[%s7 + $0x74] sm:$0xf]
    %v3986 = vld [vmem:[%s7 + $0x78] sm:$0xf]
    %v3987 = vld [vmem:[%s7 + $0x7c] sm:$0xf]
    %v3988 = vld [vmem:[%s7 + $0x80] sm:$0xf]
    %v3989 = vld [vmem:[%s7 + $0x84] sm:$0xf]
    %v3990 = vld [vmem:[%s7 + $0x88] sm:$0xf]
    %v3991 = vld [vmem:[%s7 + $0x8c] sm:$0xf]
    %v3992 = vld [vmem:[%s7 + $0x90] sm:$0xf]
    %v3993 = vld [vmem:[%s7 + $0x94] sm:$0xf]
    %v3994 = vld [vmem:[%s7 + $0x98] sm:$0xf]
    %v3995 = vld [vmem:[%s7 + $0x9c] sm:$0xf]
    %v3996 = vld [vmem:[%s7 + $0xa0] sm:$0xf]
    %v3997 = vld [vmem:[%s7 + $0xa4] sm:$0xf]
    %v3998 = vld [vmem:[%s7 + $0xa8] sm:$0xf]
    %v3999 = vld [vmem:[%s7 + $0xac] sm:$0xf]
    %v4000 = vld [vmem:[%s7 + $0xb0] sm:$0xf]
    %v4001 = vld [vmem:[%s7 + $0xb4] sm:$0xf]
    %v4002 = vld [vmem:[%s7 + $0xb8] sm:$0xf]
    %v4003 = vld [vmem:[%s7 + $0xbc] sm:$0xf]
    %v4004 = vld [vmem:[%s7 + $0xc0] sm:$0xf]
    %v4005 = vld [vmem:[%s7 + $0xc4] sm:$0xf]
    %v4006 = vld [vmem:[%s7 + $0xc8] sm:$0xf]
    %v4007 = vld [vmem:[%s7 + $0xcc] sm:$0xf]
    %v4008 = vld [vmem:[%s7 + $0xd0] sm:$0xf]
    %v4009 = vld [vmem:[%s7 + $0xd4] sm:$0xf]
    %v4010 = vld [vmem:[%s7 + $0xd8] sm:$0xf]
    %v4011 = vld [vmem:[%s7 + $0xdc] sm:$0xf]
    %v4012 = vld [vmem:[%s7 + $0xe0] sm:$0xf]
    %v4013 = vld [vmem:[%s7 + $0xe4] sm:$0xf]
    %v4014 = vld [vmem:[%s7 + $0xe8] sm:$0xf]
    %v4015 = vld [vmem:[%s7 + $0xec] sm:$0xf]
    %v4016 = vld [vmem:[%s7 + $0xf0] sm:$0xf]
    %v4017 = vld [vmem:[%s7 + $0xf4] sm:$0xf]
    %v4018 = vld [vmem:[%s7 + $0xf8] sm:$0xf]
    %v4019 = vld [vmem:[%s7 + $0xfc] sm:$0xf]
    %v4020 = vld [vmem:[%s7 + $0x100] sm:$0xf]
    %v4021 = vld [vmem:[%s7 + $0x104] sm:$0xf]
    %v4022 = vld [vmem:[%s7 + $0x108] sm:$0xf]
    %v4023 = vld [vmem:[%s7 + $0x10c] sm:$0xf]
    %v4024 = vld [vmem:[%s7 + $0x110] sm:$0xf]
    %v4025 = vld [vmem:[%s7 + $0x114] sm:$0xf]
    %v4026 = vld [vmem:[%s7 + $0x118] sm:$0xf]
    %v4027 = vld [vmem:[%s7 + $0x11c] sm:$0xf]
    %v4028 = vld [vmem:[%s7 + $0x120] sm:$0xf]
    %v4029 = vld [vmem:[%s7 + $0x124] sm:$0xf]
    %v4030 = vld [vmem:[%s7 + $0x128] sm:$0xf]
    %v4031 = vld [vmem:[%s7 + $0x12c] sm:$0xf]
    %v4032 = vld [vmem:[%s7 + $0x130] sm:$0xf]
    %v4033 = vld [vmem:[%s7 + $0x134] sm:$0xf]
    %v4034 = vld [vmem:[%s7 + $0x138] sm:$0xf]
    %v4035 = vld [vmem:[%s7 + $0x13c] sm:$0xf]
    %v4036 = vld [vmem:[%s7 + $0x140] sm:$0xf]
    %v4037 = vld [vmem:[%s7 + $0x144] sm:$0xf]
    %v4038 = vld [vmem:[%s7 + $0x148] sm:$0xf]
    %v4039 = vld [vmem:[%s7 + $0x14c] sm:$0xf]
    %v4040 = vld [vmem:[%s7 + $0x150] sm:$0xf]
    %v4041 = vld [vmem:[%s7 + $0x154] sm:$0xf]
    %v4042 = vld [vmem:[%s7 + $0x158] sm:$0xf]
    %v4043 = vld [vmem:[%s7 + $0x15c] sm:$0xf]
    %v4044 = vld [vmem:[%s7 + $0x160] sm:$0xf]
    %v4045 = vld [vmem:[%s7 + $0x164] sm:$0xf]
    %v4046 = vld [vmem:[%s7 + $0x168] sm:$0xf]
    %v4047 = vld [vmem:[%s7 + $0x16c] sm:$0xf]
    %v4048 = vld [vmem:[%s7 + $0x170] sm:$0xf]
    %v4049 = vld [vmem:[%s7 + $0x174] sm:$0xf]
    %v4050 = vld [vmem:[%s7 + $0x178] sm:$0xf]
    %v4051 = vld [vmem:[%s7 + $0x17c] sm:$0xf]
    %v4052 = vld [vmem:[%s7 + $0x180] sm:$0xf]
    %v4053 = vld [vmem:[%s7 + $0x184] sm:$0xf]
    %v4054 = vld [vmem:[%s7 + $0x188] sm:$0xf]
    %v4055 = vld [vmem:[%s7 + $0x18c] sm:$0xf]
    %v4056 = vld [vmem:[#allocation14] sm:$0x1]
    %v4058 = vlaneseq
    %v4059 = vshrl.u32 %v4058, 7
    %v4060 = vsub.s32 0, %v4059
    %v4061 = vrot.slane %v4056, %v4060
    %v4163 = vunpack.c.l.b16 %v3956
    %v4164 = vunpack.c.l.b16 %v3957
    %v4165 = vunpack.c.l.b16 %v3958
    %v4166 = vunpack.c.l.b16 %v3959
    %v4167 = vunpack.c.l.b16 %v3960
    %v4168 = vunpack.c.l.b16 %v3961
    %v4169 = vunpack.c.l.b16 %v3962
    %v4170 = vunpack.c.l.b16 %v3963
    %v4171 = vunpack.c.l.b16 %v3964
    %v4172 = vunpack.c.l.b16 %v3965
    %v4173 = vunpack.c.l.b16 %v3966
    %v4174 = vunpack.c.l.b16 %v3967
    %v4175 = vunpack.c.l.b16 %v3968
    %v4176 = vunpack.c.l.b16 %v3969
    %v4177 = vunpack.c.l.b16 %v3970
    %v4178 = vunpack.c.l.b16 %v3971
    %v4179 = vunpack.c.l.b16 %v3972
    %v4180 = vunpack.c.l.b16 %v3973
    %v4181 = vunpack.c.l.b16 %v3974
    %v4182 = vunpack.c.l.b16 %v3975
    %v4183 = vunpack.c.l.b16 %v3976
    %v4184 = vunpack.c.l.b16 %v3977
    %v4185 = vunpack.c.l.b16 %v3978
    %v4186 = vunpack.c.l.b16 %v3979
    %v4187 = vunpack.c.l.b16 %v3980
    %v4188 = vunpack.c.l.b16 %v3981
    %v4189 = vunpack.c.l.b16 %v3982
    %v4190 = vunpack.c.l.b16 %v3983
    %v4191 = vunpack.c.l.b16 %v3984
    %v4192 = vunpack.c.l.b16 %v3985
    %v4193 = vunpack.c.l.b16 %v3986
    %v4194 = vunpack.c.l.b16 %v3987
    %v4195 = vunpack.c.l.b16 %v3988
    %v4196 = vunpack.c.l.b16 %v3989
    %v4197 = vunpack.c.l.b16 %v3990
    %v4198 = vunpack.c.l.b16 %v3991
    %v4199 = vunpack.c.l.b16 %v3992
    %v4200 = vunpack.c.l.b16 %v3993
    %v4201 = vunpack.c.l.b16 %v3994
    %v4202 = vunpack.c.l.b16 %v3995
    %v4203 = vunpack.c.l.b16 %v3996
    %v4204 = vunpack.c.l.b16 %v3997
    %v4205 = vunpack.c.l.b16 %v3998
    %v4206 = vunpack.c.l.b16 %v3999
    %v4207 = vunpack.c.l.b16 %v4000
    %v4208 = vunpack.c.l.b16 %v4001
    %v4209 = vunpack.c.l.b16 %v4002
    %v4210 = vunpack.c.l.b16 %v4003
    %v4211 = vunpack.c.l.b16 %v4004
    %v4212 = vunpack.c.l.b16 %v4005
    %v4213 = vunpack.c.l.b16 %v4006
    %v4214 = vunpack.c.l.b16 %v4007
    %v4215 = vunpack.c.l.b16 %v4008
    %v4216 = vunpack.c.l.b16 %v4009
    %v4217 = vunpack.c.l.b16 %v4010
    %v4218 = vunpack.c.l.b16 %v4011
    %v4219 = vunpack.c.l.b16 %v4012
    %v4220 = vunpack.c.l.b16 %v4013
    %v4221 = vunpack.c.l.b16 %v4014
    %v4222 = vunpack.c.l.b16 %v4015
    %v4223 = vunpack.c.l.b16 %v4016
    %v4224 = vunpack.c.l.b16 %v4017
    %v4225 = vunpack.c.l.b16 %v4018
    %v4226 = vunpack.c.l.b16 %v4019
    %v4227 = vunpack.c.l.b16 %v4020
    %v4228 = vunpack.c.l.b16 %v4021
    %v4229 = vunpack.c.l.b16 %v4022
    %v4230 = vunpack.c.l.b16 %v4023
    %v4231 = vunpack.c.l.b16 %v4024
    %v4232 = vunpack.c.l.b16 %v4025
    %v4233 = vunpack.c.l.b16 %v4026
    %v4234 = vunpack.c.l.b16 %v4027
    %v4235 = vunpack.c.l.b16 %v4028
    %v4236 = vunpack.c.l.b16 %v4029
    %v4237 = vunpack.c.l.b16 %v4030
    %v4238 = vunpack.c.l.b16 %v4031
    %v4239 = vunpack.c.l.b16 %v4032
    %v4240 = vunpack.c.l.b16 %v4033
    %v4241 = vunpack.c.l.b16 %v4034
    %v4242 = vunpack.c.l.b16 %v4035
    %v4243 = vunpack.c.l.b16 %v4036
    %v4244 = vunpack.c.l.b16 %v4037
    %v4245 = vunpack.c.l.b16 %v4038
    %v4246 = vunpack.c.l.b16 %v4039
    %v4247 = vunpack.c.l.b16 %v4040
    %v4248 = vunpack.c.l.b16 %v4041
    %v4249 = vunpack.c.l.b16 %v4042
    %v4250 = vunpack.c.l.b16 %v4043
    %v4251 = vunpack.c.l.b16 %v4044
    %v4252 = vunpack.c.l.b16 %v4045
    %v4253 = vunpack.c.l.b16 %v4046
    %v4254 = vunpack.c.l.b16 %v4047
    %v4255 = vunpack.c.l.b16 %v4048
    %v4256 = vunpack.c.l.b16 %v4049
    %v4257 = vunpack.c.l.b16 %v4050
    %v4258 = vunpack.c.l.b16 %v4051
    %v4259 = vunpack.c.l.b16 %v4052
    %v4260 = vunpack.c.l.b16 %v4053
    %v4261 = vunpack.c.l.b16 %v4054
    %v4262 = vunpack.c.l.b16 %v4055
    %v4263 = vpack.c.b16 %v4164, %v4163
    %v4264 = vpack.c.b16 %v4166, %v4165
    %v4265 = vpack.c.b16 %v4168, %v4167
    %v4266 = vpack.c.b16 %v4170, %v4169
    %v4267 = vpack.c.b16 %v4172, %v4171
    %v4268 = vpack.c.b16 %v4174, %v4173
    %v4269 = vpack.c.b16 %v4176, %v4175
    %v4270 = vpack.c.b16 %v4178, %v4177
    %v4271 = vpack.c.b16 %v4180, %v4179
    %v4272 = vpack.c.b16 %v4182, %v4181
    %v4273 = vpack.c.b16 %v4184, %v4183
    %v4274 = vpack.c.b16 %v4186, %v4185
    %v4275 = vpack.c.b16 %v4188, %v4187
    %v4276 = vpack.c.b16 %v4190, %v4189
    %v4277 = vpack.c.b16 %v4192, %v4191
    %v4278 = vpack.c.b16 %v4194, %v4193
    %v4279 = vpack.c.b16 %v4196, %v4195
    %v4280 = vpack.c.b16 %v4198, %v4197
    %v4281 = vpack.c.b16 %v4200, %v4199
    %v4282 = vpack.c.b16 %v4202, %v4201
    %v4283 = vpack.c.b16 %v4204, %v4203
    %v4284 = vpack.c.b16 %v4206, %v4205
    %v4285 = vpack.c.b16 %v4208, %v4207
    %v4286 = vpack.c.b16 %v4210, %v4209
    %v4287 = vpack.c.b16 %v4212, %v4211
    %v4288 = vpack.c.b16 %v4214, %v4213
    %v4289 = vpack.c.b16 %v4216, %v4215
    %v4290 = vpack.c.b16 %v4218, %v4217
    %v4291 = vpack.c.b16 %v4220, %v4219
    %v4292 = vpack.c.b16 %v4222, %v4221
    %v4293 = vpack.c.b16 %v4224, %v4223
    %v4294 = vpack.c.b16 %v4226, %v4225
    %v4295 = vpack.c.b16 %v4228, %v4227
    %v4296 = vpack.c.b16 %v4230, %v4229
    %v4297 = vpack.c.b16 %v4232, %v4231
    %v4298 = vpack.c.b16 %v4234, %v4233
    %v4299 = vpack.c.b16 %v4236, %v4235
    %v4300 = vpack.c.b16 %v4238, %v4237
    %v4301 = vpack.c.b16 %v4240, %v4239
    %v4302 = vpack.c.b16 %v4242, %v4241
    %v4303 = vpack.c.b16 %v4244, %v4243
    %v4304 = vpack.c.b16 %v4246, %v4245
    %v4305 = vpack.c.b16 %v4248, %v4247
    %v4306 = vpack.c.b16 %v4250, %v4249
    %v4307 = vpack.c.b16 %v4252, %v4251
    %v4308 = vpack.c.b16 %v4254, %v4253
    %v4309 = vpack.c.b16 %v4256, %v4255
    %v4310 = vpack.c.b16 %v4258, %v4257
    %v4311 = vpack.c.b16 %v4260, %v4259
    %v4312 = vpack.c.b16 %v4262, %v4261
    %v4364 = vsel %vm2923, %v3955, 0
    %4366 = vmatprep.subr.bf16.mxu0 0
    %4367 = vmatpush1.bf16.msra.mxu0 %v4263
    %4368 = vmatprep.subr.bf16.mxu0 0
    %4369 = vmatpush1.bf16.msra.mxu0 %v4264
    %4370 = vmatprep.subr.bf16.mxu0 0
    %4371 = vmatpush1.bf16.msra.mxu0 %v4265
    %4372 = vmatprep.subr.bf16.mxu0 0
    %4373 = vmatpush1.bf16.msra.mxu0 %v4266
    %4374 = vmatprep.subr.bf16.mxu0 0
    %4375 = vmatpush1.bf16.msra.mxu0 %v4267
    %4376 = vmatprep.subr.bf16.mxu0 0
    %4377 = vmatpush1.bf16.msra.mxu0 %v4268
    %4378 = vmatprep.subr.bf16.mxu0 0
    %4379 = vmatpush1.bf16.msra.mxu0 %v4269
    %4380 = vmatprep.subr.bf16.mxu0 0
    %4381 = vmatpush1.bf16.msra.mxu0 %v4270
    %4382 = vmatprep.subr.bf16.mxu0 0
    %4383 = vmatpush1.bf16.msra.mxu0 %v4271
    %4384 = vmatprep.subr.bf16.mxu0 0
    %4385 = vmatpush1.bf16.msra.mxu0 %v4272
    %4386 = vmatprep.subr.bf16.mxu0 0
    %4387 = vmatpush1.bf16.msra.mxu0 %v4273
    %4388 = vmatprep.subr.bf16.mxu0 0
    %4389 = vmatpush1.bf16.msra.mxu0 %v4274
    %4390 = vmatprep.subr.bf16.mxu0 0
    %4391 = vmatpush1.bf16.msra.mxu0 %v4275
    %4392 = vmatprep.subr.bf16.mxu0 0
    %4393 = vmatpush1.bf16.msra.mxu0 %v4276
    %4394 = vmatprep.subr.bf16.mxu0 0
    %4395 = vmatpush1.bf16.msra.mxu0 %v4277
    %4396 = vmatprep.subr.bf16.mxu0 0
    %4397 = vmatpush1.bf16.msra.mxu0 %v4278
    %4398 = vmatprep.mubr.bf16.mxu0 %v3950
    %4399 = vmatmul.mubr.bf16.gmra.mrb[0].mxu0 %v3949
    %v4400 = vpop.f32.mrb[0].mxu0
    %v4401 = vadd.f32 %v4061, %v4400
    %v4402 = vpop.f32.mrb[0].mxu0
    %v4403 = vpop.f32.mrb[0].mxu0
    %v4404 = vpop.f32.mrb[0].mxu0
    %4405 = vdwg.mxu0
    %4406 = vmatprep.subr.bf16.mxu0 0
    %4407 = vmatpush1.bf16.msra.mxu0 %v4279
    %4408 = vmatprep.subr.bf16.mxu0 0
    %4409 = vmatpush1.bf16.msra.mxu0 %v4280
    %4410 = vmatprep.subr.bf16.mxu0 0
    %4411 = vmatpush1.bf16.msra.mxu0 %v4281
    %4412 = vmatprep.subr.bf16.mxu0 0
    %4413 = vmatpush1.bf16.msra.mxu0 %v4282
    %4414 = vmatprep.subr.bf16.mxu0 0
    %4415 = vmatpush1.bf16.msra.mxu0 %v4283
    %4416 = vmatprep.subr.bf16.mxu0 0
    %4417 = vmatpush1.bf16.msra.mxu0 %v4284
    %4418 = vmatprep.subr.bf16.mxu0 0
    %4419 = vmatpush1.bf16.msra.mxu0 %v4285
    %4420 = vmatprep.subr.bf16.mxu0 0
    %4421 = vmatpush1.bf16.msra.mxu0 %v4286
    %4422 = vmatprep.subr.bf16.mxu0 0
    %4423 = vmatpush1.bf16.msra.mxu0 %v4287
    %4424 = vmatprep.subr.bf16.mxu0 0
    %4425 = vmatpush1.bf16.msra.mxu0 %v4288
    %4426 = vmatprep.subr.bf16.mxu0 0
    %4427 = vmatpush1.bf16.msra.mxu0 %v4289
    %4428 = vmatprep.subr.bf16.mxu0 0
    %4429 = vmatpush1.bf16.msra.mxu0 %v4290
    %4430 = vmatprep.subr.bf16.mxu0 0
    %4431 = vmatpush1.bf16.msra.mxu0 %v4291
    %4432 = vmatprep.subr.bf16.mxu0 0
    %4433 = vmatpush1.bf16.msra.mxu0 %v4292
    %4434 = vmatprep.subr.bf16.mxu0 0
    %4435 = vmatpush1.bf16.msra.mxu0 %v4293
    %4436 = vmatprep.subr.bf16.mxu0 0
    %4437 = vmatpush1.bf16.msra.mxu0 %v4294
    %4438 = vmatprep.mubr.bf16.mxu0 %v3952
    %4439 = vmatmul.mubr.bf16.gmra.mrb[0].mxu0 %v3951
    %v4440 = vpop.f32.mrb[0].mxu0
    %v4441 = vadd.f32 %v4401, %v4440
    %v4442 = vpop.f32.mrb[0].mxu0
    %v4443 = vpop.f32.mrb[0].mxu0
    %v4444 = vpop.f32.mrb[0].mxu0
    %4445 = vdwg.mxu0
    %4446 = vmatprep.subr.bf16.mxu0 0
    %4447 = vmatpush1.bf16.msra.mxu0 %v4295
    %4448 = vmatprep.subr.bf16.mxu0 0
    %4449 = vmatpush1.bf16.msra.mxu0 %v4296
    %4450 = vmatprep.subr.bf16.mxu0 0
    %4451 = vmatpush1.bf16.msra.mxu0 %v4297
    %4452 = vmatprep.subr.bf16.mxu0 0
    %4453 = vmatpush1.bf16.msra.mxu0 %v4298
    %4454 = vmatprep.subr.bf16.mxu0 0
    %4455 = vmatpush1.bf16.msra.mxu0 %v4299
    %4456 = vmatprep.subr.bf16.mxu0 0
    %4457 = vmatpush1.bf16.msra.mxu0 %v4300
    %4458 = vmatprep.subr.bf16.mxu0 0
    %4459 = vmatpush1.bf16.msra.mxu0 %v4301
    %4460 = vmatprep.subr.bf16.mxu0 0
    %4461 = vmatpush1.bf16.msra.mxu0 %v4302
    %4462 = vmatprep.subr.bf16.mxu0 0
    %4463 = vmatpush1.bf16.msra.mxu0 %v4303
    %4464 = vmatprep.subr.bf16.mxu0 0
    %4465 = vmatpush1.bf16.msra.mxu0 %v4304
    %4466 = vmatprep.subr.bf16.mxu0 0
    %4467 = vmatpush1.bf16.msra.mxu0 %v4305
    %4468 = vmatprep.subr.bf16.mxu0 0
    %4469 = vmatpush1.bf16.msra.mxu0 %v4306
    %4470 = vmatprep.subr.bf16.mxu0 0
    %4471 = vmatpush1.bf16.msra.mxu0 %v4307
    %4472 = vmatprep.subr.bf16.mxu0 0
    %4473 = vmatpush1.bf16.msra.mxu0 %v4308
    %4474 = vmatprep.subr.bf16.mxu0 0
    %4475 = vmatpush1.bf16.msra.mxu0 %v4309
    %4476 = vmatprep.subr.bf16.mxu0 0
    %4477 = vmatpush1.bf16.msra.mxu0 %v4310
    %4478 = vmatprep.mubr.bf16.mxu0 %v3954
    %4479 = vmatmul.mubr.bf16.gmra.mrb[0].mxu0 %v3953
    %v4480 = vpop.f32.mrb[0].mxu0
    %v4481 = vadd.f32 %v4441, %v4480
    %v4482 = vpop.f32.mrb[0].mxu0
    %v4483 = vpop.f32.mrb[0].mxu0
    %v4484 = vpop.f32.mrb[0].mxu0
    %4485 = vdwg.mxu0
    %4486 = vmatprep.subr.bf16.mxu0 0
    %4487 = vmatpush1.bf16.msra.mxu0 %v4311
    %4488 = vmatprep.subr.bf16.mxu0 0
    %4489 = vmatpush1.bf16.msra.mxu0 %v4312
    %4490 = vmatprep.subr.bf16.mxu0 0
    %4491 = vmatpush1.bf16.msra.mxu0 0
    %4492 = vmatprep.subr.bf16.mxu0 0
    %4493 = vmatpush1.bf16.msra.mxu0 0
    %4494 = vmatprep.subr.bf16.mxu0 0
    %4495 = vmatpush1.bf16.msra.mxu0 0
    %4496 = vmatprep.subr.bf16.mxu0 0
    %4497 = vmatpush1.bf16.msra.mxu0 0
    %4498 = vmatprep.subr.bf16.mxu0 0
    %4499 = vmatpush1.bf16.msra.mxu0 0
    %4500 = vmatprep.subr.bf16.mxu0 0
    %4501 = vmatpush1.bf16.msra.mxu0 0
    %4502 = vmatprep.subr.bf16.mxu0 0
    %4503 = vmatpush1.bf16.msra.mxu0 0
    %4504 = vmatprep.subr.bf16.mxu0 0
    %4505 = vmatpush1.bf16.msra.mxu0 0
    %4506 = vmatprep.subr.bf16.mxu0 0
    %4507 = vmatpush1.bf16.msra.mxu0 0
    %4508 = vmatprep.subr.bf16.mxu0 0
    %4509 = vmatpush1.bf16.msra.mxu0 0
    %4510 = vmatprep.subr.bf16.mxu0 0
    %4511 = vmatpush1.bf16.msra.mxu0 0
    %4512 = vmatprep.subr.bf16.mxu0 0
    %4513 = vmatpush1.bf16.msra.mxu0 0
    %4514 = vmatprep.subr.bf16.mxu0 0
    %4515 = vmatpush1.bf16.msra.mxu0 0
    %4516 = vmatprep.subr.bf16.mxu0 0
    %4517 = vmatpush1.bf16.msra.mxu0 0
    %4518 = vmatprep.mubr.bf16.mxu0 0
    %4519 = vmatmul.mubr.bf16.gmra.mrb[0].mxu0 %v4364
    %v4520 = vpop.f32.mrb[0].mxu0
    %v4521 = vadd.f32 %v4481, %v4520
    %v4522 = vpop.f32.mrb[0].mxu0
    %v4523 = vpop.f32.mrb[0].mxu0
    %v4524 = vpop.f32.mrb[0].mxu0
    %4525 = vdwg.mxu0
    %vm4526 = vcmask 125952
    %4527 = vst.msk [vmem:[#allocation16] sm:$0xf] %vm4526, %v4521
    // Predicated region
    $region70: #{tpu_custom_call.1} parent=1 // pred_check
      _
    $region71: #{tpu_custom_call.1} parent=1 // pred_check_branch
      %4529 = sbr.rel (0) target = $region73
    $region72: #{tpu_custom_call.1} parent=1 // pred_region
      %s4531 = ssub.s32 64, 64
      %4532 = vsyncadd [#allocation4], %s4531
      %s4534 = sshll.u32 [#allocation16], 4
      %s4535 = int_to_ptr.vmem [resolvable:$true] %s4534
      %4537 = dma.vmem_to_hbm [thread:$0]  %s4535, 64, %s9, [#allocation4]
    $region73: #{tpu_custom_call.1} parent=1 // pred_fallthru
      _
    // Predicated region
    $region74: #{tpu_custom_call.1} parent=1 // pred_check
      _
    $region75: #{tpu_custom_call.1} parent=1 // pred_check_branch
      %4539 = sbr.rel (0) target = $region77
    $region76: #{tpu_custom_call.1} parent=1 // pred_region
      %4540 = dma.done [#allocation4], 64
    $region77: #{tpu_custom_call.1} parent=1 // pred_fallthru
      _
    %4541 = vsyncpa [#allocation3], 1
    %4542 = vsyncpa [#allocation6], 1
    %4543 = vsyncpa [#allocation9], 1
    %4544 = vsyncpa [#allocation12], 1
    %4545 = vsyncpa [#allocation15], 1
    %4546 = vsyncpa [#allocation4], 1

</llo_original>
